<compile_context>
chip_gen: v7x
topology: tpu7x:2x2x1
jax: 0.10.0
libtpu: 0.0.40
codegen_flags: <defaults>
</compile_context>

<pallas_src>
import math

import jax
import jax.numpy as jnp
from jax.experimental import pallas as pl
from jax.experimental.pallas import tpu as pltpu


# ----------------------------------------------------------------------------
# in-kernel helpers: operate on VMEM-resident values for ONE batch element
# ----------------------------------------------------------------------------

def _decomp(x, k):
    """series_decomp: replicate-padded moving average (k odd). Returns (seasonal, trend)."""
    L = x.shape[0]
    pad = (k - 1) // 2
    xp = jnp.concatenate([x[0:1, :]] * pad + [x] + [x[L - 1:L, :]] * pad, axis=0)
    acc = xp[0:L, :]
    for i in range(1, k):
        acc = acc + xp[i:i + L, :]
    trend = acc * (1.0 / k)
    return x - trend, trend


def _shift3(x):
    """x[(l-1)%L], x, x[(l+1)%L] stacked along channels -> (L, 3*Cin)."""
    L = x.shape[0]
    x_prev = jnp.concatenate([x[L - 1:L, :], x[0:L - 1, :]], axis=0)
    x_next = jnp.concatenate([x[1:L, :], x[0:1, :]], axis=0)
    return jnp.concatenate([x_prev, x, x_next], axis=1)


def _conv3_circular(x, w_flat):
    """Conv1d(kernel=3, padding=1, circular, no bias) as ONE matmul.
    x: (L, Cin); w_flat: (3*Cin, Cout), rows ordered [tap0 | tap1 | tap2]."""
    return jnp.dot(_shift3(x), w_flat, preferred_element_type=jnp.float32)


def _embedding(x, mark, w_emb):
    """DataEmbedding_wo_pos: circular conv(k=3) token emb + time-feature linear,
    fused into a single matmul.  w_emb: (3*Cin + mark_dim, D)."""
    feat = jnp.concatenate([_shift3(x), mark], axis=1)
    return jnp.dot(feat, w_emb, preferred_element_type=jnp.float32)


def _my_layernorm(x, g, b):
    """my_Layernorm: LayerNorm over channels then subtract the per-series time mean."""
    mu = jnp.mean(x, axis=-1, keepdims=True)
    var = jnp.mean(jnp.square(x - mu), axis=-1, keepdims=True)
    xhat = (x - mu) * jax.lax.rsqrt(var + 1e-5) * g + b
    return xhat - jnp.mean(xhat, axis=0, keepdims=True)


def _autocorrelation(q, k, v, topk):
    """AutoCorrelation (inference time_delay_agg) with merged heads.
    q, k, v: (L, D).  Returns the delay-aggregated values (L, D)."""
    L, D = q.shape
    # --- correlation scores on the MXU: G[a,t] = <q[a], k[t]> ---
    g = jax.lax.dot_general(q, k, (((1,), (1,)), ((), ())),
                            preferred_element_type=jnp.float32)          # (L, L)
    gd = jnp.concatenate([g, g], axis=0)                                  # (2L, L)
    # mv[tau] = (1/D) * sum_t G[(t+tau)%L, t]  == mean over channels of
    # irfft(rfft(q)*conj(rfft(k)));  circulant diagonals accumulated with
    # static column slices (no cross-lane reduces, no (1,1) concat).
    mv = gd[0:L, 0:1]
    for t in range(1, L):
        mv = mv + gd[t:t + L, t:t + 1]
    mv = mv * (1.0 / D)                                                   # (L, 1)
    # --- in-kernel top-k (iterative max/mask) + masked softmax over delays ---
    m1 = jnp.max(mv, axis=0, keepdims=True)                               # (1, 1)
    thresh = m1
    masked = mv
    for _ in range(topk - 1):
        masked = jnp.where(masked >= thresh, -1e30, masked)
        thresh = jnp.max(masked, axis=0, keepdims=True)
    ex = jnp.where(mv >= thresh, jnp.exp(mv - m1), 0.0)                   # (L, 1)
    w = ex / jnp.sum(ex, axis=0, keepdims=True)                           # (L, 1)
    # --- aggregation: out[l] = sum_tau w[tau] * v[(l + tau) % L] ---
    vd = jnp.concatenate([v, v], axis=0)                                  # (2L, D)
    acc = w[0:1, 0:1] * vd[0:L, :]
    for tau in range(1, L):
        acc = acc + w[tau:tau + 1, 0:1] * vd[tau:tau + L, :]
    return acc


def _encoder_layer(x, lp, k_ma, topk):
    D = x.shape[1]
    qkv = jnp.dot(x, lp['wqkv'][...], preferred_element_type=jnp.float32) + lp['bqkv'][...]
    agg = _autocorrelation(qkv[:, 0:D], qkv[:, D:2 * D], qkv[:, 2 * D:3 * D], topk)
    attn = jnp.dot(agg, lp['wo'][...], preferred_element_type=jnp.float32) + lp['bo'][...]
    x, _ = _decomp(x + attn, k_ma)
    y = jnp.maximum(jnp.dot(x, lp['ff_w1'][...], preferred_element_type=jnp.float32), 0.0)
    y = jnp.dot(y, lp['ff_w2'][...], preferred_element_type=jnp.float32)
    res, _ = _decomp(x + y, k_ma)
    return res


def _decoder_layer(x, cross, trend, lp, k_ma, topk):
    L, D = x.shape
    # --- self attention + decomp1 ---
    qkv = jnp.dot(x, lp['self_wqkv'][...], preferred_element_type=jnp.float32) + lp['self_bqkv'][...]
    agg = _autocorrelation(qkv[:, 0:D], qkv[:, D:2 * D], qkv[:, 2 * D:3 * D], topk)
    x = x + jnp.dot(agg, lp['self_wo'][...], preferred_element_type=jnp.float32) + lp['self_bo'][...]
    x, tr1 = _decomp(x, k_ma)
    # --- cross attention (K/V from encoder output truncated to L) + decomp2 ---
    # TODO(synk): L > S zero-pad branch of AutoCorrelation (unused by this config)
    q = jnp.dot(x, lp['cross_wq'][...], preferred_element_type=jnp.float32) + lp['cross_bq'][...]
    kv = jnp.dot(cross[0:L, :], lp['cross_wkv'][...], preferred_element_type=jnp.float32) + lp['cross_bkv'][...]
    agg = _autocorrelation(q, kv[:, 0:D], kv[:, D:2 * D], topk)
    x = x + jnp.dot(agg, lp['cross_wo'][...], preferred_element_type=jnp.float32) + lp['cross_bo'][...]
    x, tr2 = _decomp(x, k_ma)
    # --- feed forward + decomp3 ---
    y = jnp.maximum(jnp.dot(x, lp['ff_w1'][...], preferred_element_type=jnp.float32), 0.0)
    y = jnp.dot(y, lp['ff_w2'][...], preferred_element_type=jnp.float32)
    x, tr3 = _decomp(x + y, k_ma)
    # --- trend path: circular-conv projection + running accumulation ---
    residual_trend = tr1 + tr2 + tr3
    trend = trend + _conv3_circular(residual_trend, lp['trend_proj_w'][...])
    return x, trend


# ----------------------------------------------------------------------------
# full forward: a single fused pallas_call over grid=(B,)
# ----------------------------------------------------------------------------

def autoformer_forward(params, cfg, x_enc, x_mark_enc, x_dec, x_mark_dec):
    del x_dec  # only its shape matters (dec_in == c_out in this branch)

    B, Ls, enc_in = x_enc.shape
    mk = x_mark_enc.shape[2]
    Ld = x_mark_dec.shape[1]
    C = cfg['c_out']
    k_ma = cfg['moving_avg']
    label_len = cfg['label_len']
    assert Ld == label_len + cfg['pred_len'] and cfg['pred_len'] == 1
    topk_enc = max(1, int(cfg['factor'] * math.log(Ls)))
    topk_dec = max(1, int(cfg['factor'] * math.log(Ld)))

    flat_w, treedef = jax.tree_util.tree_flatten(params)
    n_w = len(flat_w)

    def kernel(xe_ref, me_ref, md_ref, *rest):
        w_refs, out_ref = rest[:n_w], rest[n_w]
        p = jax.tree_util.tree_unflatten(treedef, list(w_refs))

        # ---- encoder embedding + encoder layers + final my_Layernorm ----
        xe = xe_ref[0]                                         # (Ls, enc_in)
        enc = _embedding(xe, me_ref[0], p['enc_emb_w'][...])   # (Ls, D)
        for lp in p['enc_layers']:
            enc = _encoder_layer(enc, lp, k_ma, topk_enc)
        enc = _my_layernorm(enc, p['enc_norm_g'][...], p['enc_norm_b'][...])

        # ---- decoder init: decomposition of the last c_out channels of x_enc ----
        xt = xe[:, enc_in - C:enc_in]                          # (Ls, C)
        season, trend0 = _decomp(xt, k_ma)
        mean = jnp.mean(xt, axis=0, keepdims=True)             # (1, C)
        trend = jnp.concatenate([trend0[Ls - label_len:Ls, :], mean], axis=0)          # (Ld, C)
        seasonal_init = jnp.concatenate(
            [season[Ls - label_len:Ls, :], jnp.zeros((1, C), jnp.float32)], axis=0)    # (Ld, C)

        # ---- decoder embedding + decoder layers (trend accumulated in VMEM) ----
        dec = _embedding(seasonal_init, md_ref[0], p['dec_emb_w'][...])                # (Ld, D)
        for lp in p['dec_layers']:
            dec, trend = _decoder_layer(dec, enc, trend, lp, k_ma, topk_dec)

        # ---- norm + output projection of the last step + trend ----
        dec = _my_layernorm(dec, p['dec_norm_g'][...], p['dec_norm_b'][...])
        season_last = jnp.dot(dec[Ld - 1:Ld, :], p['dec_proj_w'][...],
                              preferred_element_type=jnp.float32) + p['dec_proj_b'][...]
        out_ref[0] = trend[Ld - 1:Ld, :] + season_last

    def w_spec(w):
        nd = w.ndim
        return pl.BlockSpec(w.shape, lambda b, _nd=nd: (0,) * _nd)

    in_specs = ([pl.BlockSpec((1, Ls, enc_in), lambda b: (b, 0, 0)),
                 pl.BlockSpec((1, Ls, mk), lambda b: (b, 0, 0)),
                 pl.BlockSpec((1, Ld, mk), lambda b: (b, 0, 0))]
                + [w_spec(w) for w in flat_w])

    return pl.pallas_call(
        kernel,
        out_shape=jax.ShapeDtypeStruct((B, 1, C), jnp.float32),
        grid=(B,),
        in_specs=in_specs,
        out_specs=pl.BlockSpec((1, 1, C), lambda b: (b, 0, 0)),
        compiler_params=pltpu.CompilerParams(dimension_semantics=("parallel",)),
    )(x_enc.astype(jnp.float32), x_mark_enc.astype(jnp.float32),
      x_mark_dec.astype(jnp.float32), *flat_w)


# ----------------------------------------------------------------------------
# deterministic parameter init (weights pre-merged: QKV fused, conv taps +
# time-feature linear fused, all pre-cast float32)
# ----------------------------------------------------------------------------

def init_params(key, cfg):
    D, F = cfg['d_model'], cfg['d_ff']
    enc_in, dec_in, C = cfg['enc_in'], cfg['dec_in'], cfg['c_out']
    mark_dim = 4  # freq='h' -> 4 time features
    ks = iter(jax.random.split(key, 128))

    def w(shape, scale=0.1):
        return (scale * jax.random.normal(next(ks), shape)).astype(jnp.float32)

    def self_attn():
        return {'wqkv': w((D, 3 * D)), 'bqkv': w((1, 3 * D)),
                'wo': w((D, D)), 'bo': w((1, D))}

    return {
        'enc_emb_w': w((3 * enc_in + mark_dim, D)),    # [conv taps | time-feature linear]
        'dec_emb_w': w((3 * dec_in + mark_dim, D)),
        'enc_layers': [dict(self_attn(),
                            ff_w1=w((D, F)), ff_w2=w((F, D)))
                       for _ in range(cfg['e_layers'])],
        'enc_norm_g': jnp.ones((1, D), jnp.float32),
        'enc_norm_b': jnp.zeros((1, D), jnp.float32),
        'dec_layers': [{'self_wqkv': w((D, 3 * D)), 'self_bqkv': w((1, 3 * D)),
                        'self_wo': w((D, D)), 'self_bo': w((1, D)),
                        'cross_wq': w((D, D)), 'cross_bq': w((1, D)),
                        'cross_wkv': w((D, 2 * D)), 'cross_bkv': w((1, 2 * D)),
                        'cross_wo': w((D, D)), 'cross_bo': w((1, D)),
                        'ff_w1': w((D, F)), 'ff_w2': w((F, D)),
                        'trend_proj_w': w((3 * D, C))}
                       for _ in range(cfg['d_layers'])],
        'dec_norm_g': jnp.ones((1, D), jnp.float32),
        'dec_norm_b': jnp.zeros((1, D), jnp.float32),
        'dec_proj_w': w((D, C)),
        'dec_proj_b': jnp.zeros((1, C), jnp.float32),
    }


# ----------------------------------------------------------------------------

if __name__ == "__main__":
    cfg = dict(task_name='process_monitoring', seq_len=8, label_len=4, pred_len=1,
               enc_in=4, dec_in=4, c_out=4, d_model=32, n_heads=4, d_ff=64,
               e_layers=1, d_layers=1, factor=1, moving_avg=5, dropout=0.0,
               embed='timeF', freq='h', activation='relu', output_attention=False)

    key = jax.random.PRNGKey(0)
    kp, k1, k2, k3, k4 = jax.random.split(key, 5)
    params = init_params(kp, cfg)

    B = 2
    x_enc = jax.random.normal(k1, (B, cfg['seq_len'], cfg['enc_in']), jnp.float32)
    x_mark_enc = jax.random.normal(k2, (B, cfg['seq_len'], 4), jnp.float32)
    x_dec = jax.random.normal(
        k3, (B, cfg['label_len'] + cfg['pred_len'], cfg['dec_in']), jnp.float32)
    x_mark_dec = jax.random.normal(
        k4, (B, cfg['label_len'] + cfg['pred_len'], 4), jnp.float32)

    fwd = jax.jit(lambda p, a, b, c, d: autoformer_forward(p, cfg, a, b, c, d))
    out = fwd(params, x_enc, x_mark_enc, x_dec, x_mark_dec)
    out = jax.block_until_ready(out)
    assert out.shape == (B, 1, cfg['c_out']), out.shape
    assert bool(jnp.all(jnp.isfinite(out)))
    print("KERNEL_OK")
</pallas_src>

<mosaic_0001>
module attributes {stable_mosaic.version = 11 : i64} {
  func.func @kernel(%arg0: i32, %arg1: memref<1x8x4xf32, #tpu.memory_space<vmem>>, %arg2: memref<1x8x4xf32, #tpu.memory_space<vmem>>, %arg3: memref<1x5x4xf32, #tpu.memory_space<vmem>>, %arg4: memref<16x32xf32, #tpu.memory_space<vmem>>, %arg5: memref<1x64xf32, #tpu.memory_space<vmem>>, %arg6: memref<1x32xf32, #tpu.memory_space<vmem>>, %arg7: memref<1x32xf32, #tpu.memory_space<vmem>>, %arg8: memref<32x64xf32, #tpu.memory_space<vmem>>, %arg9: memref<32x32xf32, #tpu.memory_space<vmem>>, %arg10: memref<32x32xf32, #tpu.memory_space<vmem>>, %arg11: memref<32x64xf32, #tpu.memory_space<vmem>>, %arg12: memref<64x32xf32, #tpu.memory_space<vmem>>, %arg13: memref<1x32xf32, #tpu.memory_space<vmem>>, %arg14: memref<1x96xf32, #tpu.memory_space<vmem>>, %arg15: memref<32x32xf32, #tpu.memory_space<vmem>>, %arg16: memref<32x96xf32, #tpu.memory_space<vmem>>, %arg17: memref<96x4xf32, #tpu.memory_space<vmem>>, %arg18: memref<1x32xf32, #tpu.memory_space<vmem>>, %arg19: memref<1x32xf32, #tpu.memory_space<vmem>>, %arg20: memref<1x4xf32, #tpu.memory_space<vmem>>, %arg21: memref<32x4xf32, #tpu.memory_space<vmem>>, %arg22: memref<16x32xf32, #tpu.memory_space<vmem>>, %arg23: memref<1x32xf32, #tpu.memory_space<vmem>>, %arg24: memref<1x96xf32, #tpu.memory_space<vmem>>, %arg25: memref<32x64xf32, #tpu.memory_space<vmem>>, %arg26: memref<64x32xf32, #tpu.memory_space<vmem>>, %arg27: memref<32x32xf32, #tpu.memory_space<vmem>>, %arg28: memref<32x96xf32, #tpu.memory_space<vmem>>, %arg29: memref<1x32xf32, #tpu.memory_space<vmem>>, %arg30: memref<1x32xf32, #tpu.memory_space<vmem>>, %arg31: memref<1x1x4xf32, #tpu.memory_space<vmem>>) attributes {dimension_semantics = [#tpu.dimension_semantics<parallel>], iteration_bounds = array<i64: 2>, scalar_prefetch = 0 : i64, scratch_operands = 0 : i64, tpu.core_type = #tpu.core_type<tc>, window_params = [{transform_indices = @transform_0, window_bounds = array<i64: 1, 8, 4>}, {transform_indices = @transform_1, window_bounds = array<i64: 1, 8, 4>}, {transform_indices = @transform_2, window_bounds = array<i64: 1, 5, 4>}, {pipeline_mode = #tpu.pipeline_mode<synchronous>, transform_indices = @transform_3, window_bounds = array<i64: 16, 32>}, {pipeline_mode = #tpu.pipeline_mode<synchronous>, transform_indices = @transform_4, window_bounds = array<i64: 1, 64>}, {pipeline_mode = #tpu.pipeline_mode<synchronous>, transform_indices = @transform_5, window_bounds = array<i64: 1, 32>}, {pipeline_mode = #tpu.pipeline_mode<synchronous>, transform_indices = @transform_6, window_bounds = array<i64: 1, 32>}, {pipeline_mode = #tpu.pipeline_mode<synchronous>, transform_indices = @transform_7, window_bounds = array<i64: 32, 64>}, {pipeline_mode = #tpu.pipeline_mode<synchronous>, transform_indices = @transform_8, window_bounds = array<i64: 32, 32>}, {pipeline_mode = #tpu.pipeline_mode<synchronous>, transform_indices = @transform_9, window_bounds = array<i64: 32, 32>}, {pipeline_mode = #tpu.pipeline_mode<synchronous>, transform_indices = @transform_10, window_bounds = array<i64: 32, 64>}, {pipeline_mode = #tpu.pipeline_mode<synchronous>, transform_indices = @transform_11, window_bounds = array<i64: 64, 32>}, {pipeline_mode = #tpu.pipeline_mode<synchronous>, transform_indices = @transform_12, window_bounds = array<i64: 1, 32>}, {pipeline_mode = #tpu.pipeline_mode<synchronous>, transform_indices = @transform_13, window_bounds = array<i64: 1, 96>}, {pipeline_mode = #tpu.pipeline_mode<synchronous>, transform_indices = @transform_14, window_bounds = array<i64: 32, 32>}, {pipeline_mode = #tpu.pipeline_mode<synchronous>, transform_indices = @transform_15, window_bounds = array<i64: 32, 96>}, {pipeline_mode = #tpu.pipeline_mode<synchronous>, transform_indices = @transform_16, window_bounds = array<i64: 96, 4>}, {pipeline_mode = #tpu.pipeline_mode<synchronous>, transform_indices = @transform_17, window_bounds = array<i64: 1, 32>}, {pipeline_mode = #tpu.pipeline_mode<synchronous>, transform_indices = @transform_18, window_bounds = array<i64: 1, 32>}, {pipeline_mode = #tpu.pipeline_mode<synchronous>, transform_indices = @transform_19, window_bounds = array<i64: 1, 4>}, {pipeline_mode = #tpu.pipeline_mode<synchronous>, transform_indices = @transform_20, window_bounds = array<i64: 32, 4>}, {pipeline_mode = #tpu.pipeline_mode<synchronous>, transform_indices = @transform_21, window_bounds = array<i64: 16, 32>}, {pipeline_mode = #tpu.pipeline_mode<synchronous>, transform_indices = @transform_22, window_bounds = array<i64: 1, 32>}, {pipeline_mode = #tpu.pipeline_mode<synchronous>, transform_indices = @transform_23, window_bounds = array<i64: 1, 96>}, {pipeline_mode = #tpu.pipeline_mode<synchronous>, transform_indices = @transform_24, window_bounds = array<i64: 32, 64>}, {pipeline_mode = #tpu.pipeline_mode<synchronous>, transform_indices = @transform_25, window_bounds = array<i64: 64, 32>}, {pipeline_mode = #tpu.pipeline_mode<synchronous>, transform_indices = @transform_26, window_bounds = array<i64: 32, 32>}, {pipeline_mode = #tpu.pipeline_mode<synchronous>, transform_indices = @transform_27, window_bounds = array<i64: 32, 96>}, {pipeline_mode = #tpu.pipeline_mode<synchronous>, transform_indices = @transform_28, window_bounds = array<i64: 1, 32>}, {pipeline_mode = #tpu.pipeline_mode<synchronous>, transform_indices = @transform_29, window_bounds = array<i64: 1, 32>}, {transform_indices = @transform_30, window_bounds = array<i64: 1, 1, 4>}]} {
    %c0 = arith.constant 0 : index
    %c0_0 = arith.constant 0 : index
    %c0_1 = arith.constant 0 : index
    %0 = vector.load %arg1[%c0, %c0_0, %c0_1] : memref<1x8x4xf32, #tpu.memory_space<vmem>>, vector<1x8x4xf32>
    %1 = vector.shape_cast %0 : vector<1x8x4xf32> to vector<8x4xf32>
    %c0_2 = arith.constant 0 : index
    %c0_3 = arith.constant 0 : index
    %c0_4 = arith.constant 0 : index
    %2 = vector.load %arg2[%c0_2, %c0_3, %c0_4] : memref<1x8x4xf32, #tpu.memory_space<vmem>>, vector<1x8x4xf32>
    %3 = vector.shape_cast %2 : vector<1x8x4xf32> to vector<8x4xf32>
    %c0_5 = arith.constant 0 : index
    %c0_6 = arith.constant 0 : index
    %4 = vector.load %arg22[%c0_5, %c0_6] : memref<16x32xf32, #tpu.memory_space<vmem>>, vector<16x32xf32>
    %5 = vector.extract_strided_slice %1 {offsets = [7, 0], sizes = [1, 4], strides = [1, 1]} : vector<8x4xf32> to vector<1x4xf32>
    %6 = vector.extract_strided_slice %1 {offsets = [0, 0], sizes = [7, 4], strides = [1, 1]} : vector<8x4xf32> to vector<7x4xf32>
    %7 = tpu.concatenate %5, %6 in 0 : vector<1x4xf32>, vector<7x4xf32> -> vector<8x4xf32>
    %8 = vector.extract_strided_slice %1 {offsets = [1, 0], sizes = [7, 4], strides = [1, 1]} : vector<8x4xf32> to vector<7x4xf32>
    %9 = vector.extract_strided_slice %1 {offsets = [0, 0], sizes = [1, 4], strides = [1, 1]} : vector<8x4xf32> to vector<1x4xf32>
    %10 = tpu.concatenate %8, %9 in 0 : vector<7x4xf32>, vector<1x4xf32> -> vector<8x4xf32>
    %11 = tpu.concatenate %7, %1, %10 in 1 : vector<8x4xf32>, vector<8x4xf32>, vector<8x4xf32> -> vector<8x12xf32>
    %12 = tpu.concatenate %11, %3 in 1 : vector<8x12xf32>, vector<8x4xf32> -> vector<8x16xf32>
    %cst = arith.constant dense<0.000000e+00> : vector<8x32xf32>
    %13 = tpu.matmul %12, %4, %cst {dimension_numbers = #tpu.dot_dimension_numbers<[1], [0], [0], [1], [0, 0, 1, 1], [], []>} : vector<8x16xf32>, vector<16x32xf32>, vector<8x32xf32> -> vector<8x32xf32>
    %c0_7 = arith.constant 0 : index
    %c0_8 = arith.constant 0 : index
    %14 = vector.load %arg28[%c0_7, %c0_8] : memref<32x96xf32, #tpu.memory_space<vmem>>, vector<32x96xf32>
    %cst_9 = arith.constant dense<0.000000e+00> : vector<8x96xf32>
    %15 = tpu.matmul %13, %14, %cst_9 {dimension_numbers = #tpu.dot_dimension_numbers<[1], [0], [0], [1], [0, 0, 1, 1], [], []>} : vector<8x32xf32>, vector<32x96xf32>, vector<8x96xf32> -> vector<8x96xf32>
    %c0_10 = arith.constant 0 : index
    %c0_11 = arith.constant 0 : index
    %16 = vector.load %arg24[%c0_10, %c0_11] : memref<1x96xf32, #tpu.memory_space<vmem>>, vector<1x96xf32>
    %17 = vector.broadcast %16 : vector<1x96xf32> to vector<8x96xf32>
    %18 = arith.addf %15, %17 : vector<8x96xf32>
    %19 = vector.extract_strided_slice %18 {offsets = [0, 0], sizes = [8, 32], strides = [1, 1]} : vector<8x96xf32> to vector<8x32xf32>
    %20 = vector.extract_strided_slice %18 {offsets = [0, 32], sizes = [8, 32], strides = [1, 1]} : vector<8x96xf32> to vector<8x32xf32>
    %21 = vector.extract_strided_slice %18 {offsets = [0, 64], sizes = [8, 32], strides = [1, 1]} : vector<8x96xf32> to vector<8x32xf32>
    %cst_12 = arith.constant dense<0.000000e+00> : vector<8x8xf32>
    %22 = tpu.matmul %19, %20, %cst_12 {dimension_numbers = #tpu.dot_dimension_numbers<[1], [1], [0], [0], [0, 0, 1, 0], [], []>} : vector<8x32xf32>, vector<8x32xf32>, vector<8x8xf32> -> vector<8x8xf32>
    %23 = tpu.concatenate %22, %22 in 0 : vector<8x8xf32>, vector<8x8xf32> -> vector<16x8xf32>
    %24 = vector.extract_strided_slice %23 {offsets = [0, 0], sizes = [8, 1], strides = [1, 1]} : vector<16x8xf32> to vector<8x1xf32>
    %25 = vector.extract_strided_slice %23 {offsets = [1, 1], sizes = [8, 1], strides = [1, 1]} : vector<16x8xf32> to vector<8x1xf32>
    %26 = arith.addf %24, %25 : vector<8x1xf32>
    %27 = vector.extract_strided_slice %23 {offsets = [2, 2], sizes = [8, 1], strides = [1, 1]} : vector<16x8xf32> to vector<8x1xf32>
    %28 = arith.addf %26, %27 : vector<8x1xf32>
    %29 = vector.extract_strided_slice %23 {offsets = [3, 3], sizes = [8, 1], strides = [1, 1]} : vector<16x8xf32> to vector<8x1xf32>
    %30 = arith.addf %28, %29 : vector<8x1xf32>
    %31 = vector.extract_strided_slice %23 {offsets = [4, 4], sizes = [8, 1], strides = [1, 1]} : vector<16x8xf32> to vector<8x1xf32>
    %32 = arith.addf %30, %31 : vector<8x1xf32>
    %33 = vector.extract_strided_slice %23 {offsets = [5, 5], sizes = [8, 1], strides = [1, 1]} : vector<16x8xf32> to vector<8x1xf32>
    %34 = arith.addf %32, %33 : vector<8x1xf32>
    %35 = vector.extract_strided_slice %23 {offsets = [6, 6], sizes = [8, 1], strides = [1, 1]} : vector<16x8xf32> to vector<8x1xf32>
    %36 = arith.addf %34, %35 : vector<8x1xf32>
    %37 = vector.extract_strided_slice %23 {offsets = [7, 7], sizes = [8, 1], strides = [1, 1]} : vector<16x8xf32> to vector<8x1xf32>
    %38 = arith.addf %36, %37 : vector<8x1xf32>
    %cst_13 = arith.constant 3.125000e-02 : f32
    %39 = vector.broadcast %cst_13 : f32 to vector<8x1xf32>
    %40 = arith.mulf %38, %39 : vector<8x1xf32>
    %cst_14 = arith.constant dense<0xFF800000> : vector<1xf32>
    %41 = vector.multi_reduction <maximumf>, %40, %cst_14 [0] : vector<8x1xf32> to vector<1xf32>
    %42 = vector.shape_cast %41 : vector<1xf32> to vector<1x1xf32>
    %43 = vector.broadcast %42 : vector<1x1xf32> to vector<8x1xf32>
    %44 = arith.cmpf oge, %40, %43 : vector<8x1xf32>
    %cst_15 = arith.constant -1.000000e+30 : f32
    %45 = vector.broadcast %cst_15 : f32 to vector<8x1xf32>
    %46 = arith.select %44, %45, %40 : vector<8x1xi1>, vector<8x1xf32>
    %cst_16 = arith.constant dense<0xFF800000> : vector<1xf32>
    %47 = vector.multi_reduction <maximumf>, %46, %cst_16 [0] : vector<8x1xf32> to vector<1xf32>
    %48 = vector.shape_cast %47 : vector<1xf32> to vector<1x1xf32>
    %49 = vector.broadcast %48 : vector<1x1xf32> to vector<8x1xf32>
    %50 = arith.cmpf oge, %40, %49 : vector<8x1xf32>
    %51 = vector.broadcast %42 : vector<1x1xf32> to vector<8x1xf32>
    %52 = arith.subf %40, %51 : vector<8x1xf32>
    %53 = math.exp %52 : vector<8x1xf32>
    %cst_17 = arith.constant 0.000000e+00 : f32
    %54 = vector.broadcast %cst_17 : f32 to vector<8x1xf32>
    %55 = arith.select %50, %53, %54 : vector<8x1xi1>, vector<8x1xf32>
    %cst_18 = arith.constant dense<0.000000e+00> : vector<1xf32>
    %56 = vector.multi_reduction <add>, %55, %cst_18 [0] : vector<8x1xf32> to vector<1xf32>
    %57 = vector.shape_cast %56 : vector<1xf32> to vector<1x1xf32>
    %58 = vector.broadcast %57 : vector<1x1xf32> to vector<8x1xf32>
    %59 = arith.divf %55, %58 : vector<8x1xf32>
    %60 = tpu.concatenate %21, %21 in 0 : vector<8x32xf32>, vector<8x32xf32> -> vector<16x32xf32>
    %61 = vector.extract_strided_slice %59 {offsets = [0, 0], sizes = [1, 1], strides = [1, 1]} : vector<8x1xf32> to vector<1x1xf32>
    %62 = vector.extract_strided_slice %60 {offsets = [0, 0], sizes = [8, 32], strides = [1, 1]} : vector<16x32xf32> to vector<8x32xf32>
    %63 = vector.broadcast %61 : vector<1x1xf32> to vector<8x32xf32>
    %64 = arith.mulf %63, %62 : vector<8x32xf32>
    %65 = vector.extract_strided_slice %59 {offsets = [1, 0], sizes = [1, 1], strides = [1, 1]} : vector<8x1xf32> to vector<1x1xf32>
    %66 = vector.extract_strided_slice %60 {offsets = [1, 0], sizes = [8, 32], strides = [1, 1]} : vector<16x32xf32> to vector<8x32xf32>
    %67 = vector.broadcast %65 : vector<1x1xf32> to vector<8x32xf32>
    %68 = arith.mulf %67, %66 : vector<8x32xf32>
    %69 = arith.addf %64, %68 : vector<8x32xf32>
    %70 = vector.extract_strided_slice %59 {offsets = [2, 0], sizes = [1, 1], strides = [1, 1]} : vector<8x1xf32> to vector<1x1xf32>
    %71 = vector.extract_strided_slice %60 {offsets = [2, 0], sizes = [8, 32], strides = [1, 1]} : vector<16x32xf32> to vector<8x32xf32>
    %72 = vector.broadcast %70 : vector<1x1xf32> to vector<8x32xf32>
    %73 = arith.mulf %72, %71 : vector<8x32xf32>
    %74 = arith.addf %69, %73 : vector<8x32xf32>
    %75 = vector.extract_strided_slice %59 {offsets = [3, 0], sizes = [1, 1], strides = [1, 1]} : vector<8x1xf32> to vector<1x1xf32>
    %76 = vector.extract_strided_slice %60 {offsets = [3, 0], sizes = [8, 32], strides = [1, 1]} : vector<16x32xf32> to vector<8x32xf32>
    %77 = vector.broadcast %75 : vector<1x1xf32> to vector<8x32xf32>
    %78 = arith.mulf %77, %76 : vector<8x32xf32>
    %79 = arith.addf %74, %78 : vector<8x32xf32>
    %80 = vector.extract_strided_slice %59 {offsets = [4, 0], sizes = [1, 1], strides = [1, 1]} : vector<8x1xf32> to vector<1x1xf32>
    %81 = vector.extract_strided_slice %60 {offsets = [4, 0], sizes = [8, 32], strides = [1, 1]} : vector<16x32xf32> to vector<8x32xf32>
    %82 = vector.broadcast %80 : vector<1x1xf32> to vector<8x32xf32>
    %83 = arith.mulf %82, %81 : vector<8x32xf32>
    %84 = arith.addf %79, %83 : vector<8x32xf32>
    %85 = vector.extract_strided_slice %59 {offsets = [5, 0], sizes = [1, 1], strides = [1, 1]} : vector<8x1xf32> to vector<1x1xf32>
    %86 = vector.extract_strided_slice %60 {offsets = [5, 0], sizes = [8, 32], strides = [1, 1]} : vector<16x32xf32> to vector<8x32xf32>
    %87 = vector.broadcast %85 : vector<1x1xf32> to vector<8x32xf32>
    %88 = arith.mulf %87, %86 : vector<8x32xf32>
    %89 = arith.addf %84, %88 : vector<8x32xf32>
    %90 = vector.extract_strided_slice %59 {offsets = [6, 0], sizes = [1, 1], strides = [1, 1]} : vector<8x1xf32> to vector<1x1xf32>
    %91 = vector.extract_strided_slice %60 {offsets = [6, 0], sizes = [8, 32], strides = [1, 1]} : vector<16x32xf32> to vector<8x32xf32>
    %92 = vector.broadcast %90 : vector<1x1xf32> to vector<8x32xf32>
    %93 = arith.mulf %92, %91 : vector<8x32xf32>
    %94 = arith.addf %89, %93 : vector<8x32xf32>
    %95 = vector.extract_strided_slice %59 {offsets = [7, 0], sizes = [1, 1], strides = [1, 1]} : vector<8x1xf32> to vector<1x1xf32>
    %96 = vector.extract_strided_slice %60 {offsets = [7, 0], sizes = [8, 32], strides = [1, 1]} : vector<16x32xf32> to vector<8x32xf32>
    %97 = vector.broadcast %95 : vector<1x1xf32> to vector<8x32xf32>
    %98 = arith.mulf %97, %96 : vector<8x32xf32>
    %99 = arith.addf %94, %98 : vector<8x32xf32>
    %c0_19 = arith.constant 0 : index
    %c0_20 = arith.constant 0 : index
    %100 = vector.load %arg27[%c0_19, %c0_20] : memref<32x32xf32, #tpu.memory_space<vmem>>, vector<32x32xf32>
    %cst_21 = arith.constant dense<0.000000e+00> : vector<8x32xf32>
    %101 = tpu.matmul %99, %100, %cst_21 {dimension_numbers = #tpu.dot_dimension_numbers<[1], [0], [0], [1], [0, 0, 1, 1], [], []>} : vector<8x32xf32>, vector<32x32xf32>, vector<8x32xf32> -> vector<8x32xf32>
    %c0_22 = arith.constant 0 : index
    %c0_23 = arith.constant 0 : index
    %102 = vector.load %arg23[%c0_22, %c0_23] : memref<1x32xf32, #tpu.memory_space<vmem>>, vector<1x32xf32>
    %103 = vector.broadcast %102 : vector<1x32xf32> to vector<8x32xf32>
    %104 = arith.addf %101, %103 : vector<8x32xf32>
    %105 = arith.addf %13, %104 : vector<8x32xf32>
    %106 = vector.extract_strided_slice %105 {offsets = [0, 0], sizes = [1, 32], strides = [1, 1]} : vector<8x32xf32> to vector<1x32xf32>
    %107 = vector.extract_strided_slice %105 {offsets = [7, 0], sizes = [1, 32], strides = [1, 1]} : vector<8x32xf32> to vector<1x32xf32>
    %108 = tpu.concatenate %106, %106, %105, %107, %107 in 0 : vector<1x32xf32>, vector<1x32xf32>, vector<8x32xf32>, vector<1x32xf32>, vector<1x32xf32> -> vector<12x32xf32>
    %109 = vector.extract_strided_slice %108 {offsets = [0, 0], sizes = [8, 32], strides = [1, 1]} : vector<12x32xf32> to vector<8x32xf32>
    %110 = vector.extract_strided_slice %108 {offsets = [1, 0], sizes = [8, 32], strides = [1, 1]} : vector<12x32xf32> to vector<8x32xf32>
    %111 = arith.addf %109, %110 : vector<8x32xf32>
    %112 = vector.extract_strided_slice %108 {offsets = [2, 0], sizes = [8, 32], strides = [1, 1]} : vector<12x32xf32> to vector<8x32xf32>
    %113 = arith.addf %111, %112 : vector<8x32xf32>
    %114 = vector.extract_strided_slice %108 {offsets = [3, 0], sizes = [8, 32], strides = [1, 1]} : vector<12x32xf32> to vector<8x32xf32>
    %115 = arith.addf %113, %114 : vector<8x32xf32>
    %116 = vector.extract_strided_slice %108 {offsets = [4, 0], sizes = [8, 32], strides = [1, 1]} : vector<12x32xf32> to vector<8x32xf32>
    %117 = arith.addf %115, %116 : vector<8x32xf32>
    %cst_24 = arith.constant 2.000000e-01 : f32
    %118 = vector.broadcast %cst_24 : f32 to vector<8x32xf32>
    %119 = arith.mulf %117, %118 : vector<8x32xf32>
    %120 = arith.subf %105, %119 : vector<8x32xf32>
    %c0_25 = arith.constant 0 : index
    %c0_26 = arith.constant 0 : index
    %121 = vector.load %arg25[%c0_25, %c0_26] : memref<32x64xf32, #tpu.memory_space<vmem>>, vector<32x64xf32>
    %cst_27 = arith.constant dense<0.000000e+00> : vector<8x64xf32>
    %122 = tpu.matmul %120, %121, %cst_27 {dimension_numbers = #tpu.dot_dimension_numbers<[1], [0], [0], [1], [0, 0, 1, 1], [], []>} : vector<8x32xf32>, vector<32x64xf32>, vector<8x64xf32> -> vector<8x64xf32>
    %cst_28 = arith.constant 0.000000e+00 : f32
    %123 = vector.broadcast %cst_28 : f32 to vector<8x64xf32>
    %124 = arith.maximumf %122, %123 : vector<8x64xf32>
    %c0_29 = arith.constant 0 : index
    %c0_30 = arith.constant 0 : index
    %125 = vector.load %arg26[%c0_29, %c0_30] : memref<64x32xf32, #tpu.memory_space<vmem>>, vector<64x32xf32>
    %cst_31 = arith.constant dense<0.000000e+00> : vector<8x32xf32>
    %126 = tpu.matmul %124, %125, %cst_31 {dimension_numbers = #tpu.dot_dimension_numbers<[1], [0], [0], [1], [0, 0, 1, 1], [], []>} : vector<8x64xf32>, vector<64x32xf32>, vector<8x32xf32> -> vector<8x32xf32>
    %127 = arith.addf %120, %126 : vector<8x32xf32>
    %128 = vector.extract_strided_slice %127 {offsets = [0, 0], sizes = [1, 32], strides = [1, 1]} : vector<8x32xf32> to vector<1x32xf32>
    %129 = vector.extract_strided_slice %127 {offsets = [7, 0], sizes = [1, 32], strides = [1, 1]} : vector<8x32xf32> to vector<1x32xf32>
    %130 = tpu.concatenate %128, %128, %127, %129, %129 in 0 : vector<1x32xf32>, vector<1x32xf32>, vector<8x32xf32>, vector<1x32xf32>, vector<1x32xf32> -> vector<12x32xf32>
    %131 = vector.extract_strided_slice %130 {offsets = [0, 0], sizes = [8, 32], strides = [1, 1]} : vector<12x32xf32> to vector<8x32xf32>
    %132 = vector.extract_strided_slice %130 {offsets = [1, 0], sizes = [8, 32], strides = [1, 1]} : vector<12x32xf32> to vector<8x32xf32>
    %133 = arith.addf %131, %132 : vector<8x32xf32>
    %134 = vector.extract_strided_slice %130 {offsets = [2, 0], sizes = [8, 32], strides = [1, 1]} : vector<12x32xf32> to vector<8x32xf32>
    %135 = arith.addf %133, %134 : vector<8x32xf32>
    %136 = vector.extract_strided_slice %130 {offsets = [3, 0], sizes = [8, 32], strides = [1, 1]} : vector<12x32xf32> to vector<8x32xf32>
    %137 = arith.addf %135, %136 : vector<8x32xf32>
    %138 = vector.extract_strided_slice %130 {offsets = [4, 0], sizes = [8, 32], strides = [1, 1]} : vector<12x32xf32> to vector<8x32xf32>
    %139 = arith.addf %137, %138 : vector<8x32xf32>
    %cst_32 = arith.constant 2.000000e-01 : f32
    %140 = vector.broadcast %cst_32 : f32 to vector<8x32xf32>
    %141 = arith.mulf %139, %140 : vector<8x32xf32>
    %142 = arith.subf %127, %141 : vector<8x32xf32>
    %c0_33 = arith.constant 0 : index
    %c0_34 = arith.constant 0 : index
    %143 = vector.load %arg30[%c0_33, %c0_34] : memref<1x32xf32, #tpu.memory_space<vmem>>, vector<1x32xf32>
    %c0_35 = arith.constant 0 : index
    %c0_36 = arith.constant 0 : index
    %144 = vector.load %arg29[%c0_35, %c0_36] : memref<1x32xf32, #tpu.memory_space<vmem>>, vector<1x32xf32>
    %cst_37 = arith.constant dense<0.000000e+00> : vector<8xf32>
    %145 = vector.multi_reduction <add>, %142, %cst_37 [1] : vector<8x32xf32> to vector<8xf32>
    %146 = vector.shape_cast %145 : vector<8xf32> to vector<8x1xf32>
    %cst_38 = arith.constant 3.200000e+01 : f32
    %147 = vector.broadcast %cst_38 : f32 to vector<8x1xf32>
    %148 = arith.divf %146, %147 : vector<8x1xf32>
    %149 = vector.broadcast %148 : vector<8x1xf32> to vector<8x32xf32>
    %150 = arith.subf %142, %149 : vector<8x32xf32>
    %151 = arith.mulf %150, %150 : vector<8x32xf32>
    %cst_39 = arith.constant dense<0.000000e+00> : vector<8xf32>
    %152 = vector.multi_reduction <add>, %151, %cst_39 [1] : vector<8x32xf32> to vector<8xf32>
    %153 = vector.shape_cast %152 : vector<8xf32> to vector<8x1xf32>
    %cst_40 = arith.constant 3.200000e+01 : f32
    %154 = vector.broadcast %cst_40 : f32 to vector<8x1xf32>
    %155 = arith.divf %153, %154 : vector<8x1xf32>
    %156 = vector.broadcast %148 : vector<8x1xf32> to vector<8x32xf32>
    %157 = arith.subf %142, %156 : vector<8x32xf32>
    %cst_41 = arith.constant 9.99999974E-6 : f32
    %158 = vector.broadcast %cst_41 : f32 to vector<8x1xf32>
    %159 = arith.addf %155, %158 : vector<8x1xf32>
    %160 = math.rsqrt %159 : vector<8x1xf32>
    %161 = vector.broadcast %160 : vector<8x1xf32> to vector<8x32xf32>
    %162 = arith.mulf %157, %161 : vector<8x32xf32>
    %163 = vector.broadcast %143 : vector<1x32xf32> to vector<8x32xf32>
    %164 = arith.mulf %162, %163 : vector<8x32xf32>
    %165 = vector.broadcast %144 : vector<1x32xf32> to vector<8x32xf32>
    %166 = arith.addf %164, %165 : vector<8x32xf32>
    %cst_42 = arith.constant dense<0.000000e+00> : vector<32xf32>
    %167 = vector.multi_reduction <add>, %166, %cst_42 [0] : vector<8x32xf32> to vector<32xf32>
    %168 = vector.shape_cast %167 : vector<32xf32> to vector<1x32xf32>
    %cst_43 = arith.constant 8.000000e+00 : f32
    %169 = vector.broadcast %cst_43 : f32 to vector<1x32xf32>
    %170 = arith.divf %168, %169 : vector<1x32xf32>
    %171 = vector.broadcast %170 : vector<1x32xf32> to vector<8x32xf32>
    %172 = arith.subf %166, %171 : vector<8x32xf32>
    %173 = vector.extract_strided_slice %1 {offsets = [0, 0], sizes = [1, 4], strides = [1, 1]} : vector<8x4xf32> to vector<1x4xf32>
    %174 = vector.extract_strided_slice %1 {offsets = [7, 0], sizes = [1, 4], strides = [1, 1]} : vector<8x4xf32> to vector<1x4xf32>
    %175 = tpu.concatenate %173, %173, %1, %174, %174 in 0 : vector<1x4xf32>, vector<1x4xf32>, vector<8x4xf32>, vector<1x4xf32>, vector<1x4xf32> -> vector<12x4xf32>
    %176 = vector.extract_strided_slice %175 {offsets = [0, 0], sizes = [8, 4], strides = [1, 1]} : vector<12x4xf32> to vector<8x4xf32>
    %177 = vector.extract_strided_slice %175 {offsets = [1, 0], sizes = [8, 4], strides = [1, 1]} : vector<12x4xf32> to vector<8x4xf32>
    %178 = arith.addf %176, %177 : vector<8x4xf32>
    %179 = vector.extract_strided_slice %175 {offsets = [2, 0], sizes = [8, 4], strides = [1, 1]} : vector<12x4xf32> to vector<8x4xf32>
    %180 = arith.addf %178, %179 : vector<8x4xf32>
    %181 = vector.extract_strided_slice %175 {offsets = [3, 0], sizes = [8, 4], strides = [1, 1]} : vector<12x4xf32> to vector<8x4xf32>
    %182 = arith.addf %180, %181 : vector<8x4xf32>
    %183 = vector.extract_strided_slice %175 {offsets = [4, 0], sizes = [8, 4], strides = [1, 1]} : vector<12x4xf32> to vector<8x4xf32>
    %184 = arith.addf %182, %183 : vector<8x4xf32>
    %cst_44 = arith.constant 2.000000e-01 : f32
    %185 = vector.broadcast %cst_44 : f32 to vector<8x4xf32>
    %186 = arith.mulf %184, %185 : vector<8x4xf32>
    %187 = arith.subf %1, %186 : vector<8x4xf32>
    %cst_45 = arith.constant dense<0.000000e+00> : vector<4xf32>
    %188 = vector.multi_reduction <add>, %1, %cst_45 [0] : vector<8x4xf32> to vector<4xf32>
    %189 = vector.shape_cast %188 : vector<4xf32> to vector<1x4xf32>
    %cst_46 = arith.constant 8.000000e+00 : f32
    %190 = vector.broadcast %cst_46 : f32 to vector<1x4xf32>
    %191 = arith.divf %189, %190 : vector<1x4xf32>
    %192 = vector.extract_strided_slice %186 {offsets = [4, 0], sizes = [4, 4], strides = [1, 1]} : vector<8x4xf32> to vector<4x4xf32>
    %193 = tpu.concatenate %192, %191 in 0 : vector<4x4xf32>, vector<1x4xf32> -> vector<5x4xf32>
    %194 = vector.extract_strided_slice %187 {offsets = [4, 0], sizes = [4, 4], strides = [1, 1]} : vector<8x4xf32> to vector<4x4xf32>
    %cst_47 = arith.constant 0.000000e+00 : f32
    %195 = vector.broadcast %cst_47 : f32 to vector<1x4xf32>
    %196 = tpu.concatenate %194, %195 in 0 : vector<4x4xf32>, vector<1x4xf32> -> vector<5x4xf32>
    %c0_48 = arith.constant 0 : index
    %c0_49 = arith.constant 0 : index
    %c0_50 = arith.constant 0 : index
    %197 = vector.load %arg3[%c0_48, %c0_49, %c0_50] : memref<1x5x4xf32, #tpu.memory_space<vmem>>, vector<1x5x4xf32>
    %198 = vector.shape_cast %197 : vector<1x5x4xf32> to vector<5x4xf32>
    %c0_51 = arith.constant 0 : index
    %c0_52 = arith.constant 0 : index
    %199 = vector.load %arg4[%c0_51, %c0_52] : memref<16x32xf32, #tpu.memory_space<vmem>>, vector<16x32xf32>
    %200 = vector.extract_strided_slice %196 {offsets = [4, 0], sizes = [1, 4], strides = [1, 1]} : vector<5x4xf32> to vector<1x4xf32>
    %201 = vector.extract_strided_slice %196 {offsets = [0, 0], sizes = [4, 4], strides = [1, 1]} : vector<5x4xf32> to vector<4x4xf32>
    %202 = tpu.concatenate %200, %201 in 0 : vector<1x4xf32>, vector<4x4xf32> -> vector<5x4xf32>
    %203 = vector.extract_strided_slice %196 {offsets = [1, 0], sizes = [4, 4], strides = [1, 1]} : vector<5x4xf32> to vector<4x4xf32>
    %204 = vector.extract_strided_slice %196 {offsets = [0, 0], sizes = [1, 4], strides = [1, 1]} : vector<5x4xf32> to vector<1x4xf32>
    %205 = tpu.concatenate %203, %204 in 0 : vector<4x4xf32>, vector<1x4xf32> -> vector<5x4xf32>
    %206 = tpu.concatenate %202, %196, %205 in 1 : vector<5x4xf32>, vector<5x4xf32>, vector<5x4xf32> -> vector<5x12xf32>
    %207 = tpu.concatenate %206, %198 in 1 : vector<5x12xf32>, vector<5x4xf32> -> vector<5x16xf32>
    %cst_53 = arith.constant dense<0.000000e+00> : vector<5x32xf32>
    %208 = tpu.matmul %207, %199, %cst_53 {dimension_numbers = #tpu.dot_dimension_numbers<[1], [0], [0], [1], [0, 0, 1, 1], [], []>} : vector<5x16xf32>, vector<16x32xf32>, vector<5x32xf32> -> vector<5x32xf32>
    %c0_54 = arith.constant 0 : index
    %c0_55 = arith.constant 0 : index
    %209 = vector.load %arg16[%c0_54, %c0_55] : memref<32x96xf32, #tpu.memory_space<vmem>>, vector<32x96xf32>
    %cst_56 = arith.constant dense<0.000000e+00> : vector<5x96xf32>
    %210 = tpu.matmul %208, %209, %cst_56 {dimension_numbers = #tpu.dot_dimension_numbers<[1], [0], [0], [1], [0, 0, 1, 1], [], []>} : vector<5x32xf32>, vector<32x96xf32>, vector<5x96xf32> -> vector<5x96xf32>
    %c0_57 = arith.constant 0 : index
    %c0_58 = arith.constant 0 : index
    %211 = vector.load %arg14[%c0_57, %c0_58] : memref<1x96xf32, #tpu.memory_space<vmem>>, vector<1x96xf32>
    %212 = vector.broadcast %211 : vector<1x96xf32> to vector<5x96xf32>
    %213 = arith.addf %210, %212 : vector<5x96xf32>
    %214 = vector.extract_strided_slice %213 {offsets = [0, 0], sizes = [5, 32], strides = [1, 1]} : vector<5x96xf32> to vector<5x32xf32>
    %215 = vector.extract_strided_slice %213 {offsets = [0, 32], sizes = [5, 32], strides = [1, 1]} : vector<5x96xf32> to vector<5x32xf32>
    %216 = vector.extract_strided_slice %213 {offsets = [0, 64], sizes = [5, 32], strides = [1, 1]} : vector<5x96xf32> to vector<5x32xf32>
    %cst_59 = arith.constant dense<0.000000e+00> : vector<5x5xf32>
    %217 = tpu.matmul %214, %215, %cst_59 {dimension_numbers = #tpu.dot_dimension_numbers<[1], [1], [0], [0], [0, 0, 1, 0], [], []>} : vector<5x32xf32>, vector<5x32xf32>, vector<5x5xf32> -> vector<5x5xf32>
    %218 = tpu.concatenate %217, %217 in 0 : vector<5x5xf32>, vector<5x5xf32> -> vector<10x5xf32>
    %219 = vector.extract_strided_slice %218 {offsets = [0, 0], sizes = [5, 1], strides = [1, 1]} : vector<10x5xf32> to vector<5x1xf32>
    %220 = vector.extract_strided_slice %218 {offsets = [1, 1], sizes = [5, 1], strides = [1, 1]} : vector<10x5xf32> to vector<5x1xf32>
    %221 = arith.addf %219, %220 : vector<5x1xf32>
    %222 = vector.extract_strided_slice %218 {offsets = [2, 2], sizes = [5, 1], strides = [1, 1]} : vector<10x5xf32> to vector<5x1xf32>
    %223 = arith.addf %221, %222 : vector<5x1xf32>
    %224 = vector.extract_strided_slice %218 {offsets = [3, 3], sizes = [5, 1], strides = [1, 1]} : vector<10x5xf32> to vector<5x1xf32>
    %225 = arith.addf %223, %224 : vector<5x1xf32>
    %226 = vector.extract_strided_slice %218 {offsets = [4, 4], sizes = [5, 1], strides = [1, 1]} : vector<10x5xf32> to vector<5x1xf32>
    %227 = arith.addf %225, %226 : vector<5x1xf32>
    %cst_60 = arith.constant 3.125000e-02 : f32
    %228 = vector.broadcast %cst_60 : f32 to vector<5x1xf32>
    %229 = arith.mulf %227, %228 : vector<5x1xf32>
    %cst_61 = arith.constant dense<0xFF800000> : vector<1xf32>
    %230 = vector.multi_reduction <maximumf>, %229, %cst_61 [0] : vector<5x1xf32> to vector<1xf32>
    %231 = vector.shape_cast %230 : vector<1xf32> to vector<1x1xf32>
    %232 = vector.broadcast %231 : vector<1x1xf32> to vector<5x1xf32>
    %233 = arith.cmpf oge, %229, %232 : vector<5x1xf32>
    %234 = vector.broadcast %231 : vector<1x1xf32> to vector<5x1xf32>
    %235 = arith.subf %229, %234 : vector<5x1xf32>
    %236 = math.exp %235 : vector<5x1xf32>
    %cst_62 = arith.constant 0.000000e+00 : f32
    %237 = vector.broadcast %cst_62 : f32 to vector<5x1xf32>
    %238 = arith.select %233, %236, %237 : vector<5x1xi1>, vector<5x1xf32>
    %cst_63 = arith.constant dense<0.000000e+00> : vector<1xf32>
    %239 = vector.multi_reduction <add>, %238, %cst_63 [0] : vector<5x1xf32> to vector<1xf32>
    %240 = vector.shape_cast %239 : vector<1xf32> to vector<1x1xf32>
    %241 = vector.broadcast %240 : vector<1x1xf32> to vector<5x1xf32>
    %242 = arith.divf %238, %241 : vector<5x1xf32>
    %243 = tpu.concatenate %216, %216 in 0 : vector<5x32xf32>, vector<5x32xf32> -> vector<10x32xf32>
    %244 = vector.extract_strided_slice %242 {offsets = [0, 0], sizes = [1, 1], strides = [1, 1]} : vector<5x1xf32> to vector<1x1xf32>
    %245 = vector.extract_strided_slice %243 {offsets = [0, 0], sizes = [5, 32], strides = [1, 1]} : vector<10x32xf32> to vector<5x32xf32>
    %246 = vector.broadcast %244 : vector<1x1xf32> to vector<5x32xf32>
    %247 = arith.mulf %246, %245 : vector<5x32xf32>
    %248 = vector.extract_strided_slice %242 {offsets = [1, 0], sizes = [1, 1], strides = [1, 1]} : vector<5x1xf32> to vector<1x1xf32>
    %249 = vector.extract_strided_slice %243 {offsets = [1, 0], sizes = [5, 32], strides = [1, 1]} : vector<10x32xf32> to vector<5x32xf32>
    %250 = vector.broadcast %248 : vector<1x1xf32> to vector<5x32xf32>
    %251 = arith.mulf %250, %249 : vector<5x32xf32>
    %252 = arith.addf %247, %251 : vector<5x32xf32>
    %253 = vector.extract_strided_slice %242 {offsets = [2, 0], sizes = [1, 1], strides = [1, 1]} : vector<5x1xf32> to vector<1x1xf32>
    %254 = vector.extract_strided_slice %243 {offsets = [2, 0], sizes = [5, 32], strides = [1, 1]} : vector<10x32xf32> to vector<5x32xf32>
    %255 = vector.broadcast %253 : vector<1x1xf32> to vector<5x32xf32>
    %256 = arith.mulf %255, %254 : vector<5x32xf32>
    %257 = arith.addf %252, %256 : vector<5x32xf32>
    %258 = vector.extract_strided_slice %242 {offsets = [3, 0], sizes = [1, 1], strides = [1, 1]} : vector<5x1xf32> to vector<1x1xf32>
    %259 = vector.extract_strided_slice %243 {offsets = [3, 0], sizes = [5, 32], strides = [1, 1]} : vector<10x32xf32> to vector<5x32xf32>
    %260 = vector.broadcast %258 : vector<1x1xf32> to vector<5x32xf32>
    %261 = arith.mulf %260, %259 : vector<5x32xf32>
    %262 = arith.addf %257, %261 : vector<5x32xf32>
    %263 = vector.extract_strided_slice %242 {offsets = [4, 0], sizes = [1, 1], strides = [1, 1]} : vector<5x1xf32> to vector<1x1xf32>
    %264 = vector.extract_strided_slice %243 {offsets = [4, 0], sizes = [5, 32], strides = [1, 1]} : vector<10x32xf32> to vector<5x32xf32>
    %265 = vector.broadcast %263 : vector<1x1xf32> to vector<5x32xf32>
    %266 = arith.mulf %265, %264 : vector<5x32xf32>
    %267 = arith.addf %262, %266 : vector<5x32xf32>
    %c0_64 = arith.constant 0 : index
    %c0_65 = arith.constant 0 : index
    %268 = vector.load %arg15[%c0_64, %c0_65] : memref<32x32xf32, #tpu.memory_space<vmem>>, vector<32x32xf32>
    %cst_66 = arith.constant dense<0.000000e+00> : vector<5x32xf32>
    %269 = tpu.matmul %267, %268, %cst_66 {dimension_numbers = #tpu.dot_dimension_numbers<[1], [0], [0], [1], [0, 0, 1, 1], [], []>} : vector<5x32xf32>, vector<32x32xf32>, vector<5x32xf32> -> vector<5x32xf32>
    %270 = arith.addf %208, %269 : vector<5x32xf32>
    %c0_67 = arith.constant 0 : index
    %c0_68 = arith.constant 0 : index
    %271 = vector.load %arg13[%c0_67, %c0_68] : memref<1x32xf32, #tpu.memory_space<vmem>>, vector<1x32xf32>
    %272 = vector.broadcast %271 : vector<1x32xf32> to vector<5x32xf32>
    %273 = arith.addf %270, %272 : vector<5x32xf32>
    %274 = vector.extract_strided_slice %273 {offsets = [0, 0], sizes = [1, 32], strides = [1, 1]} : vector<5x32xf32> to vector<1x32xf32>
    %275 = vector.extract_strided_slice %273 {offsets = [4, 0], sizes = [1, 32], strides = [1, 1]} : vector<5x32xf32> to vector<1x32xf32>
    %276 = tpu.concatenate %274, %274, %273, %275, %275 in 0 : vector<1x32xf32>, vector<1x32xf32>, vector<5x32xf32>, vector<1x32xf32>, vector<1x32xf32> -> vector<9x32xf32>
    %277 = vector.extract_strided_slice %276 {offsets = [0, 0], sizes = [5, 32], strides = [1, 1]} : vector<9x32xf32> to vector<5x32xf32>
    %278 = vector.extract_strided_slice %276 {offsets = [1, 0], sizes = [5, 32], strides = [1, 1]} : vector<9x32xf32> to vector<5x32xf32>
    %279 = arith.addf %277, %278 : vector<5x32xf32>
    %280 = vector.extract_strided_slice %276 {offsets = [2, 0], sizes = [5, 32], strides = [1, 1]} : vector<9x32xf32> to vector<5x32xf32>
    %281 = arith.addf %279, %280 : vector<5x32xf32>
    %282 = vector.extract_strided_slice %276 {offsets = [3, 0], sizes = [5, 32], strides = [1, 1]} : vector<9x32xf32> to vector<5x32xf32>
    %283 = arith.addf %281, %282 : vector<5x32xf32>
    %284 = vector.extract_strided_slice %276 {offsets = [4, 0], sizes = [5, 32], strides = [1, 1]} : vector<9x32xf32> to vector<5x32xf32>
    %285 = arith.addf %283, %284 : vector<5x32xf32>
    %cst_69 = arith.constant 2.000000e-01 : f32
    %286 = vector.broadcast %cst_69 : f32 to vector<5x32xf32>
    %287 = arith.mulf %285, %286 : vector<5x32xf32>
    %288 = arith.subf %273, %287 : vector<5x32xf32>
    %c0_70 = arith.constant 0 : index
    %c0_71 = arith.constant 0 : index
    %289 = vector.load %arg10[%c0_70, %c0_71] : memref<32x32xf32, #tpu.memory_space<vmem>>, vector<32x32xf32>
    %cst_72 = arith.constant dense<0.000000e+00> : vector<5x32xf32>
    %290 = tpu.matmul %288, %289, %cst_72 {dimension_numbers = #tpu.dot_dimension_numbers<[1], [0], [0], [1], [0, 0, 1, 1], [], []>} : vector<5x32xf32>, vector<32x32xf32>, vector<5x32xf32> -> vector<5x32xf32>
    %c0_73 = arith.constant 0 : index
    %c0_74 = arith.constant 0 : index
    %291 = vector.load %arg7[%c0_73, %c0_74] : memref<1x32xf32, #tpu.memory_space<vmem>>, vector<1x32xf32>
    %292 = vector.broadcast %291 : vector<1x32xf32> to vector<5x32xf32>
    %293 = arith.addf %290, %292 : vector<5x32xf32>
    %294 = vector.extract_strided_slice %172 {offsets = [0, 0], sizes = [5, 32], strides = [1, 1]} : vector<8x32xf32> to vector<5x32xf32>
    %c0_75 = arith.constant 0 : index
    %c0_76 = arith.constant 0 : index
    %295 = vector.load %arg8[%c0_75, %c0_76] : memref<32x64xf32, #tpu.memory_space<vmem>>, vector<32x64xf32>
    %cst_77 = arith.constant dense<0.000000e+00> : vector<5x64xf32>
    %296 = tpu.matmul %294, %295, %cst_77 {dimension_numbers = #tpu.dot_dimension_numbers<[1], [0], [0], [1], [0, 0, 1, 1], [], []>} : vector<5x32xf32>, vector<32x64xf32>, vector<5x64xf32> -> vector<5x64xf32>
    %c0_78 = arith.constant 0 : index
    %c0_79 = arith.constant 0 : index
    %297 = vector.load %arg5[%c0_78, %c0_79] : memref<1x64xf32, #tpu.memory_space<vmem>>, vector<1x64xf32>
    %298 = vector.broadcast %297 : vector<1x64xf32> to vector<5x64xf32>
    %299 = arith.addf %296, %298 : vector<5x64xf32>
    %300 = vector.extract_strided_slice %299 {offsets = [0, 0], sizes = [5, 32], strides = [1, 1]} : vector<5x64xf32> to vector<5x32xf32>
    %301 = vector.extract_strided_slice %299 {offsets = [0, 32], sizes = [5, 32], strides = [1, 1]} : vector<5x64xf32> to vector<5x32xf32>
    %cst_80 = arith.constant dense<0.000000e+00> : vector<5x5xf32>
    %302 = tpu.matmul %293, %300, %cst_80 {dimension_numbers = #tpu.dot_dimension_numbers<[1], [1], [0], [0], [0, 0, 1, 0], [], []>} : vector<5x32xf32>, vector<5x32xf32>, vector<5x5xf32> -> vector<5x5xf32>
    %303 = tpu.concatenate %302, %302 in 0 : vector<5x5xf32>, vector<5x5xf32> -> vector<10x5xf32>
    %304 = vector.extract_strided_slice %303 {offsets = [0, 0], sizes = [5, 1], strides = [1, 1]} : vector<10x5xf32> to vector<5x1xf32>
    %305 = vector.extract_strided_slice %303 {offsets = [1, 1], sizes = [5, 1], strides = [1, 1]} : vector<10x5xf32> to vector<5x1xf32>
    %306 = arith.addf %304, %305 : vector<5x1xf32>
    %307 = vector.extract_strided_slice %303 {offsets = [2, 2], sizes = [5, 1], strides = [1, 1]} : vector<10x5xf32> to vector<5x1xf32>
    %308 = arith.addf %306, %307 : vector<5x1xf32>
    %309 = vector.extract_strided_slice %303 {offsets = [3, 3], sizes = [5, 1], strides = [1, 1]} : vector<10x5xf32> to vector<5x1xf32>
    %310 = arith.addf %308, %309 : vector<5x1xf32>
    %311 = vector.extract_strided_slice %303 {offsets = [4, 4], sizes = [5, 1], strides = [1, 1]} : vector<10x5xf32> to vector<5x1xf32>
    %312 = arith.addf %310, %311 : vector<5x1xf32>
    %cst_81 = arith.constant 3.125000e-02 : f32
    %313 = vector.broadcast %cst_81 : f32 to vector<5x1xf32>
    %314 = arith.mulf %312, %313 : vector<5x1xf32>
    %cst_82 = arith.constant dense<0xFF800000> : vector<1xf32>
    %315 = vector.multi_reduction <maximumf>, %314, %cst_82 [0] : vector<5x1xf32> to vector<1xf32>
    %316 = vector.shape_cast %315 : vector<1xf32> to vector<1x1xf32>
    %317 = vector.broadcast %316 : vector<1x1xf32> to vector<5x1xf32>
    %318 = arith.cmpf oge, %314, %317 : vector<5x1xf32>
    %319 = vector.broadcast %316 : vector<1x1xf32> to vector<5x1xf32>
    %320 = arith.subf %314, %319 : vector<5x1xf32>
    %321 = math.exp %320 : vector<5x1xf32>
    %cst_83 = arith.constant 0.000000e+00 : f32
    %322 = vector.broadcast %cst_83 : f32 to vector<5x1xf32>
    %323 = arith.select %318, %321, %322 : vector<5x1xi1>, vector<5x1xf32>
    %cst_84 = arith.constant dense<0.000000e+00> : vector<1xf32>
    %324 = vector.multi_reduction <add>, %323, %cst_84 [0] : vector<5x1xf32> to vector<1xf32>
    %325 = vector.shape_cast %324 : vector<1xf32> to vector<1x1xf32>
    %326 = vector.broadcast %325 : vector<1x1xf32> to vector<5x1xf32>
    %327 = arith.divf %323, %326 : vector<5x1xf32>
    %328 = tpu.concatenate %301, %301 in 0 : vector<5x32xf32>, vector<5x32xf32> -> vector<10x32xf32>
    %329 = vector.extract_strided_slice %327 {offsets = [0, 0], sizes = [1, 1], strides = [1, 1]} : vector<5x1xf32> to vector<1x1xf32>
    %330 = vector.extract_strided_slice %328 {offsets = [0, 0], sizes = [5, 32], strides = [1, 1]} : vector<10x32xf32> to vector<5x32xf32>
    %331 = vector.broadcast %329 : vector<1x1xf32> to vector<5x32xf32>
    %332 = arith.mulf %331, %330 : vector<5x32xf32>
    %333 = vector.extract_strided_slice %327 {offsets = [1, 0], sizes = [1, 1], strides = [1, 1]} : vector<5x1xf32> to vector<1x1xf32>
    %334 = vector.extract_strided_slice %328 {offsets = [1, 0], sizes = [5, 32], strides = [1, 1]} : vector<10x32xf32> to vector<5x32xf32>
    %335 = vector.broadcast %333 : vector<1x1xf32> to vector<5x32xf32>
    %336 = arith.mulf %335, %334 : vector<5x32xf32>
    %337 = arith.addf %332, %336 : vector<5x32xf32>
    %338 = vector.extract_strided_slice %327 {offsets = [2, 0], sizes = [1, 1], strides = [1, 1]} : vector<5x1xf32> to vector<1x1xf32>
    %339 = vector.extract_strided_slice %328 {offsets = [2, 0], sizes = [5, 32], strides = [1, 1]} : vector<10x32xf32> to vector<5x32xf32>
    %340 = vector.broadcast %338 : vector<1x1xf32> to vector<5x32xf32>
    %341 = arith.mulf %340, %339 : vector<5x32xf32>
    %342 = arith.addf %337, %341 : vector<5x32xf32>
    %343 = vector.extract_strided_slice %327 {offsets = [3, 0], sizes = [1, 1], strides = [1, 1]} : vector<5x1xf32> to vector<1x1xf32>
    %344 = vector.extract_strided_slice %328 {offsets = [3, 0], sizes = [5, 32], strides = [1, 1]} : vector<10x32xf32> to vector<5x32xf32>
    %345 = vector.broadcast %343 : vector<1x1xf32> to vector<5x32xf32>
    %346 = arith.mulf %345, %344 : vector<5x32xf32>
    %347 = arith.addf %342, %346 : vector<5x32xf32>
    %348 = vector.extract_strided_slice %327 {offsets = [4, 0], sizes = [1, 1], strides = [1, 1]} : vector<5x1xf32> to vector<1x1xf32>
    %349 = vector.extract_strided_slice %328 {offsets = [4, 0], sizes = [5, 32], strides = [1, 1]} : vector<10x32xf32> to vector<5x32xf32>
    %350 = vector.broadcast %348 : vector<1x1xf32> to vector<5x32xf32>
    %351 = arith.mulf %350, %349 : vector<5x32xf32>
    %352 = arith.addf %347, %351 : vector<5x32xf32>
    %c0_85 = arith.constant 0 : index
    %c0_86 = arith.constant 0 : index
    %353 = vector.load %arg9[%c0_85, %c0_86] : memref<32x32xf32, #tpu.memory_space<vmem>>, vector<32x32xf32>
    %cst_87 = arith.constant dense<0.000000e+00> : vector<5x32xf32>
    %354 = tpu.matmul %352, %353, %cst_87 {dimension_numbers = #tpu.dot_dimension_numbers<[1], [0], [0], [1], [0, 0, 1, 1], [], []>} : vector<5x32xf32>, vector<32x32xf32>, vector<5x32xf32> -> vector<5x32xf32>
    %355 = arith.addf %288, %354 : vector<5x32xf32>
    %c0_88 = arith.constant 0 : index
    %c0_89 = arith.constant 0 : index
    %356 = vector.load %arg6[%c0_88, %c0_89] : memref<1x32xf32, #tpu.memory_space<vmem>>, vector<1x32xf32>
    %357 = vector.broadcast %356 : vector<1x32xf32> to vector<5x32xf32>
    %358 = arith.addf %355, %357 : vector<5x32xf32>
    %359 = vector.extract_strided_slice %358 {offsets = [0, 0], sizes = [1, 32], strides = [1, 1]} : vector<5x32xf32> to vector<1x32xf32>
    %360 = vector.extract_strided_slice %358 {offsets = [4, 0], sizes = [1, 32], strides = [1, 1]} : vector<5x32xf32> to vector<1x32xf32>
    %361 = tpu.concatenate %359, %359, %358, %360, %360 in 0 : vector<1x32xf32>, vector<1x32xf32>, vector<5x32xf32>, vector<1x32xf32>, vector<1x32xf32> -> vector<9x32xf32>
    %362 = vector.extract_strided_slice %361 {offsets = [0, 0], sizes = [5, 32], strides = [1, 1]} : vector<9x32xf32> to vector<5x32xf32>
    %363 = vector.extract_strided_slice %361 {offsets = [1, 0], sizes = [5, 32], strides = [1, 1]} : vector<9x32xf32> to vector<5x32xf32>
    %364 = arith.addf %362, %363 : vector<5x32xf32>
    %365 = vector.extract_strided_slice %361 {offsets = [2, 0], sizes = [5, 32], strides = [1, 1]} : vector<9x32xf32> to vector<5x32xf32>
    %366 = arith.addf %364, %365 : vector<5x32xf32>
    %367 = vector.extract_strided_slice %361 {offsets = [3, 0], sizes = [5, 32], strides = [1, 1]} : vector<9x32xf32> to vector<5x32xf32>
    %368 = arith.addf %366, %367 : vector<5x32xf32>
    %369 = vector.extract_strided_slice %361 {offsets = [4, 0], sizes = [5, 32], strides = [1, 1]} : vector<9x32xf32> to vector<5x32xf32>
    %370 = arith.addf %368, %369 : vector<5x32xf32>
    %cst_90 = arith.constant 2.000000e-01 : f32
    %371 = vector.broadcast %cst_90 : f32 to vector<5x32xf32>
    %372 = arith.mulf %370, %371 : vector<5x32xf32>
    %373 = arith.subf %358, %372 : vector<5x32xf32>
    %c0_91 = arith.constant 0 : index
    %c0_92 = arith.constant 0 : index
    %374 = vector.load %arg11[%c0_91, %c0_92] : memref<32x64xf32, #tpu.memory_space<vmem>>, vector<32x64xf32>
    %cst_93 = arith.constant dense<0.000000e+00> : vector<5x64xf32>
    %375 = tpu.matmul %373, %374, %cst_93 {dimension_numbers = #tpu.dot_dimension_numbers<[1], [0], [0], [1], [0, 0, 1, 1], [], []>} : vector<5x32xf32>, vector<32x64xf32>, vector<5x64xf32> -> vector<5x64xf32>
    %cst_94 = arith.constant 0.000000e+00 : f32
    %376 = vector.broadcast %cst_94 : f32 to vector<5x64xf32>
    %377 = arith.maximumf %375, %376 : vector<5x64xf32>
    %c0_95 = arith.constant 0 : index
    %c0_96 = arith.constant 0 : index
    %378 = vector.load %arg12[%c0_95, %c0_96] : memref<64x32xf32, #tpu.memory_space<vmem>>, vector<64x32xf32>
    %cst_97 = arith.constant dense<0.000000e+00> : vector<5x32xf32>
    %379 = tpu.matmul %377, %378, %cst_97 {dimension_numbers = #tpu.dot_dimension_numbers<[1], [0], [0], [1], [0, 0, 1, 1], [], []>} : vector<5x64xf32>, vector<64x32xf32>, vector<5x32xf32> -> vector<5x32xf32>
    %380 = arith.addf %373, %379 : vector<5x32xf32>
    %381 = vector.extract_strided_slice %380 {offsets = [0, 0], sizes = [1, 32], strides = [1, 1]} : vector<5x32xf32> to vector<1x32xf32>
    %382 = vector.extract_strided_slice %380 {offsets = [4, 0], sizes = [1, 32], strides = [1, 1]} : vector<5x32xf32> to vector<1x32xf32>
    %383 = tpu.concatenate %381, %381, %380, %382, %382 in 0 : vector<1x32xf32>, vector<1x32xf32>, vector<5x32xf32>, vector<1x32xf32>, vector<1x32xf32> -> vector<9x32xf32>
    %384 = vector.extract_strided_slice %383 {offsets = [0, 0], sizes = [5, 32], strides = [1, 1]} : vector<9x32xf32> to vector<5x32xf32>
    %385 = vector.extract_strided_slice %383 {offsets = [1, 0], sizes = [5, 32], strides = [1, 1]} : vector<9x32xf32> to vector<5x32xf32>
    %386 = arith.addf %384, %385 : vector<5x32xf32>
    %387 = vector.extract_strided_slice %383 {offsets = [2, 0], sizes = [5, 32], strides = [1, 1]} : vector<9x32xf32> to vector<5x32xf32>
    %388 = arith.addf %386, %387 : vector<5x32xf32>
    %389 = vector.extract_strided_slice %383 {offsets = [3, 0], sizes = [5, 32], strides = [1, 1]} : vector<9x32xf32> to vector<5x32xf32>
    %390 = arith.addf %388, %389 : vector<5x32xf32>
    %391 = vector.extract_strided_slice %383 {offsets = [4, 0], sizes = [5, 32], strides = [1, 1]} : vector<9x32xf32> to vector<5x32xf32>
    %392 = arith.addf %390, %391 : vector<5x32xf32>
    %cst_98 = arith.constant 2.000000e-01 : f32
    %393 = vector.broadcast %cst_98 : f32 to vector<5x32xf32>
    %394 = arith.mulf %392, %393 : vector<5x32xf32>
    %395 = arith.subf %380, %394 : vector<5x32xf32>
    %396 = arith.addf %287, %372 : vector<5x32xf32>
    %397 = arith.addf %396, %394 : vector<5x32xf32>
    %c0_99 = arith.constant 0 : index
    %c0_100 = arith.constant 0 : index
    %398 = vector.load %arg17[%c0_99, %c0_100] : memref<96x4xf32, #tpu.memory_space<vmem>>, vector<96x4xf32>
    %399 = vector.extract_strided_slice %397 {offsets = [4, 0], sizes = [1, 32], strides = [1, 1]} : vector<5x32xf32> to vector<1x32xf32>
    %400 = vector.extract_strided_slice %397 {offsets = [0, 0], sizes = [4, 32], strides = [1, 1]} : vector<5x32xf32> to vector<4x32xf32>
    %401 = tpu.concatenate %399, %400 in 0 : vector<1x32xf32>, vector<4x32xf32> -> vector<5x32xf32>
    %402 = vector.extract_strided_slice %397 {offsets = [1, 0], sizes = [4, 32], strides = [1, 1]} : vector<5x32xf32> to vector<4x32xf32>
    %403 = vector.extract_strided_slice %397 {offsets = [0, 0], sizes = [1, 32], strides = [1, 1]} : vector<5x32xf32> to vector<1x32xf32>
    %404 = tpu.concatenate %402, %403 in 0 : vector<4x32xf32>, vector<1x32xf32> -> vector<5x32xf32>
    %405 = tpu.concatenate %401, %397, %404 in 1 : vector<5x32xf32>, vector<5x32xf32>, vector<5x32xf32> -> vector<5x96xf32>
    %cst_101 = arith.constant dense<0.000000e+00> : vector<5x4xf32>
    %406 = tpu.matmul %405, %398, %cst_101 {dimension_numbers = #tpu.dot_dimension_numbers<[1], [0], [0], [1], [0, 0, 1, 1], [], []>} : vector<5x96xf32>, vector<96x4xf32>, vector<5x4xf32> -> vector<5x4xf32>
    %407 = arith.addf %193, %406 : vector<5x4xf32>
    %c0_102 = arith.constant 0 : index
    %c0_103 = arith.constant 0 : index
    %408 = vector.load %arg19[%c0_102, %c0_103] : memref<1x32xf32, #tpu.memory_space<vmem>>, vector<1x32xf32>
    %c0_104 = arith.constant 0 : index
    %c0_105 = arith.constant 0 : index
    %409 = vector.load %arg18[%c0_104, %c0_105] : memref<1x32xf32, #tpu.memory_space<vmem>>, vector<1x32xf32>
    %cst_106 = arith.constant dense<0.000000e+00> : vector<5xf32>
    %410 = vector.multi_reduction <add>, %395, %cst_106 [1] : vector<5x32xf32> to vector<5xf32>
    %411 = vector.shape_cast %410 : vector<5xf32> to vector<5x1xf32>
    %cst_107 = arith.constant 3.200000e+01 : f32
    %412 = vector.broadcast %cst_107 : f32 to vector<5x1xf32>
    %413 = arith.divf %411, %412 : vector<5x1xf32>
    %414 = vector.broadcast %413 : vector<5x1xf32> to vector<5x32xf32>
    %415 = arith.subf %395, %414 : vector<5x32xf32>
    %416 = arith.mulf %415, %415 : vector<5x32xf32>
    %cst_108 = arith.constant dense<0.000000e+00> : vector<5xf32>
    %417 = vector.multi_reduction <add>, %416, %cst_108 [1] : vector<5x32xf32> to vector<5xf32>
    %418 = vector.shape_cast %417 : vector<5xf32> to vector<5x1xf32>
    %cst_109 = arith.constant 3.200000e+01 : f32
    %419 = vector.broadcast %cst_109 : f32 to vector<5x1xf32>
    %420 = arith.divf %418, %419 : vector<5x1xf32>
    %421 = vector.broadcast %413 : vector<5x1xf32> to vector<5x32xf32>
    %422 = arith.subf %395, %421 : vector<5x32xf32>
    %cst_110 = arith.constant 9.99999974E-6 : f32
    %423 = vector.broadcast %cst_110 : f32 to vector<5x1xf32>
    %424 = arith.addf %420, %423 : vector<5x1xf32>
    %425 = math.rsqrt %424 : vector<5x1xf32>
    %426 = vector.broadcast %425 : vector<5x1xf32> to vector<5x32xf32>
    %427 = arith.mulf %422, %426 : vector<5x32xf32>
    %428 = vector.broadcast %408 : vector<1x32xf32> to vector<5x32xf32>
    %429 = arith.mulf %427, %428 : vector<5x32xf32>
    %430 = vector.broadcast %409 : vector<1x32xf32> to vector<5x32xf32>
    %431 = arith.addf %429, %430 : vector<5x32xf32>
    %cst_111 = arith.constant dense<0.000000e+00> : vector<32xf32>
    %432 = vector.multi_reduction <add>, %431, %cst_111 [0] : vector<5x32xf32> to vector<32xf32>
    %433 = vector.shape_cast %432 : vector<32xf32> to vector<1x32xf32>
    %cst_112 = arith.constant 5.000000e+00 : f32
    %434 = vector.broadcast %cst_112 : f32 to vector<1x32xf32>
    %435 = arith.divf %433, %434 : vector<1x32xf32>
    %436 = vector.broadcast %435 : vector<1x32xf32> to vector<5x32xf32>
    %437 = arith.subf %431, %436 : vector<5x32xf32>
    %438 = vector.extract_strided_slice %437 {offsets = [4, 0], sizes = [1, 32], strides = [1, 1]} : vector<5x32xf32> to vector<1x32xf32>
    %c0_113 = arith.constant 0 : index
    %c0_114 = arith.constant 0 : index
    %439 = vector.load %arg21[%c0_113, %c0_114] : memref<32x4xf32, #tpu.memory_space<vmem>>, vector<32x4xf32>
    %cst_115 = arith.constant dense<0.000000e+00> : vector<1x4xf32>
    %440 = tpu.matmul %438, %439, %cst_115 {dimension_numbers = #tpu.dot_dimension_numbers<[1], [0], [0], [1], [0, 0, 1, 1], [], []>} : vector<1x32xf32>, vector<32x4xf32>, vector<1x4xf32> -> vector<1x4xf32>
    %c0_116 = arith.constant 0 : index
    %c0_117 = arith.constant 0 : index
    %441 = vector.load %arg20[%c0_116, %c0_117] : memref<1x4xf32, #tpu.memory_space<vmem>>, vector<1x4xf32>
    %442 = arith.addf %440, %441 : vector<1x4xf32>
    %443 = vector.extract_strided_slice %407 {offsets = [4, 0], sizes = [1, 4], strides = [1, 1]} : vector<5x4xf32> to vector<1x4xf32>
    %444 = arith.addf %443, %442 : vector<1x4xf32>
    %c0_118 = arith.constant 0 : index
    %c0_119 = arith.constant 0 : index
    %c0_120 = arith.constant 0 : index
    %445 = vector.load %arg31[%c0_118, %c0_119, %c0_120] : memref<1x1x4xf32, #tpu.memory_space<vmem>>, vector<1x1x4xf32>
    %446 = vector.shape_cast %445 : vector<1x1x4xf32> to vector<1x4xf32>
    %447 = vector.shape_cast %444 : vector<1x4xf32> to vector<1x1x4xf32>
    tpu.vector_store %arg31[%c0_118, %c0_119, %c0_120], %447 {strides = array<i32>} : memref<1x1x4xf32, #tpu.memory_space<vmem>>, vector<1x1x4xf32>,
    return
  }
  func.func @transform_0(%arg0: i32) -> (i32, i32, i32) {
    %c0_i32 = arith.constant 0 : i32
    %c0_i32_0 = arith.constant 0 : i32
    %c0_i32_1 = arith.constant 0 : i32
    return %arg0, %c0_i32, %c0_i32_0 : i32, i32, i32
  }
  func.func @transform_1(%arg0: i32) -> (i32, i32, i32) {
    %c0_i32 = arith.constant 0 : i32
    %c0_i32_0 = arith.constant 0 : i32
    %c0_i32_1 = arith.constant 0 : i32
    return %arg0, %c0_i32, %c0_i32_0 : i32, i32, i32
  }
  func.func @transform_2(%arg0: i32) -> (i32, i32, i32) {
    %c0_i32 = arith.constant 0 : i32
    %c0_i32_0 = arith.constant 0 : i32
    %c0_i32_1 = arith.constant 0 : i32
    return %arg0, %c0_i32, %c0_i32_0 : i32, i32, i32
  }
  func.func @transform_3(%arg0: i32) -> (i32, i32) {
    %c0_i32 = arith.constant 0 : i32
    %c0_i32_0 = arith.constant 0 : i32
    %c0_i32_1 = arith.constant 0 : i32
    return %c0_i32, %c0_i32_0 : i32, i32
  }
  func.func @transform_4(%arg0: i32) -> (i32, i32) {
    %c0_i32 = arith.constant 0 : i32
    %c0_i32_0 = arith.constant 0 : i32
    %c0_i32_1 = arith.constant 0 : i32
    return %c0_i32, %c0_i32_0 : i32, i32
  }
  func.func @transform_5(%arg0: i32) -> (i32, i32) {
    %c0_i32 = arith.constant 0 : i32
    %c0_i32_0 = arith.constant 0 : i32
    %c0_i32_1 = arith.constant 0 : i32
    return %c0_i32, %c0_i32_0 : i32, i32
  }
  func.func @transform_6(%arg0: i32) -> (i32, i32) {
    %c0_i32 = arith.constant 0 : i32
    %c0_i32_0 = arith.constant 0 : i32
    %c0_i32_1 = arith.constant 0 : i32
    return %c0_i32, %c0_i32_0 : i32, i32
  }
  func.func @transform_7(%arg0: i32) -> (i32, i32) {
    %c0_i32 = arith.constant 0 : i32
    %c0_i32_0 = arith.constant 0 : i32
    %c0_i32_1 = arith.constant 0 : i32
    return %c0_i32, %c0_i32_0 : i32, i32
  }
  func.func @transform_8(%arg0: i32) -> (i32, i32) {
    %c0_i32 = arith.constant 0 : i32
    %c0_i32_0 = arith.constant 0 : i32
    %c0_i32_1 = arith.constant 0 : i32
    return %c0_i32, %c0_i32_0 : i32, i32
  }
  func.func @transform_9(%arg0: i32) -> (i32, i32) {
    %c0_i32 = arith.constant 0 : i32
    %c0_i32_0 = arith.constant 0 : i32
    %c0_i32_1 = arith.constant 0 : i32
    return %c0_i32, %c0_i32_0 : i32, i32
  }
  func.func @transform_10(%arg0: i32) -> (i32, i32) {
    %c0_i32 = arith.constant 0 : i32
    %c0_i32_0 = arith.constant 0 : i32
    %c0_i32_1 = arith.constant 0 : i32
    return %c0_i32, %c0_i32_0 : i32, i32
  }
  func.func @transform_11(%arg0: i32) -> (i32, i32) {
    %c0_i32 = arith.constant 0 : i32
    %c0_i32_0 = arith.constant 0 : i32
    %c0_i32_1 = arith.constant 0 : i32
    return %c0_i32, %c0_i32_0 : i32, i32
  }
  func.func @transform_12(%arg0: i32) -> (i32, i32) {
    %c0_i32 = arith.constant 0 : i32
    %c0_i32_0 = arith.constant 0 : i32
    %c0_i32_1 = arith.constant 0 : i32
    return %c0_i32, %c0_i32_0 : i32, i32
  }
  func.func @transform_13(%arg0: i32) -> (i32, i32) {
    %c0_i32 = arith.constant 0 : i32
    %c0_i32_0 = arith.constant 0 : i32
    %c0_i32_1 = arith.constant 0 : i32
    return %c0_i32, %c0_i32_0 : i32, i32
  }
  func.func @transform_14(%arg0: i32) -> (i32, i32) {
    %c0_i32 = arith.constant 0 : i32
    %c0_i32_0 = arith.constant 0 : i32
    %c0_i32_1 = arith.constant 0 : i32
    return %c0_i32, %c0_i32_0 : i32, i32
  }
  func.func @transform_15(%arg0: i32) -> (i32, i32) {
    %c0_i32 = arith.constant 0 : i32
    %c0_i32_0 = arith.constant 0 : i32
    %c0_i32_1 = arith.constant 0 : i32
    return %c0_i32, %c0_i32_0 : i32, i32
  }
  func.func @transform_16(%arg0: i32) -> (i32, i32) {
    %c0_i32 = arith.constant 0 : i32
    %c0_i32_0 = arith.constant 0 : i32
    %c0_i32_1 = arith.constant 0 : i32
    return %c0_i32, %c0_i32_0 : i32, i32
  }
  func.func @transform_17(%arg0: i32) -> (i32, i32) {
    %c0_i32 = arith.constant 0 : i32
    %c0_i32_0 = arith.constant 0 : i32
    %c0_i32_1 = arith.constant 0 : i32
    return %c0_i32, %c0_i32_0 : i32, i32
  }
  func.func @transform_18(%arg0: i32) -> (i32, i32) {
    %c0_i32 = arith.constant 0 : i32
    %c0_i32_0 = arith.constant 0 : i32
    %c0_i32_1 = arith.constant 0 : i32
    return %c0_i32, %c0_i32_0 : i32, i32
  }
  func.func @transform_19(%arg0: i32) -> (i32, i32) {
    %c0_i32 = arith.constant 0 : i32
    %c0_i32_0 = arith.constant 0 : i32
    %c0_i32_1 = arith.constant 0 : i32
    return %c0_i32, %c0_i32_0 : i32, i32
  }
  func.func @transform_20(%arg0: i32) -> (i32, i32) {
    %c0_i32 = arith.constant 0 : i32
    %c0_i32_0 = arith.constant 0 : i32
    %c0_i32_1 = arith.constant 0 : i32
    return %c0_i32, %c0_i32_0 : i32, i32
  }
  func.func @transform_21(%arg0: i32) -> (i32, i32) {
    %c0_i32 = arith.constant 0 : i32
    %c0_i32_0 = arith.constant 0 : i32
    %c0_i32_1 = arith.constant 0 : i32
    return %c0_i32, %c0_i32_0 : i32, i32
  }
  func.func @transform_22(%arg0: i32) -> (i32, i32) {
    %c0_i32 = arith.constant 0 : i32
    %c0_i32_0 = arith.constant 0 : i32
    %c0_i32_1 = arith.constant 0 : i32
    return %c0_i32, %c0_i32_0 : i32, i32
  }
  func.func @transform_23(%arg0: i32) -> (i32, i32) {
    %c0_i32 = arith.constant 0 : i32
    %c0_i32_0 = arith.constant 0 : i32
    %c0_i32_1 = arith.constant 0 : i32
    return %c0_i32, %c0_i32_0 : i32, i32
  }
  func.func @transform_24(%arg0: i32) -> (i32, i32) {
    %c0_i32 = arith.constant 0 : i32
    %c0_i32_0 = arith.constant 0 : i32
    %c0_i32_1 = arith.constant 0 : i32
    return %c0_i32, %c0_i32_0 : i32, i32
  }
  func.func @transform_25(%arg0: i32) -> (i32, i32) {
    %c0_i32 = arith.constant 0 : i32
    %c0_i32_0 = arith.constant 0 : i32
    %c0_i32_1 = arith.constant 0 : i32
    return %c0_i32, %c0_i32_0 : i32, i32
  }
  func.func @transform_26(%arg0: i32) -> (i32, i32) {
    %c0_i32 = arith.constant 0 : i32
    %c0_i32_0 = arith.constant 0 : i32
    %c0_i32_1 = arith.constant 0 : i32
    return %c0_i32, %c0_i32_0 : i32, i32
  }
  func.func @transform_27(%arg0: i32) -> (i32, i32) {
    %c0_i32 = arith.constant 0 : i32
    %c0_i32_0 = arith.constant 0 : i32
    %c0_i32_1 = arith.constant 0 : i32
    return %c0_i32, %c0_i32_0 : i32, i32
  }
  func.func @transform_28(%arg0: i32) -> (i32, i32) {
    %c0_i32 = arith.constant 0 : i32
    %c0_i32_0 = arith.constant 0 : i32
    %c0_i32_1 = arith.constant 0 : i32
    return %c0_i32, %c0_i32_0 : i32, i32
  }
  func.func @transform_29(%arg0: i32) -> (i32, i32) {
    %c0_i32 = arith.constant 0 : i32
    %c0_i32_0 = arith.constant 0 : i32
    %c0_i32_1 = arith.constant 0 : i32
    return %c0_i32, %c0_i32_0 : i32, i32
  }
  func.func @transform_30(%arg0: i32) -> (i32, i32, i32) {
    %c0_i32 = arith.constant 0 : i32
    %c0_i32_0 = arith.constant 0 : i32
    %c0_i32_1 = arith.constant 0 : i32
    return %arg0, %c0_i32, %c0_i32_0 : i32, i32, i32
  }
}

</mosaic_0001>

<llo_original>
// kernel: _lambda_.1
$region0: #{_lambda_.1}
  #allocation0 [shape = 'u32[]', space=smem, size = 0x4, offset = 0x4, fixed_abs, tag = 'smem constant byte address 0x4 - core index']
  #allocation1 [shape = 'u32[144,128]{1,0:T(1,128)}', space=vmem, size = 0x12000, scoped, tag = 'internal scratch']
  %s0 = inlined_call_operand.smem [shape: u32[31], index: -1, kind: input, shape index: {}]
  %s1 = sld [smem:[%s0]]
  %s2 = scalar_lea.smem %s0, 1
  %s3 = sld [smem:[%s2]]
  %s4 = scalar_lea.smem %s0, 2
  %s5 = sld [smem:[%s4]]
  %s6 = scalar_lea.smem %s0, 3
  %s7 = sld [smem:[%s6]]
  %s8 = scalar_lea.smem %s0, 4
  %s9 = sld [smem:[%s8]]
  %s10 = scalar_lea.smem %s0, 5
  %s11 = sld [smem:[%s10]]
  %s12 = scalar_lea.smem %s0, 6
  %s13 = sld [smem:[%s12]]
  %s14 = scalar_lea.smem %s0, 7
  %s15 = sld [smem:[%s14]]
  %s16 = scalar_lea.smem %s0, 8
  %s17 = sld [smem:[%s16]]
  %s18 = scalar_lea.smem %s0, 9
  %s19 = sld [smem:[%s18]]
  %s20 = scalar_lea.smem %s0, 10
  %s21 = sld [smem:[%s20]]
  %s22 = scalar_lea.smem %s0, 11
  %s23 = sld [smem:[%s22]]
  %s24 = scalar_lea.smem %s0, 12
  %s25 = sld [smem:[%s24]]
  %s26 = scalar_lea.smem %s0, 13
  %s27 = sld [smem:[%s26]]
  %s28 = scalar_lea.smem %s0, 14
  %s29 = sld [smem:[%s28]]
  %s30 = scalar_lea.smem %s0, 15
  %s31 = sld [smem:[%s30]]
  %s32 = scalar_lea.smem %s0, 16
  %s33 = sld [smem:[%s32]]
  %s34 = scalar_lea.smem %s0, 17
  %s35 = sld [smem:[%s34]]
  %s36 = scalar_lea.smem %s0, 18
  %s37 = sld [smem:[%s36]]
  %s38 = scalar_lea.smem %s0, 19
  %s39 = sld [smem:[%s38]]
  %s40 = scalar_lea.smem %s0, 20
  %s41 = sld [smem:[%s40]]
  %s42 = scalar_lea.smem %s0, 21
  %s43 = sld [smem:[%s42]]
  %s44 = scalar_lea.smem %s0, 22
  %s45 = sld [smem:[%s44]]
  %s46 = scalar_lea.smem %s0, 23
  %s47 = sld [smem:[%s46]]
  %s48 = scalar_lea.smem %s0, 24
  %s49 = sld [smem:[%s48]]
  %s50 = scalar_lea.smem %s0, 25
  %s51 = sld [smem:[%s50]]
  %s52 = scalar_lea.smem %s0, 26
  %s53 = sld [smem:[%s52]]
  %s54 = scalar_lea.smem %s0, 27
  %s55 = sld [smem:[%s54]]
  %s56 = scalar_lea.smem %s0, 28
  %s57 = sld [smem:[%s56]]
  %s58 = scalar_lea.smem %s0, 29
  %s59 = sld [smem:[%s58]]
  %s60 = scalar_lea.smem %s0, 30
  %s61 = sld [smem:[%s60]]
  %s62 = sld [smem:[#allocation0]]
  $region157: #{_lambda_.1} parent=0
    _
  %s64 = ssub.s32 1, %s62
  %s65 = scalar_select 0, %s64, %s62
  $region1: #{_lambda_.1} parent=0
    #allocation2 [shape = 'u8[512]{0}', space=vmem, size = 0x400, scoped, tag = 'input window, operand 4, single buffered']
    #allocation3 [shape = 's32[2]{0}', space=sflag, size = 0x8, scoped, tag = 'scoped memory for _lambda_.1']
    #allocation4 [shape = 's32[2]{0}', space=sflag, size = 0x8, scoped, tag = 'scoped memory for _lambda_.1']
    #allocation5 [shape = 'u8[1024]{0}', space=vmem, size = 0x400, scoped, tag = 'output window, operand 0']
    %66 = vsyncpa [#allocation3], 0
    %67 = vsyncpa [#allocation4], 0
    %s68 = scalar_lea.sflag [#allocation4], 1
    %69 = vsyncpa %s68, 0
    loop: start=0, step=1, limit=4
    $region2: #{_lambda_.1} parent=1 // loop_pre_header
      _
    $region3: #{_lambda_.1} parent=1 // loop_header
      %s71 = sphi 0, %s75
      %p72 = scmp.ge.s32.totalorder %s71, 4
      %s81 = sphi 0, %s83
      %s84 = sphi 0, %s81
      %s85 = sphi 0, %s84
      %s101 = sphi 0, %s85
      %s107 = sphi 0, %s109
      %s110 = sphi 0, %s107
      %s111 = sphi 0, %s110
      %s127 = sphi 0, %s111
      %s133 = sphi 0, %s135
      %s136 = sphi 0, %s133
      %s137 = sphi 0, %s136
      %s153 = sphi 0, %s137
      %s157 = sphi 0, %s157
      %s159 = sphi 0, %s157
      %s160 = sphi 0, %s159
      %s174 = sphi 0, %s160
      %s178 = sphi 0, %s178
      %s180 = sphi 0, %s178
      %s181 = sphi 0, %s180
      %s195 = sphi 0, %s181
      %s199 = sphi 0, %s199
      %s201 = sphi 0, %s199
      %s202 = sphi 0, %s201
      %s216 = sphi 0, %s202
      %s220 = sphi 0, %s220
      %s222 = sphi 0, %s220
      %s223 = sphi 0, %s222
      %s237 = sphi 0, %s223
      %s241 = sphi 0, %s241
      %s243 = sphi 0, %s241
      %s244 = sphi 0, %s243
      %s258 = sphi 0, %s244
      %s262 = sphi 0, %s262
      %s264 = sphi 0, %s262
      %s265 = sphi 0, %s264
      %s279 = sphi 0, %s265
      %s283 = sphi 0, %s283
      %s285 = sphi 0, %s283
      %s286 = sphi 0, %s285
      %s300 = sphi 0, %s286
      %s304 = sphi 0, %s304
      %s306 = sphi 0, %s304
      %s307 = sphi 0, %s306
      %s321 = sphi 0, %s307
      %s325 = sphi 0, %s325
      %s327 = sphi 0, %s325
      %s328 = sphi 0, %s327
      %s342 = sphi 0, %s328
      %s346 = sphi 0, %s346
      %s348 = sphi 0, %s346
      %s349 = sphi 0, %s348
      %s363 = sphi 0, %s349
      %s367 = sphi 0, %s367
      %s369 = sphi 0, %s367
      %s370 = sphi 0, %s369
      %s384 = sphi 0, %s370
      %s388 = sphi 0, %s388
      %s390 = sphi 0, %s388
      %s391 = sphi 0, %s390
      %s405 = sphi 0, %s391
      %s409 = sphi 0, %s409
      %s411 = sphi 0, %s409
      %s412 = sphi 0, %s411
      %s426 = sphi 0, %s412
      %s430 = sphi 0, %s430
      %s432 = sphi 0, %s430
      %s433 = sphi 0, %s432
      %s447 = sphi 0, %s433
      %s451 = sphi 0, %s451
      %s453 = sphi 0, %s451
      %s454 = sphi 0, %s453
      %s468 = sphi 0, %s454
      %s472 = sphi 0, %s472
      %s474 = sphi 0, %s472
      %s475 = sphi 0, %s474
      %s489 = sphi 0, %s475
      %s493 = sphi 0, %s493
      %s495 = sphi 0, %s493
      %s496 = sphi 0, %s495
      %s510 = sphi 0, %s496
      %s514 = sphi 0, %s514
      %s516 = sphi 0, %s514
      %s517 = sphi 0, %s516
      %s531 = sphi 0, %s517
      %s535 = sphi 0, %s535
      %s537 = sphi 0, %s535
      %s538 = sphi 0, %s537
      %s552 = sphi 0, %s538
      %s556 = sphi 0, %s556
      %s558 = sphi 0, %s556
      %s559 = sphi 0, %s558
      %s573 = sphi 0, %s559
      %s577 = sphi 0, %s577
      %s579 = sphi 0, %s577
      %s580 = sphi 0, %s579
      %s594 = sphi 0, %s580
      %s598 = sphi 0, %s598
      %s600 = sphi 0, %s598
      %s601 = sphi 0, %s600
      %s615 = sphi 0, %s601
      %s619 = sphi 0, %s619
      %s621 = sphi 0, %s619
      %s622 = sphi 0, %s621
      %s636 = sphi 0, %s622
      %s640 = sphi 0, %s640
      %s642 = sphi 0, %s640
      %s643 = sphi 0, %s642
      %s657 = sphi 0, %s643
      %s661 = sphi 0, %s661
      %s663 = sphi 0, %s661
      %s664 = sphi 0, %s663
      %s678 = sphi 0, %s664
      %s682 = sphi 0, %s682
      %s684 = sphi 0, %s682
      %s685 = sphi 0, %s684
      %s699 = sphi 0, %s685
      %s703 = sphi 0, %s703
      %s705 = sphi 0, %s703
      %s706 = sphi 0, %s705
      %s720 = sphi 0, %s706
      %s726 = sphi 0, %s728
      %s729 = sphi 0, %s726
      %s730 = sphi 0, %s729
      %s746 = sphi 0, %s730
    $region4: #{_lambda_.1} parent=1 // loop_header_branch
      %74 = sbr.rel (%p72) target = $region8
    $region5: #{_lambda_.1} parent=1 // loop_body
      %s76 = ssub.s32 %s71, 1
      %s77 = ssub.s32 %s71, 2
      %s78 = sadd.s32 %s71, 1
      %s79 = ssub.s32 %s71, %s78
      %p80 = scmp.eq.s32.totalorder %s79, 0
      %s82 = sadd.s32 %s81, 1
      %s83 = scalar_select %p80, %s81, %s82
      %p86 = pneg %p80
      %p87 = scmp.eq.s32.totalorder %s71, 1
      %p88 = por %p86, %p87
      %p89 = scmp.ne.s32.totalorder %s81, %s84
      %p90 = scmp.eq.s32.totalorder %s71, 0
      %p91 = por %p89, %p90
      %p92 = scmp.ne.s32.totalorder %s81, %s84
      %p93 = scmp.eq.s32.totalorder %s76, 1
      %p94 = por %p92, %p93
      %p95 = scmp.ne.s32.totalorder %s84, %s85
      %p96 = scmp.eq.s32.totalorder %s76, 0
      %p97 = por %p95, %p96
      %p98 = scmp.ne.s32.totalorder %s84, %s85
      %p99 = scmp.eq.s32.totalorder %s77, 1
      %p100 = por %p98, %p99
      %p102 = scmp.ne.s32.totalorder %s85, %s101
      %p103 = scmp.eq.s32.totalorder %s77, 0
      %p104 = por %p102, %p103
      %s105 = ssub.s32 %s71, %s78
      %p106 = scmp.eq.s32.totalorder %s105, 0
      %s108 = sadd.s32 %s107, 1
      %s109 = scalar_select %p106, %s107, %s108
      %p112 = pneg %p106
      %p113 = scmp.eq.s32.totalorder %s71, 1
      %p114 = por %p112, %p113
      %p115 = scmp.ne.s32.totalorder %s107, %s110
      %p116 = scmp.eq.s32.totalorder %s71, 0
      %p117 = por %p115, %p116
      %p118 = scmp.ne.s32.totalorder %s107, %s110
      %p119 = scmp.eq.s32.totalorder %s76, 1
      %p120 = por %p118, %p119
      %p121 = scmp.ne.s32.totalorder %s110, %s111
      %p122 = scmp.eq.s32.totalorder %s76, 0
      %p123 = por %p121, %p122
      %p124 = scmp.ne.s32.totalorder %s110, %s111
      %p125 = scmp.eq.s32.totalorder %s77, 1
      %p126 = por %p124, %p125
      %p128 = scmp.ne.s32.totalorder %s111, %s127
      %p129 = scmp.eq.s32.totalorder %s77, 0
      %p130 = por %p128, %p129
      %s131 = ssub.s32 %s71, %s78
      %p132 = scmp.eq.s32.totalorder %s131, 0
      %s134 = sadd.s32 %s133, 1
      %s135 = scalar_select %p132, %s133, %s134
      %p138 = pneg %p132
      %p139 = scmp.eq.s32.totalorder %s71, 1
      %p140 = por %p138, %p139
      %p141 = scmp.ne.s32.totalorder %s133, %s136
      %p142 = scmp.eq.s32.totalorder %s71, 0
      %p143 = por %p141, %p142
      %p144 = scmp.ne.s32.totalorder %s133, %s136
      %p145 = scmp.eq.s32.totalorder %s76, 1
      %p146 = por %p144, %p145
      %p147 = scmp.ne.s32.totalorder %s136, %s137
      %p148 = scmp.eq.s32.totalorder %s76, 0
      %p149 = por %p147, %p148
      %p150 = scmp.ne.s32.totalorder %s136, %s137
      %p151 = scmp.eq.s32.totalorder %s77, 1
      %p152 = por %p150, %p151
      %p154 = scmp.ne.s32.totalorder %s137, %s153
      %p155 = scmp.eq.s32.totalorder %s77, 0
      %p156 = por %p154, %p155
      %s158 = sadd.s32 %s157, 1
      %p161 = scmp.eq.s32.totalorder %s71, 1
      %p162 = scmp.ne.s32.totalorder %s157, %s159
      %p163 = scmp.eq.s32.totalorder %s71, 0
      %p164 = por %p162, %p163
      %p165 = scmp.ne.s32.totalorder %s157, %s159
      %p166 = scmp.eq.s32.totalorder %s76, 1
      %p167 = por %p165, %p166
      %p168 = scmp.ne.s32.totalorder %s159, %s160
      %p169 = scmp.eq.s32.totalorder %s76, 0
      %p170 = por %p168, %p169
      %p171 = scmp.ne.s32.totalorder %s159, %s160
      %p172 = scmp.eq.s32.totalorder %s77, 1
      %p173 = por %p171, %p172
      %p175 = scmp.ne.s32.totalorder %s160, %s174
      %p176 = scmp.eq.s32.totalorder %s77, 0
      %p177 = por %p175, %p176
      %s179 = sadd.s32 %s178, 1
      %p182 = scmp.eq.s32.totalorder %s71, 1
      %p183 = scmp.ne.s32.totalorder %s178, %s180
      %p184 = scmp.eq.s32.totalorder %s71, 0
      %p185 = por %p183, %p184
      %p186 = scmp.ne.s32.totalorder %s178, %s180
      %p187 = scmp.eq.s32.totalorder %s76, 1
      %p188 = por %p186, %p187
      %p189 = scmp.ne.s32.totalorder %s180, %s181
      %p190 = scmp.eq.s32.totalorder %s76, 0
      %p191 = por %p189, %p190
      %p192 = scmp.ne.s32.totalorder %s180, %s181
      %p193 = scmp.eq.s32.totalorder %s77, 1
      %p194 = por %p192, %p193
      %p196 = scmp.ne.s32.totalorder %s181, %s195
      %p197 = scmp.eq.s32.totalorder %s77, 0
      %p198 = por %p196, %p197
      %s200 = sadd.s32 %s199, 1
      %p203 = scmp.eq.s32.totalorder %s71, 1
      %p204 = scmp.ne.s32.totalorder %s199, %s201
      %p205 = scmp.eq.s32.totalorder %s71, 0
      %p206 = por %p204, %p205
      %p207 = scmp.ne.s32.totalorder %s199, %s201
      %p208 = scmp.eq.s32.totalorder %s76, 1
      %p209 = por %p207, %p208
      %p210 = scmp.ne.s32.totalorder %s201, %s202
      %p211 = scmp.eq.s32.totalorder %s76, 0
      %p212 = por %p210, %p211
      %p213 = scmp.ne.s32.totalorder %s201, %s202
      %p214 = scmp.eq.s32.totalorder %s77, 1
      %p215 = por %p213, %p214
      %p217 = scmp.ne.s32.totalorder %s202, %s216
      %p218 = scmp.eq.s32.totalorder %s77, 0
      %p219 = por %p217, %p218
      %s221 = sadd.s32 %s220, 1
      %p224 = scmp.eq.s32.totalorder %s71, 1
      %p225 = scmp.ne.s32.totalorder %s220, %s222
      %p226 = scmp.eq.s32.totalorder %s71, 0
      %p227 = por %p225, %p226
      %p228 = scmp.ne.s32.totalorder %s220, %s222
      %p229 = scmp.eq.s32.totalorder %s76, 1
      %p230 = por %p228, %p229
      %p231 = scmp.ne.s32.totalorder %s222, %s223
      %p232 = scmp.eq.s32.totalorder %s76, 0
      %p233 = por %p231, %p232
      %p234 = scmp.ne.s32.totalorder %s222, %s223
      %p235 = scmp.eq.s32.totalorder %s77, 1
      %p236 = por %p234, %p235
      %p238 = scmp.ne.s32.totalorder %s223, %s237
      %p239 = scmp.eq.s32.totalorder %s77, 0
      %p240 = por %p238, %p239
      %s242 = sadd.s32 %s241, 1
      %p245 = scmp.eq.s32.totalorder %s71, 1
      %p246 = scmp.ne.s32.totalorder %s241, %s243
      %p247 = scmp.eq.s32.totalorder %s71, 0
      %p248 = por %p246, %p247
      %p249 = scmp.ne.s32.totalorder %s241, %s243
      %p250 = scmp.eq.s32.totalorder %s76, 1
      %p251 = por %p249, %p250
      %p252 = scmp.ne.s32.totalorder %s243, %s244
      %p253 = scmp.eq.s32.totalorder %s76, 0
      %p254 = por %p252, %p253
      %p255 = scmp.ne.s32.totalorder %s243, %s244
      %p256 = scmp.eq.s32.totalorder %s77, 1
      %p257 = por %p255, %p256
      %p259 = scmp.ne.s32.totalorder %s244, %s258
      %p260 = scmp.eq.s32.totalorder %s77, 0
      %p261 = por %p259, %p260
      %s263 = sadd.s32 %s262, 1
      %p266 = scmp.eq.s32.totalorder %s71, 1
      %p267 = scmp.ne.s32.totalorder %s262, %s264
      %p268 = scmp.eq.s32.totalorder %s71, 0
      %p269 = por %p267, %p268
      %p270 = scmp.ne.s32.totalorder %s262, %s264
      %p271 = scmp.eq.s32.totalorder %s76, 1
      %p272 = por %p270, %p271
      %p273 = scmp.ne.s32.totalorder %s264, %s265
      %p274 = scmp.eq.s32.totalorder %s76, 0
      %p275 = por %p273, %p274
      %p276 = scmp.ne.s32.totalorder %s264, %s265
      %p277 = scmp.eq.s32.totalorder %s77, 1
      %p278 = por %p276, %p277
      %p280 = scmp.ne.s32.totalorder %s265, %s279
      %p281 = scmp.eq.s32.totalorder %s77, 0
      %p282 = por %p280, %p281
      %s284 = sadd.s32 %s283, 1
      %p287 = scmp.eq.s32.totalorder %s71, 1
      %p288 = scmp.ne.s32.totalorder %s283, %s285
      %p289 = scmp.eq.s32.totalorder %s71, 0
      %p290 = por %p288, %p289
      %p291 = scmp.ne.s32.totalorder %s283, %s285
      %p292 = scmp.eq.s32.totalorder %s76, 1
      %p293 = por %p291, %p292
      %p294 = scmp.ne.s32.totalorder %s285, %s286
      %p295 = scmp.eq.s32.totalorder %s76, 0
      %p296 = por %p294, %p295
      %p297 = scmp.ne.s32.totalorder %s285, %s286
      %p298 = scmp.eq.s32.totalorder %s77, 1
      %p299 = por %p297, %p298
      %p301 = scmp.ne.s32.totalorder %s286, %s300
      %p302 = scmp.eq.s32.totalorder %s77, 0
      %p303 = por %p301, %p302
      %s305 = sadd.s32 %s304, 1
      %p308 = scmp.eq.s32.totalorder %s71, 1
      %p309 = scmp.ne.s32.totalorder %s304, %s306
      %p310 = scmp.eq.s32.totalorder %s71, 0
      %p311 = por %p309, %p310
      %p312 = scmp.ne.s32.totalorder %s304, %s306
      %p313 = scmp.eq.s32.totalorder %s76, 1
      %p314 = por %p312, %p313
      %p315 = scmp.ne.s32.totalorder %s306, %s307
      %p316 = scmp.eq.s32.totalorder %s76, 0
      %p317 = por %p315, %p316
      %p318 = scmp.ne.s32.totalorder %s306, %s307
      %p319 = scmp.eq.s32.totalorder %s77, 1
      %p320 = por %p318, %p319
      %p322 = scmp.ne.s32.totalorder %s307, %s321
      %p323 = scmp.eq.s32.totalorder %s77, 0
      %p324 = por %p322, %p323
      %s326 = sadd.s32 %s325, 1
      %p329 = scmp.eq.s32.totalorder %s71, 1
      %p330 = scmp.ne.s32.totalorder %s325, %s327
      %p331 = scmp.eq.s32.totalorder %s71, 0
      %p332 = por %p330, %p331
      %p333 = scmp.ne.s32.totalorder %s325, %s327
      %p334 = scmp.eq.s32.totalorder %s76, 1
      %p335 = por %p333, %p334
      %p336 = scmp.ne.s32.totalorder %s327, %s328
      %p337 = scmp.eq.s32.totalorder %s76, 0
      %p338 = por %p336, %p337
      %p339 = scmp.ne.s32.totalorder %s327, %s328
      %p340 = scmp.eq.s32.totalorder %s77, 1
      %p341 = por %p339, %p340
      %p343 = scmp.ne.s32.totalorder %s328, %s342
      %p344 = scmp.eq.s32.totalorder %s77, 0
      %p345 = por %p343, %p344
      %s347 = sadd.s32 %s346, 1
      %p350 = scmp.eq.s32.totalorder %s71, 1
      %p351 = scmp.ne.s32.totalorder %s346, %s348
      %p352 = scmp.eq.s32.totalorder %s71, 0
      %p353 = por %p351, %p352
      %p354 = scmp.ne.s32.totalorder %s346, %s348
      %p355 = scmp.eq.s32.totalorder %s76, 1
      %p356 = por %p354, %p355
      %p357 = scmp.ne.s32.totalorder %s348, %s349
      %p358 = scmp.eq.s32.totalorder %s76, 0
      %p359 = por %p357, %p358
      %p360 = scmp.ne.s32.totalorder %s348, %s349
      %p361 = scmp.eq.s32.totalorder %s77, 1
      %p362 = por %p360, %p361
      %p364 = scmp.ne.s32.totalorder %s349, %s363
      %p365 = scmp.eq.s32.totalorder %s77, 0
      %p366 = por %p364, %p365
      %s368 = sadd.s32 %s367, 1
      %p371 = scmp.eq.s32.totalorder %s71, 1
      %p372 = scmp.ne.s32.totalorder %s367, %s369
      %p373 = scmp.eq.s32.totalorder %s71, 0
      %p374 = por %p372, %p373
      %p375 = scmp.ne.s32.totalorder %s367, %s369
      %p376 = scmp.eq.s32.totalorder %s76, 1
      %p377 = por %p375, %p376
      %p378 = scmp.ne.s32.totalorder %s369, %s370
      %p379 = scmp.eq.s32.totalorder %s76, 0
      %p380 = por %p378, %p379
      %p381 = scmp.ne.s32.totalorder %s369, %s370
      %p382 = scmp.eq.s32.totalorder %s77, 1
      %p383 = por %p381, %p382
      %p385 = scmp.ne.s32.totalorder %s370, %s384
      %p386 = scmp.eq.s32.totalorder %s77, 0
      %p387 = por %p385, %p386
      %s389 = sadd.s32 %s388, 1
      %p392 = scmp.eq.s32.totalorder %s71, 1
      %p393 = scmp.ne.s32.totalorder %s388, %s390
      %p394 = scmp.eq.s32.totalorder %s71, 0
      %p395 = por %p393, %p394
      %p396 = scmp.ne.s32.totalorder %s388, %s390
      %p397 = scmp.eq.s32.totalorder %s76, 1
      %p398 = por %p396, %p397
      %p399 = scmp.ne.s32.totalorder %s390, %s391
      %p400 = scmp.eq.s32.totalorder %s76, 0
      %p401 = por %p399, %p400
      %p402 = scmp.ne.s32.totalorder %s390, %s391
      %p403 = scmp.eq.s32.totalorder %s77, 1
      %p404 = por %p402, %p403
      %p406 = scmp.ne.s32.totalorder %s391, %s405
      %p407 = scmp.eq.s32.totalorder %s77, 0
      %p408 = por %p406, %p407
      %s410 = sadd.s32 %s409, 1
      %p413 = scmp.eq.s32.totalorder %s71, 1
      %p414 = scmp.ne.s32.totalorder %s409, %s411
      %p415 = scmp.eq.s32.totalorder %s71, 0
      %p416 = por %p414, %p415
      %p417 = scmp.ne.s32.totalorder %s409, %s411
      %p418 = scmp.eq.s32.totalorder %s76, 1
      %p419 = por %p417, %p418
      %p420 = scmp.ne.s32.totalorder %s411, %s412
      %p421 = scmp.eq.s32.totalorder %s76, 0
      %p422 = por %p420, %p421
      %p423 = scmp.ne.s32.totalorder %s411, %s412
      %p424 = scmp.eq.s32.totalorder %s77, 1
      %p425 = por %p423, %p424
      %p427 = scmp.ne.s32.totalorder %s412, %s426
      %p428 = scmp.eq.s32.totalorder %s77, 0
      %p429 = por %p427, %p428
      %s431 = sadd.s32 %s430, 1
      %p434 = scmp.eq.s32.totalorder %s71, 1
      %p435 = scmp.ne.s32.totalorder %s430, %s432
      %p436 = scmp.eq.s32.totalorder %s71, 0
      %p437 = por %p435, %p436
      %p438 = scmp.ne.s32.totalorder %s430, %s432
      %p439 = scmp.eq.s32.totalorder %s76, 1
      %p440 = por %p438, %p439
      %p441 = scmp.ne.s32.totalorder %s432, %s433
      %p442 = scmp.eq.s32.totalorder %s76, 0
      %p443 = por %p441, %p442
      %p444 = scmp.ne.s32.totalorder %s432, %s433
      %p445 = scmp.eq.s32.totalorder %s77, 1
      %p446 = por %p444, %p445
      %p448 = scmp.ne.s32.totalorder %s433, %s447
      %p449 = scmp.eq.s32.totalorder %s77, 0
      %p450 = por %p448, %p449
      %s452 = sadd.s32 %s451, 1
      %p455 = scmp.eq.s32.totalorder %s71, 1
      %p456 = scmp.ne.s32.totalorder %s451, %s453
      %p457 = scmp.eq.s32.totalorder %s71, 0
      %p458 = por %p456, %p457
      %p459 = scmp.ne.s32.totalorder %s451, %s453
      %p460 = scmp.eq.s32.totalorder %s76, 1
      %p461 = por %p459, %p460
      %p462 = scmp.ne.s32.totalorder %s453, %s454
      %p463 = scmp.eq.s32.totalorder %s76, 0
      %p464 = por %p462, %p463
      %p465 = scmp.ne.s32.totalorder %s453, %s454
      %p466 = scmp.eq.s32.totalorder %s77, 1
      %p467 = por %p465, %p466
      %p469 = scmp.ne.s32.totalorder %s454, %s468
      %p470 = scmp.eq.s32.totalorder %s77, 0
      %p471 = por %p469, %p470
      %s473 = sadd.s32 %s472, 1
      %p476 = scmp.eq.s32.totalorder %s71, 1
      %p477 = scmp.ne.s32.totalorder %s472, %s474
      %p478 = scmp.eq.s32.totalorder %s71, 0
      %p479 = por %p477, %p478
      %p480 = scmp.ne.s32.totalorder %s472, %s474
      %p481 = scmp.eq.s32.totalorder %s76, 1
      %p482 = por %p480, %p481
      %p483 = scmp.ne.s32.totalorder %s474, %s475
      %p484 = scmp.eq.s32.totalorder %s76, 0
      %p485 = por %p483, %p484
      %p486 = scmp.ne.s32.totalorder %s474, %s475
      %p487 = scmp.eq.s32.totalorder %s77, 1
      %p488 = por %p486, %p487
      %p490 = scmp.ne.s32.totalorder %s475, %s489
      %p491 = scmp.eq.s32.totalorder %s77, 0
      %p492 = por %p490, %p491
      %s494 = sadd.s32 %s493, 1
      %p497 = scmp.eq.s32.totalorder %s71, 1
      %p498 = scmp.ne.s32.totalorder %s493, %s495
      %p499 = scmp.eq.s32.totalorder %s71, 0
      %p500 = por %p498, %p499
      %p501 = scmp.ne.s32.totalorder %s493, %s495
      %p502 = scmp.eq.s32.totalorder %s76, 1
      %p503 = por %p501, %p502
      %p504 = scmp.ne.s32.totalorder %s495, %s496
      %p505 = scmp.eq.s32.totalorder %s76, 0
      %p506 = por %p504, %p505
      %p507 = scmp.ne.s32.totalorder %s495, %s496
      %p508 = scmp.eq.s32.totalorder %s77, 1
      %p509 = por %p507, %p508
      %p511 = scmp.ne.s32.totalorder %s496, %s510
      %p512 = scmp.eq.s32.totalorder %s77, 0
      %p513 = por %p511, %p512
      %s515 = sadd.s32 %s514, 1
      %p518 = scmp.eq.s32.totalorder %s71, 1
      %p519 = scmp.ne.s32.totalorder %s514, %s516
      %p520 = scmp.eq.s32.totalorder %s71, 0
      %p521 = por %p519, %p520
      %p522 = scmp.ne.s32.totalorder %s514, %s516
      %p523 = scmp.eq.s32.totalorder %s76, 1
      %p524 = por %p522, %p523
      %p525 = scmp.ne.s32.totalorder %s516, %s517
      %p526 = scmp.eq.s32.totalorder %s76, 0
      %p527 = por %p525, %p526
      %p528 = scmp.ne.s32.totalorder %s516, %s517
      %p529 = scmp.eq.s32.totalorder %s77, 1
      %p530 = por %p528, %p529
      %p532 = scmp.ne.s32.totalorder %s517, %s531
      %p533 = scmp.eq.s32.totalorder %s77, 0
      %p534 = por %p532, %p533
      %s536 = sadd.s32 %s535, 1
      %p539 = scmp.eq.s32.totalorder %s71, 1
      %p540 = scmp.ne.s32.totalorder %s535, %s537
      %p541 = scmp.eq.s32.totalorder %s71, 0
      %p542 = por %p540, %p541
      %p543 = scmp.ne.s32.totalorder %s535, %s537
      %p544 = scmp.eq.s32.totalorder %s76, 1
      %p545 = por %p543, %p544
      %p546 = scmp.ne.s32.totalorder %s537, %s538
      %p547 = scmp.eq.s32.totalorder %s76, 0
      %p548 = por %p546, %p547
      %p549 = scmp.ne.s32.totalorder %s537, %s538
      %p550 = scmp.eq.s32.totalorder %s77, 1
      %p551 = por %p549, %p550
      %p553 = scmp.ne.s32.totalorder %s538, %s552
      %p554 = scmp.eq.s32.totalorder %s77, 0
      %p555 = por %p553, %p554
      %s557 = sadd.s32 %s556, 1
      %p560 = scmp.eq.s32.totalorder %s71, 1
      %p561 = scmp.ne.s32.totalorder %s556, %s558
      %p562 = scmp.eq.s32.totalorder %s71, 0
      %p563 = por %p561, %p562
      %p564 = scmp.ne.s32.totalorder %s556, %s558
      %p565 = scmp.eq.s32.totalorder %s76, 1
      %p566 = por %p564, %p565
      %p567 = scmp.ne.s32.totalorder %s558, %s559
      %p568 = scmp.eq.s32.totalorder %s76, 0
      %p569 = por %p567, %p568
      %p570 = scmp.ne.s32.totalorder %s558, %s559
      %p571 = scmp.eq.s32.totalorder %s77, 1
      %p572 = por %p570, %p571
      %p574 = scmp.ne.s32.totalorder %s559, %s573
      %p575 = scmp.eq.s32.totalorder %s77, 0
      %p576 = por %p574, %p575
      %s578 = sadd.s32 %s577, 1
      %p581 = scmp.eq.s32.totalorder %s71, 1
      %p582 = scmp.ne.s32.totalorder %s577, %s579
      %p583 = scmp.eq.s32.totalorder %s71, 0
      %p584 = por %p582, %p583
      %p585 = scmp.ne.s32.totalorder %s577, %s579
      %p586 = scmp.eq.s32.totalorder %s76, 1
      %p587 = por %p585, %p586
      %p588 = scmp.ne.s32.totalorder %s579, %s580
      %p589 = scmp.eq.s32.totalorder %s76, 0
      %p590 = por %p588, %p589
      %p591 = scmp.ne.s32.totalorder %s579, %s580
      %p592 = scmp.eq.s32.totalorder %s77, 1
      %p593 = por %p591, %p592
      %p595 = scmp.ne.s32.totalorder %s580, %s594
      %p596 = scmp.eq.s32.totalorder %s77, 0
      %p597 = por %p595, %p596
      %s599 = sadd.s32 %s598, 1
      %p602 = scmp.eq.s32.totalorder %s71, 1
      %p603 = scmp.ne.s32.totalorder %s598, %s600
      %p604 = scmp.eq.s32.totalorder %s71, 0
      %p605 = por %p603, %p604
      %p606 = scmp.ne.s32.totalorder %s598, %s600
      %p607 = scmp.eq.s32.totalorder %s76, 1
      %p608 = por %p606, %p607
      %p609 = scmp.ne.s32.totalorder %s600, %s601
      %p610 = scmp.eq.s32.totalorder %s76, 0
      %p611 = por %p609, %p610
      %p612 = scmp.ne.s32.totalorder %s600, %s601
      %p613 = scmp.eq.s32.totalorder %s77, 1
      %p614 = por %p612, %p613
      %p616 = scmp.ne.s32.totalorder %s601, %s615
      %p617 = scmp.eq.s32.totalorder %s77, 0
      %p618 = por %p616, %p617
      %s620 = sadd.s32 %s619, 1
      %p623 = scmp.eq.s32.totalorder %s71, 1
      %p624 = scmp.ne.s32.totalorder %s619, %s621
      %p625 = scmp.eq.s32.totalorder %s71, 0
      %p626 = por %p624, %p625
      %p627 = scmp.ne.s32.totalorder %s619, %s621
      %p628 = scmp.eq.s32.totalorder %s76, 1
      %p629 = por %p627, %p628
      %p630 = scmp.ne.s32.totalorder %s621, %s622
      %p631 = scmp.eq.s32.totalorder %s76, 0
      %p632 = por %p630, %p631
      %p633 = scmp.ne.s32.totalorder %s621, %s622
      %p634 = scmp.eq.s32.totalorder %s77, 1
      %p635 = por %p633, %p634
      %p637 = scmp.ne.s32.totalorder %s622, %s636
      %p638 = scmp.eq.s32.totalorder %s77, 0
      %p639 = por %p637, %p638
      %s641 = sadd.s32 %s640, 1
      %p644 = scmp.eq.s32.totalorder %s71, 1
      %p645 = scmp.ne.s32.totalorder %s640, %s642
      %p646 = scmp.eq.s32.totalorder %s71, 0
      %p647 = por %p645, %p646
      %p648 = scmp.ne.s32.totalorder %s640, %s642
      %p649 = scmp.eq.s32.totalorder %s76, 1
      %p650 = por %p648, %p649
      %p651 = scmp.ne.s32.totalorder %s642, %s643
      %p652 = scmp.eq.s32.totalorder %s76, 0
      %p653 = por %p651, %p652
      %p654 = scmp.ne.s32.totalorder %s642, %s643
      %p655 = scmp.eq.s32.totalorder %s77, 1
      %p656 = por %p654, %p655
      %p658 = scmp.ne.s32.totalorder %s643, %s657
      %p659 = scmp.eq.s32.totalorder %s77, 0
      %p660 = por %p658, %p659
      %s662 = sadd.s32 %s661, 1
      %p665 = scmp.eq.s32.totalorder %s71, 1
      %p666 = scmp.ne.s32.totalorder %s661, %s663
      %p667 = scmp.eq.s32.totalorder %s71, 0
      %p668 = por %p666, %p667
      %p669 = scmp.ne.s32.totalorder %s661, %s663
      %p670 = scmp.eq.s32.totalorder %s76, 1
      %p671 = por %p669, %p670
      %p672 = scmp.ne.s32.totalorder %s663, %s664
      %p673 = scmp.eq.s32.totalorder %s76, 0
      %p674 = por %p672, %p673
      %p675 = scmp.ne.s32.totalorder %s663, %s664
      %p676 = scmp.eq.s32.totalorder %s77, 1
      %p677 = por %p675, %p676
      %p679 = scmp.ne.s32.totalorder %s664, %s678
      %p680 = scmp.eq.s32.totalorder %s77, 0
      %p681 = por %p679, %p680
      %s683 = sadd.s32 %s682, 1
      %p686 = scmp.eq.s32.totalorder %s71, 1
      %p687 = scmp.ne.s32.totalorder %s682, %s684
      %p688 = scmp.eq.s32.totalorder %s71, 0
      %p689 = por %p687, %p688
      %p690 = scmp.ne.s32.totalorder %s682, %s684
      %p691 = scmp.eq.s32.totalorder %s76, 1
      %p692 = por %p690, %p691
      %p693 = scmp.ne.s32.totalorder %s684, %s685
      %p694 = scmp.eq.s32.totalorder %s76, 0
      %p695 = por %p693, %p694
      %p696 = scmp.ne.s32.totalorder %s684, %s685
      %p697 = scmp.eq.s32.totalorder %s77, 1
      %p698 = por %p696, %p697
      %p700 = scmp.ne.s32.totalorder %s685, %s699
      %p701 = scmp.eq.s32.totalorder %s77, 0
      %p702 = por %p700, %p701
      %s704 = sadd.s32 %s703, 1
      %p707 = scmp.eq.s32.totalorder %s71, 1
      %p708 = scmp.ne.s32.totalorder %s703, %s705
      %p709 = scmp.eq.s32.totalorder %s71, 0
      %p710 = por %p708, %p709
      %p711 = scmp.ne.s32.totalorder %s703, %s705
      %p712 = scmp.eq.s32.totalorder %s76, 1
      %p713 = por %p711, %p712
      %p714 = scmp.ne.s32.totalorder %s705, %s706
      %p715 = scmp.eq.s32.totalorder %s76, 0
      %p716 = por %p714, %p715
      %p717 = scmp.ne.s32.totalorder %s705, %s706
      %p718 = scmp.eq.s32.totalorder %s77, 1
      %p719 = por %p717, %p718
      %p721 = scmp.ne.s32.totalorder %s706, %s720
      %p722 = scmp.eq.s32.totalorder %s77, 0
      %p723 = por %p721, %p722
      %s724 = ssub.s32 %s71, %s78
      %p725 = scmp.eq.s32.totalorder %s724, 0
      %s727 = sadd.s32 %s726, 1
      %s728 = scalar_select %p725, %s726, %s727
      %p731 = pneg %p725
      %p732 = scmp.eq.s32.totalorder %s71, 1
      %p733 = por %p731, %p732
      %p734 = scmp.ne.s32.totalorder %s726, %s729
      %p735 = scmp.eq.s32.totalorder %s71, 0
      %p736 = por %p734, %p735
      %p737 = scmp.ne.s32.totalorder %s726, %s729
      %p738 = scmp.eq.s32.totalorder %s76, 1
      %p739 = por %p737, %p738
      %p740 = scmp.ne.s32.totalorder %s729, %s730
      %p741 = scmp.eq.s32.totalorder %s76, 0
      %p742 = por %p740, %p741
      %p743 = scmp.ne.s32.totalorder %s729, %s730
      %p744 = scmp.eq.s32.totalorder %s77, 1
      %p745 = por %p743, %p744
      %p747 = scmp.ne.s32.totalorder %s730, %s746
      %p748 = scmp.eq.s32.totalorder %s77, 0
      %p749 = por %p747, %p748
      %p750 = scmp.le.s32.totalorder 1, %s71
      %p751 = scmp.lt.s32.totalorder %s71, 3
      %p752 = pnand %p750, %p751
      %p753 = pneg %p752
      // Predicated region
      $region9: #{_lambda_.1} parent=5 // pred_check
        _
      $region10: #{_lambda_.1} parent=5 // pred_check_branch
        %755 = sbr.rel (%p752) target = $region12
      $region11: #{_lambda_.1} parent=5 // pred_region
        %s756 = ssub.s32 %s71, 1
        // Predicated region
        $region13: #{_lambda_.1} parent=11 // pred_check
          %p757 = pneg %p170
        $region14: #{_lambda_.1} parent=11 // pred_check_branch
          %759 = sbr.rel (%p757) target = $region16
        $region15: #{_lambda_.1} parent=11 // pred_region
          _
        $region16: #{_lambda_.1} parent=11 // pred_fallthru
          _
        // Predicated region
        $region17: #{_lambda_.1} parent=11 // pred_check
          %p760 = pneg %p191
        $region18: #{_lambda_.1} parent=11 // pred_check_branch
          %762 = sbr.rel (%p760) target = $region20
        $region19: #{_lambda_.1} parent=11 // pred_region
          %s764 = ssub.s32 16, 16
          %765 = vsyncadd [#allocation3], %s764
          %s767 = sshll.u32 [#allocation2], 4
          %s768 = int_to_ptr.vmem [resolvable:$true] %s767
          %770 = dma.hbm_to_vmem [thread:$0]  %s9, 16, %s768, [#allocation3]
        $region20: #{_lambda_.1} parent=11 // pred_fallthru
          _
        // Predicated region
        $region21: #{_lambda_.1} parent=11 // pred_check
          %p771 = pneg %p212
        $region22: #{_lambda_.1} parent=11 // pred_check_branch
          %773 = sbr.rel (%p771) target = $region24
        $region23: #{_lambda_.1} parent=11 // pred_region
          _
        $region24: #{_lambda_.1} parent=11 // pred_fallthru
          _
        // Predicated region
        $region25: #{_lambda_.1} parent=11 // pred_check
          %p774 = pneg %p233
        $region26: #{_lambda_.1} parent=11 // pred_check_branch
          %776 = sbr.rel (%p774) target = $region28
        $region27: #{_lambda_.1} parent=11 // pred_region
          _
        $region28: #{_lambda_.1} parent=11 // pred_fallthru
          _
        // Predicated region
        $region29: #{_lambda_.1} parent=11 // pred_check
          %p777 = pneg %p254
        $region30: #{_lambda_.1} parent=11 // pred_check_branch
          %779 = sbr.rel (%p777) target = $region32
        $region31: #{_lambda_.1} parent=11 // pred_region
          _
        $region32: #{_lambda_.1} parent=11 // pred_fallthru
          _
        // Predicated region
        $region33: #{_lambda_.1} parent=11 // pred_check
          %p780 = pneg %p275
        $region34: #{_lambda_.1} parent=11 // pred_check_branch
          %782 = sbr.rel (%p780) target = $region36
        $region35: #{_lambda_.1} parent=11 // pred_region
          _
        $region36: #{_lambda_.1} parent=11 // pred_fallthru
          _
        // Predicated region
        $region37: #{_lambda_.1} parent=11 // pred_check
          %p783 = pneg %p296
        $region38: #{_lambda_.1} parent=11 // pred_check_branch
          %785 = sbr.rel (%p783) target = $region40
        $region39: #{_lambda_.1} parent=11 // pred_region
          _
        $region40: #{_lambda_.1} parent=11 // pred_fallthru
          _
        // Predicated region
        $region41: #{_lambda_.1} parent=11 // pred_check
          %p786 = pneg %p317
        $region42: #{_lambda_.1} parent=11 // pred_check_branch
          %788 = sbr.rel (%p786) target = $region44
        $region43: #{_lambda_.1} parent=11 // pred_region
          _
        $region44: #{_lambda_.1} parent=11 // pred_fallthru
          _
        // Predicated region
        $region45: #{_lambda_.1} parent=11 // pred_check
          %p789 = pneg %p338
        $region46: #{_lambda_.1} parent=11 // pred_check_branch
          %791 = sbr.rel (%p789) target = $region48
        $region47: #{_lambda_.1} parent=11 // pred_region
          _
        $region48: #{_lambda_.1} parent=11 // pred_fallthru
          _
        // Predicated region
        $region49: #{_lambda_.1} parent=11 // pred_check
          %p792 = pneg %p359
        $region50: #{_lambda_.1} parent=11 // pred_check_branch
          %794 = sbr.rel (%p792) target = $region52
        $region51: #{_lambda_.1} parent=11 // pred_region
          _
        $region52: #{_lambda_.1} parent=11 // pred_fallthru
          _
        // Predicated region
        $region53: #{_lambda_.1} parent=11 // pred_check
          %p795 = pneg %p380
        $region54: #{_lambda_.1} parent=11 // pred_check_branch
          %797 = sbr.rel (%p795) target = $region56
        $region55: #{_lambda_.1} parent=11 // pred_region
          _
        $region56: #{_lambda_.1} parent=11 // pred_fallthru
          _
        // Predicated region
        $region57: #{_lambda_.1} parent=11 // pred_check
          %p798 = pneg %p401
        $region58: #{_lambda_.1} parent=11 // pred_check_branch
          %800 = sbr.rel (%p798) target = $region60
        $region59: #{_lambda_.1} parent=11 // pred_region
          _
        $region60: #{_lambda_.1} parent=11 // pred_fallthru
          _
        // Predicated region
        $region61: #{_lambda_.1} parent=11 // pred_check
          %p801 = pneg %p422
        $region62: #{_lambda_.1} parent=11 // pred_check_branch
          %803 = sbr.rel (%p801) target = $region64
        $region63: #{_lambda_.1} parent=11 // pred_region
          _
        $region64: #{_lambda_.1} parent=11 // pred_fallthru
          _
        // Predicated region
        $region65: #{_lambda_.1} parent=11 // pred_check
          %p804 = pneg %p443
        $region66: #{_lambda_.1} parent=11 // pred_check_branch
          %806 = sbr.rel (%p804) target = $region68
        $region67: #{_lambda_.1} parent=11 // pred_region
          _
        $region68: #{_lambda_.1} parent=11 // pred_fallthru
          _
        // Predicated region
        $region69: #{_lambda_.1} parent=11 // pred_check
          %p807 = pneg %p464
        $region70: #{_lambda_.1} parent=11 // pred_check_branch
          %809 = sbr.rel (%p807) target = $region72
        $region71: #{_lambda_.1} parent=11 // pred_region
          _
        $region72: #{_lambda_.1} parent=11 // pred_fallthru
          _
        // Predicated region
        $region73: #{_lambda_.1} parent=11 // pred_check
          %p810 = pneg %p485
        $region74: #{_lambda_.1} parent=11 // pred_check_branch
          %812 = sbr.rel (%p810) target = $region76
        $region75: #{_lambda_.1} parent=11 // pred_region
          _
        $region76: #{_lambda_.1} parent=11 // pred_fallthru
          _
        // Predicated region
        $region77: #{_lambda_.1} parent=11 // pred_check
          %p813 = pneg %p506
        $region78: #{_lambda_.1} parent=11 // pred_check_branch
          %815 = sbr.rel (%p813) target = $region80
        $region79: #{_lambda_.1} parent=11 // pred_region
          _
        $region80: #{_lambda_.1} parent=11 // pred_fallthru
          _
        // Predicated region
        $region81: #{_lambda_.1} parent=11 // pred_check
          %p816 = pneg %p527
        $region82: #{_lambda_.1} parent=11 // pred_check_branch
          %818 = sbr.rel (%p816) target = $region84
        $region83: #{_lambda_.1} parent=11 // pred_region
          _
        $region84: #{_lambda_.1} parent=11 // pred_fallthru
          _
        // Predicated region
        $region85: #{_lambda_.1} parent=11 // pred_check
          %p819 = pneg %p548
        $region86: #{_lambda_.1} parent=11 // pred_check_branch
          %821 = sbr.rel (%p819) target = $region88
        $region87: #{_lambda_.1} parent=11 // pred_region
          _
        $region88: #{_lambda_.1} parent=11 // pred_fallthru
          _
        // Predicated region
        $region89: #{_lambda_.1} parent=11 // pred_check
          %p822 = pneg %p569
        $region90: #{_lambda_.1} parent=11 // pred_check_branch
          %824 = sbr.rel (%p822) target = $region92
        $region91: #{_lambda_.1} parent=11 // pred_region
          _
        $region92: #{_lambda_.1} parent=11 // pred_fallthru
          _
        // Predicated region
        $region93: #{_lambda_.1} parent=11 // pred_check
          %p825 = pneg %p590
        $region94: #{_lambda_.1} parent=11 // pred_check_branch
          %827 = sbr.rel (%p825) target = $region96
        $region95: #{_lambda_.1} parent=11 // pred_region
          _
        $region96: #{_lambda_.1} parent=11 // pred_fallthru
          _
        // Predicated region
        $region97: #{_lambda_.1} parent=11 // pred_check
          %p828 = pneg %p611
        $region98: #{_lambda_.1} parent=11 // pred_check_branch
          %830 = sbr.rel (%p828) target = $region100
        $region99: #{_lambda_.1} parent=11 // pred_region
          _
        $region100: #{_lambda_.1} parent=11 // pred_fallthru
          _
        // Predicated region
        $region101: #{_lambda_.1} parent=11 // pred_check
          %p831 = pneg %p632
        $region102: #{_lambda_.1} parent=11 // pred_check_branch
          %833 = sbr.rel (%p831) target = $region104
        $region103: #{_lambda_.1} parent=11 // pred_region
          _
        $region104: #{_lambda_.1} parent=11 // pred_fallthru
          _
        // Predicated region
        $region105: #{_lambda_.1} parent=11 // pred_check
          %p834 = pneg %p653
        $region106: #{_lambda_.1} parent=11 // pred_check_branch
          %836 = sbr.rel (%p834) target = $region108
        $region107: #{_lambda_.1} parent=11 // pred_region
          _
        $region108: #{_lambda_.1} parent=11 // pred_fallthru
          _
        // Predicated region
        $region109: #{_lambda_.1} parent=11 // pred_check
          %p837 = pneg %p674
        $region110: #{_lambda_.1} parent=11 // pred_check_branch
          %839 = sbr.rel (%p837) target = $region112
        $region111: #{_lambda_.1} parent=11 // pred_region
          _
        $region112: #{_lambda_.1} parent=11 // pred_fallthru
          _
        // Predicated region
        $region113: #{_lambda_.1} parent=11 // pred_check
          %p840 = pneg %p695
        $region114: #{_lambda_.1} parent=11 // pred_check_branch
          %842 = sbr.rel (%p840) target = $region116
        $region115: #{_lambda_.1} parent=11 // pred_region
          _
        $region116: #{_lambda_.1} parent=11 // pred_fallthru
          _
        // Predicated region
        $region117: #{_lambda_.1} parent=11 // pred_check
          %p843 = pneg %p716
        $region118: #{_lambda_.1} parent=11 // pred_check_branch
          %845 = sbr.rel (%p843) target = $region120
        $region119: #{_lambda_.1} parent=11 // pred_region
          _
        $region120: #{_lambda_.1} parent=11 // pred_fallthru
          _
      $region12: #{_lambda_.1} parent=5 // pred_fallthru
        _
      %p846 = scmp.lt.s32.totalorder %s71, 2
      // Predicated region
      $region121: #{_lambda_.1} parent=5 // pred_check
        %p847 = pneg %p846
      $region122: #{_lambda_.1} parent=5 // pred_check_branch
        %849 = sbr.rel (%p847) target = $region124
      $region123: #{_lambda_.1} parent=5 // pred_region
        // Predicated region
        $region125: #{_lambda_.1} parent=123 // pred_check
          %p850 = pneg %p91
        $region126: #{_lambda_.1} parent=123 // pred_check_branch
          %852 = sbr.rel (%p850) target = $region128
        $region127: #{_lambda_.1} parent=123 // pred_region
          %p853 = scmp.lt.s32.totalorder %s71, 1
          %s854 = scalar_select %p853, %s71, 1
          %s855 = smul.addr %s854, 8
          %s856 = scalar_lea.vmem %s1, %s855
        $region128: #{_lambda_.1} parent=123 // pred_fallthru
          _
        // Predicated region
        $region129: #{_lambda_.1} parent=123 // pred_check
          %p857 = pneg %p117
        $region130: #{_lambda_.1} parent=123 // pred_check_branch
          %859 = sbr.rel (%p857) target = $region132
        $region131: #{_lambda_.1} parent=123 // pred_region
          %p860 = scmp.lt.s32.totalorder %s71, 1
          %s861 = scalar_select %p860, %s71, 1
          %s862 = smul.addr %s861, 8
          %s863 = scalar_lea.vmem %s3, %s862
        $region132: #{_lambda_.1} parent=123 // pred_fallthru
          _
        // Predicated region
        $region133: #{_lambda_.1} parent=123 // pred_check
          %p864 = pneg %p143
        $region134: #{_lambda_.1} parent=123 // pred_check_branch
          %866 = sbr.rel (%p864) target = $region136
        $region135: #{_lambda_.1} parent=123 // pred_region
          %p867 = scmp.lt.s32.totalorder %s71, 1
          %s868 = scalar_select %p867, %s71, 1
          %s869 = smul.addr %s868, 8
          %s870 = scalar_lea.vmem %s5, %s869
        $region136: #{_lambda_.1} parent=123 // pred_fallthru
          _
      $region124: #{_lambda_.1} parent=5 // pred_fallthru
        _
      %p871 = scmp.le.s32.totalorder 1, %s71
      %p872 = scmp.lt.s32.totalorder %s71, 3
      %p873 = pnand %p871, %p872
      %p874 = pneg %p873
      // Predicated region
      $region137: #{_lambda_.1} parent=5 // pred_check
        _
      $region138: #{_lambda_.1} parent=5 // pred_check_branch
        %876 = sbr.rel (%p873) target = $region140
      $region139: #{_lambda_.1} parent=5 // pred_region
        %s877 = ssub.s32 %s71, 1
        // Predicated region
        $region141: #{_lambda_.1} parent=139 // pred_check
          %p878 = pneg %p191
        $region142: #{_lambda_.1} parent=139 // pred_check_branch
          %880 = sbr.rel (%p878) target = $region144
        $region143: #{_lambda_.1} parent=139 // pred_region
          %881 = dma.done [#allocation3], 16
        $region144: #{_lambda_.1} parent=139 // pred_fallthru
          _
        %p882 = scmp.lt.s32.totalorder %s76, 1
        %s883 = scalar_select %p882, %s76, 1
        %s884 = smul.addr %s883, 8
        %s885 = scalar_lea.vmem %s1, %s884
        %p886 = pneg %p97
        %p887 = pneg %p94
        %p888 = scmp.lt.s32.totalorder %s76, 1
        %s889 = scalar_select %p888, %s76, 1
        %s890 = smul.addr %s889, 8
        %s891 = scalar_lea.vmem %s3, %s890
        %p892 = pneg %p123
        %p893 = pneg %p120
        %p894 = scmp.lt.s32.totalorder %s76, 1
        %s895 = scalar_select %p894, %s76, 1
        %s896 = smul.addr %s895, 8
        %s897 = scalar_lea.vmem %s5, %s896
        %p898 = pneg %p149
        %p899 = pneg %p146
        %p900 = pneg %p170
        %p901 = pneg %p167
        %p902 = pneg %p191
        %p903 = pneg %p188
        %p904 = pneg %p212
        %p905 = pneg %p209
        %p906 = pneg %p233
        %p907 = pneg %p230
        %p908 = pneg %p254
        %p909 = pneg %p251
        %p910 = pneg %p275
        %p911 = pneg %p272
        %p912 = pneg %p296
        %p913 = pneg %p293
        %p914 = pneg %p317
        %p915 = pneg %p314
        %p916 = pneg %p338
        %p917 = pneg %p335
        %p918 = pneg %p359
        %p919 = pneg %p356
        %p920 = pneg %p380
        %p921 = pneg %p377
        %p922 = pneg %p401
        %p923 = pneg %p398
        %p924 = pneg %p422
        %p925 = pneg %p419
        %p926 = pneg %p443
        %p927 = pneg %p440
        %p928 = pneg %p464
        %p929 = pneg %p461
        %p930 = pneg %p485
        %p931 = pneg %p482
        %p932 = pneg %p506
        %p933 = pneg %p503
        %p934 = pneg %p527
        %p935 = pneg %p524
        %p936 = pneg %p548
        %p937 = pneg %p545
        %p938 = pneg %p569
        %p939 = pneg %p566
        %p940 = pneg %p590
        %p941 = pneg %p587
        %p942 = pneg %p611
        %p943 = pneg %p608
        %p944 = pneg %p632
        %p945 = pneg %p629
        %p946 = pneg %p653
        %p947 = pneg %p650
        %p948 = pneg %p674
        %p949 = pneg %p671
        %p950 = pneg %p695
        %p951 = pneg %p692
        %p952 = pneg %p716
        %p953 = pneg %p713
        %p954 = pneg %p742
        %p955 = pneg %p739
        %s956 = sand.u32 %s729, 1
        %s957 = scalar_lea.sflag [#allocation4], %s956
        %s958 = sand.u32 %s729, 1
        %s959 = scalar_lea.vmem [#allocation5], %s958
        %p960 = scmp.lt.s32.totalorder %s76, 1
        %s961 = scalar_select %p960, %s76, 1
        %s962 = smul.addr %s961, 8
        %s963 = scalar_lea.vmem %s1, %s962
        %p964 = scmp.lt.s32.totalorder %s76, 1
        %s965 = scalar_select %p964, %s76, 1
        %s966 = smul.addr %s965, 8
        %s967 = scalar_lea.vmem %s3, %s966
        %p968 = scmp.lt.s32.totalorder %s76, 1
        %s969 = scalar_select %p968, %s76, 1
        %s970 = smul.addr %s969, 8
        %s971 = scalar_lea.vmem %s5, %s970
        %v972 = vld [vmem:[%s963] sm:$0xff]
        %v973 = vld [vmem:[%s967] sm:$0xff]
        %v974 = vld [vmem:[%s43] sm:$0xff]
        %v975 = vld [vmem:[%s43 + $0x8] sm:$0xff]
        %v977 = vrot.slane %v972, 7
        %vm979 = vcmask 1040384
        %v980 = vsel %vm979, %v977, %v977
        %v981 = vrot.slane %v972, 1
        %vm983 = vcmask 1046528
        %v984 = vsel %vm983, %v981, %v981
        %985 = vrot.lane.b32.xlu0 %v972, 4
        %v986 = vpop.permute.xlu0 %985
        %989 = vrot.lane.b32.xlu0 %v984, 8
        %v990 = vpop.permute.xlu0 %989
        %vm992 = vcmask 31744
        %v993 = vsel %vm992, %v980, %v986
        %vm994 = vcmask 64512
        %v995 = vsel %vm994, %v993, %v990
        %997 = vrot.lane.b32.xlu0 %v973, 12
        %v998 = vpop.permute.xlu0 %997
        %vm1000 = vcmask 97280
        %v1001 = vsel %vm1000, %v995, %v998
        %vm1002 = vcmask 130048
        %v1004 = vsel %vm1002, %v1001, 0
        %1006 = vmatprep.subr.mxu0 0.0
        %1007 = vmatpush1.msra.mxu0 %v974
        %1008 = vmatprep.subr.mxu0 0.0
        %1009 = vmatpush1.msra.mxu0 %v975
        %1010 = vmatprep.subr.mxu0 0.0
        %1011 = vmatpush1.msra.mxu0 0.0
        %1012 = vmatprep.subr.mxu0 0.0
        %1013 = vmatpush1.msra.mxu0 0.0
        %1014 = vmatprep.subr.mxu0 0.0
        %1015 = vmatpush1.msra.mxu0 0.0
        %1016 = vmatprep.subr.mxu0 0.0
        %1017 = vmatpush1.msra.mxu0 0.0
        %1018 = vmatprep.subr.mxu0 0.0
        %1019 = vmatpush1.msra.mxu0 0.0
        %1020 = vmatprep.subr.mxu0 0.0
        %1021 = vmatpush1.msra.mxu0 0.0
        %1022 = vmatprep.subr.mxu0 0.0
        %1023 = vmatpush1.msra.mxu0 0.0
        %1024 = vmatprep.subr.mxu0 0.0
        %1025 = vmatpush1.msra.mxu0 0.0
        %1026 = vmatprep.subr.mxu0 0.0
        %1027 = vmatpush1.msra.mxu0 0.0
        %1028 = vmatprep.subr.mxu0 0.0
        %1029 = vmatpush1.msra.mxu0 0.0
        %1030 = vmatprep.subr.mxu0 0.0
        %1031 = vmatpush1.msra.mxu0 0.0
        %1032 = vmatprep.subr.mxu0 0.0
        %1033 = vmatpush1.msra.mxu0 0.0
        %1034 = vmatprep.subr.mxu0 0.0
        %1035 = vmatpush1.msra.mxu0 0.0
        %1036 = vmatprep.subr.mxu0 0.0
        %1037 = vmatpush1.msra.mxu0 0.0
        %1038 = vmatprep.subr.mxu0 0.0
        %1039 = vmatpush1.msra.mxu0 0.0
        %1040 = vmatprep.subr.mxu0 0.0
        %1041 = vmatpush1.msra.mxu0 0.0
        %1042 = vmatprep.subr.mxu0 0.0
        %1043 = vmatpush1.msra.mxu0 0.0
        %1044 = vmatprep.subr.mxu0 0.0
        %1045 = vmatpush1.msra.mxu0 0.0
        %1046 = vmatprep.subr.mxu0 0.0
        %1047 = vmatpush1.msra.mxu0 0.0
        %1048 = vmatprep.subr.mxu0 0.0
        %1049 = vmatpush1.msra.mxu0 0.0
        %1050 = vmatprep.subr.mxu0 0.0
        %1051 = vmatpush1.msra.mxu0 0.0
        %1052 = vmatprep.subr.mxu0 0.0
        %1053 = vmatpush1.msra.mxu0 0.0
        %1054 = vmatprep.subr.mxu0 0.0
        %1055 = vmatpush1.msra.mxu0 0.0
        %1056 = vmatprep.subr.mxu0 0.0
        %1057 = vmatpush1.msra.mxu0 0.0
        %1058 = vmatprep.subr.mxu0 0.0
        %1059 = vmatpush1.msra.mxu0 0.0
        %1060 = vmatprep.subr.mxu0 0.0
        %1061 = vmatpush1.msra.mxu0 0.0
        %1062 = vmatprep.subr.mxu0 0.0
        %1063 = vmatpush1.msra.mxu0 0.0
        %1064 = vmatprep.subr.mxu0 0.0
        %1065 = vmatpush1.msra.mxu0 0.0
        %1066 = vmatprep.subr.mxu0 0.0
        %1067 = vmatpush1.msra.mxu0 0.0
        %1068 = vmatprep.subr.mxu0 0.0
        %1069 = vmatpush1.msra.mxu0 0.0
        %1070 = vmatprep.mubr.f32.mxu0 0.0
        %1071 = vmatmul.mubr.f32.gmra.mrb[0].mxu0 %v1004
        %v1072 = vpop.f32.mrb[0].mxu0
        %v1073 = vadd.f32 0.0, %v1072
        %v1074 = vpop.f32.mrb[0].mxu0
        %1075 = vdwg.mxu0
        %v1076 = vld [vmem:[%s55] sm:$0xff]
        %v1077 = vld [vmem:[%s55 + $0x8] sm:$0xff]
        %v1078 = vld [vmem:[%s55 + $0x10] sm:$0xff]
        %v1079 = vld [vmem:[%s55 + $0x18] sm:$0xff]
        %v1080 = vld [vmem:[%s47] sm:$0x1]
        %v1082 = vlaneseq
        %v1083 = vshrl.u32 %v1082, 7
        %v1084 = vsub.s32 0, %v1083
        %v1085 = vrot.slane %v1080, %v1084
        %vm1087 = vcmask 261120
        %v1089 = vsel %vm1087, %v1073, 0
        %1091 = vmatprep.subr.mxu0 0.0
        %1092 = vmatpush1.msra.mxu0 %v1076
        %1093 = vmatprep.subr.mxu0 0.0
        %1094 = vmatpush1.msra.mxu0 %v1077
        %1095 = vmatprep.subr.mxu0 0.0
        %1096 = vmatpush1.msra.mxu0 %v1078
        %1097 = vmatprep.subr.mxu0 0.0
        %1098 = vmatpush1.msra.mxu0 %v1079
        %1099 = vmatprep.subr.mxu0 0.0
        %1100 = vmatpush1.msra.mxu0 0.0
        %1101 = vmatprep.subr.mxu0 0.0
        %1102 = vmatpush1.msra.mxu0 0.0
        %1103 = vmatprep.subr.mxu0 0.0
        %1104 = vmatpush1.msra.mxu0 0.0
        %1105 = vmatprep.subr.mxu0 0.0
        %1106 = vmatpush1.msra.mxu0 0.0
        %1107 = vmatprep.subr.mxu0 0.0
        %1108 = vmatpush1.msra.mxu0 0.0
        %1109 = vmatprep.subr.mxu0 0.0
        %1110 = vmatpush1.msra.mxu0 0.0
        %1111 = vmatprep.subr.mxu0 0.0
        %1112 = vmatpush1.msra.mxu0 0.0
        %1113 = vmatprep.subr.mxu0 0.0
        %1114 = vmatpush1.msra.mxu0 0.0
        %1115 = vmatprep.subr.mxu0 0.0
        %1116 = vmatpush1.msra.mxu0 0.0
        %1117 = vmatprep.subr.mxu0 0.0
        %1118 = vmatpush1.msra.mxu0 0.0
        %1119 = vmatprep.subr.mxu0 0.0
        %1120 = vmatpush1.msra.mxu0 0.0
        %1121 = vmatprep.subr.mxu0 0.0
        %1122 = vmatpush1.msra.mxu0 0.0
        %1123 = vmatprep.subr.mxu0 0.0
        %1124 = vmatpush1.msra.mxu0 0.0
        %1125 = vmatprep.subr.mxu0 0.0
        %1126 = vmatpush1.msra.mxu0 0.0
        %1127 = vmatprep.subr.mxu0 0.0
        %1128 = vmatpush1.msra.mxu0 0.0
        %1129 = vmatprep.subr.mxu0 0.0
        %1130 = vmatpush1.msra.mxu0 0.0
        %1131 = vmatprep.subr.mxu0 0.0
        %1132 = vmatpush1.msra.mxu0 0.0
        %1133 = vmatprep.subr.mxu0 0.0
        %1134 = vmatpush1.msra.mxu0 0.0
        %1135 = vmatprep.subr.mxu0 0.0
        %1136 = vmatpush1.msra.mxu0 0.0
        %1137 = vmatprep.subr.mxu0 0.0
        %1138 = vmatpush1.msra.mxu0 0.0
        %1139 = vmatprep.subr.mxu0 0.0
        %1140 = vmatpush1.msra.mxu0 0.0
        %1141 = vmatprep.subr.mxu0 0.0
        %1142 = vmatpush1.msra.mxu0 0.0
        %1143 = vmatprep.subr.mxu0 0.0
        %1144 = vmatpush1.msra.mxu0 0.0
        %1145 = vmatprep.subr.mxu0 0.0
        %1146 = vmatpush1.msra.mxu0 0.0
        %1147 = vmatprep.subr.mxu0 0.0
        %1148 = vmatpush1.msra.mxu0 0.0
        %1149 = vmatprep.subr.mxu0 0.0
        %1150 = vmatpush1.msra.mxu0 0.0
        %1151 = vmatprep.subr.mxu0 0.0
        %1152 = vmatpush1.msra.mxu0 0.0
        %1153 = vmatprep.subr.mxu0 0.0
        %1154 = vmatpush1.msra.mxu0 0.0
        %1155 = vmatprep.mubr.f32.mxu0 0.0
        %1156 = vmatmul.mubr.f32.gmra.mrb[0].mxu0 %v1089
        %v1157 = vpop.f32.mrb[0].mxu0
        %v1158 = vadd.f32 %v1085, %v1157
        %v1159 = vpop.f32.mrb[0].mxu0
        %1160 = vdwg.mxu0
        %1162 = vrot.lane.b32.xlu0 %v1158, 96
        %v1163 = vpop.permute.xlu0 %1162
        %v1164 = vsel %vm1087, %v1158, 0
        %v1166 = vsel %vm1087, %v1163, 0
        %1168 = vmatprep.subr.mxu0 0.0
        %1169 = vmatpush1.xpose.msra.mxu0 %v1166
        %1170 = vmatprep.subr.mxu0 0.0
        %1171 = vmatpush1.xpose.msra.mxu0 0.0
        %1172 = vmatprep.subr.mxu0 0.0
        %1173 = vmatpush1.xpose.msra.mxu0 0.0
        %1174 = vmatprep.subr.mxu0 0.0
        %1175 = vmatpush1.xpose.msra.mxu0 0.0
        %1176 = vmatprep.subr.mxu0 0.0
        %1177 = vmatpush1.xpose.msra.mxu0 0.0
        %1178 = vmatprep.subr.mxu0 0.0
        %1179 = vmatpush1.xpose.msra.mxu0 0.0
        %1180 = vmatprep.subr.mxu0 0.0
        %1181 = vmatpush1.xpose.msra.mxu0 0.0
        %1182 = vmatprep.subr.mxu0 0.0
        %1183 = vmatpush1.xpose.msra.mxu0 0.0
        %1184 = vmatprep.subr.mxu0 0.0
        %1185 = vmatpush1.xpose.msra.mxu0 0.0
        %1186 = vmatprep.subr.mxu0 0.0
        %1187 = vmatpush1.xpose.msra.mxu0 0.0
        %1188 = vmatprep.subr.mxu0 0.0
        %1189 = vmatpush1.xpose.msra.mxu0 0.0
        %1190 = vmatprep.subr.mxu0 0.0
        %1191 = vmatpush1.xpose.msra.mxu0 0.0
        %1192 = vmatprep.subr.mxu0 0.0
        %1193 = vmatpush1.xpose.msra.mxu0 0.0
        %1194 = vmatprep.subr.mxu0 0.0
        %1195 = vmatpush1.xpose.msra.mxu0 0.0
        %1196 = vmatprep.subr.mxu0 0.0
        %1197 = vmatpush1.xpose.msra.mxu0 0.0
        %1198 = vmatprep.subr.mxu0 0.0
        %1199 = vmatpush1.xpose.msra.mxu0 0.0
        %1200 = vmatprep.subr.mxu0 0.0
        %1201 = vmatpush1.xpose.msra.mxu0 0.0
        %1202 = vmatprep.subr.mxu0 0.0
        %1203 = vmatpush1.xpose.msra.mxu0 0.0
        %1204 = vmatprep.subr.mxu0 0.0
        %1205 = vmatpush1.xpose.msra.mxu0 0.0
        %1206 = vmatprep.subr.mxu0 0.0
        %1207 = vmatpush1.xpose.msra.mxu0 0.0
        %1208 = vmatprep.subr.mxu0 0.0
        %1209 = vmatpush1.xpose.msra.mxu0 0.0
        %1210 = vmatprep.subr.mxu0 0.0
        %1211 = vmatpush1.xpose.msra.mxu0 0.0
        %1212 = vmatprep.subr.mxu0 0.0
        %1213 = vmatpush1.xpose.msra.mxu0 0.0
        %1214 = vmatprep.subr.mxu0 0.0
        %1215 = vmatpush1.xpose.msra.mxu0 0.0
        %1216 = vmatprep.subr.mxu0 0.0
        %1217 = vmatpush1.xpose.msra.mxu0 0.0
        %1218 = vmatprep.subr.mxu0 0.0
        %1219 = vmatpush1.xpose.msra.mxu0 0.0
        %1220 = vmatprep.subr.mxu0 0.0
        %1221 = vmatpush1.xpose.msra.mxu0 0.0
        %1222 = vmatprep.subr.mxu0 0.0
        %1223 = vmatpush1.xpose.msra.mxu0 0.0
        %1224 = vmatprep.subr.mxu0 0.0
        %1225 = vmatpush1.xpose.msra.mxu0 0.0
        %1226 = vmatprep.subr.mxu0 0.0
        %1227 = vmatpush1.xpose.msra.mxu0 0.0
        %1228 = vmatprep.subr.mxu0 0.0
        %1229 = vmatpush1.xpose.msra.mxu0 0.0
        %1230 = vmatprep.subr.mxu0 0.0
        %1231 = vmatpush1.xpose.msra.mxu0 0.0
        %1232 = vmatprep.mubr.f32.mxu0 0.0
        %1233 = vmatmul.mubr.f32.gmra.mrb[0].mxu0 %v1164
        %v1234 = vpop.f32.mrb[0].mxu0
        %v1235 = vadd.f32 0.0, %v1234
        %v1236 = vpop.f32.mrb[0].mxu0
        %1237 = vdwg.mxu0
        %v1239 = vrot.slane %v1235, 1
        %v1240 = vsel %vm983, %v1239, %v1239
        %1241 = vrot.lane.b32.xlu0 %v1240, 127
        %v1242 = vpop.permute.xlu0 %1241
        %v1244 = vadd.f32 %v1235, %v1242
        %vm1245 = vcmask 1045504
        %v1246 = vrot.slane %v1235, 2
        %v1247 = vsel %vm1245, %v1246, %v1246
        %1248 = vrot.lane.b32.xlu0 %v1247, 126
        %v1249 = vpop.permute.xlu0 %1248
        %v1251 = vadd.f32 %v1244, %v1249
        %vm1252 = vcmask 1044480
        %v1253 = vrot.slane %v1235, 3
        %v1254 = vsel %vm1252, %v1253, %v1253
        %1255 = vrot.lane.b32.xlu0 %v1254, 125
        %v1256 = vpop.permute.xlu0 %1255
        %v1258 = vadd.f32 %v1251, %v1256
        %vm1259 = vcmask 1043456
        %v1260 = vrot.slane %v1235, 4
        %v1261 = vsel %vm1259, %v1260, %v1260
        %1262 = vrot.lane.b32.xlu0 %v1261, 124
        %v1263 = vpop.permute.xlu0 %1262
        %v1265 = vadd.f32 %v1258, %v1263
        %vm1266 = vcmask 1042432
        %v1267 = vrot.slane %v1235, 5
        %v1268 = vsel %vm1266, %v1267, %v1267
        %1269 = vrot.lane.b32.xlu0 %v1268, 123
        %v1270 = vpop.permute.xlu0 %1269
        %v1272 = vadd.f32 %v1265, %v1270
        %vm1273 = vcmask 1041408
        %v1274 = vrot.slane %v1235, 6
        %v1275 = vsel %vm1273, %v1274, %v1274
        %1276 = vrot.lane.b32.xlu0 %v1275, 122
        %v1277 = vpop.permute.xlu0 %1276
        %v1279 = vadd.f32 %v1272, %v1277
        %v1280 = vrot.slane %v1235, 7
        %v1281 = vsel %vm979, %v1280, %v1280
        %1282 = vrot.lane.b32.xlu0 %v1281, 121
        %v1283 = vpop.permute.xlu0 %1282
        %v1285 = vadd.f32 %v1279, %v1283
        %v1286 = vmul.f32 %v1285, 0.03125
        %vm1287 = vcmask 7168
        %v1288 = vsel %vm1287, %v1286, -inf
        %v1289 = vrot.slane %v1288, 4
        %v1290 = vmax.f32 %v1288, %v1289
        %v1291 = vrot.slane %v1290, 2
        %v1292 = vmax.f32 %v1290, %v1291
        %v1293 = vrot.slane %v1292, 1
        %v1294 = vmax.f32 %v1292, %v1293
        %vm1295 = vcmp.ge.f32.partialorder %v1286, %v1294
        %v1296 = vsel %vm1295, -1e+30, %v1286
        %v1297 = vsel %vm1287, %v1296, -inf
        %v1298 = vrot.slane %v1297, 4
        %v1299 = vmax.f32 %v1297, %v1298
        %v1300 = vrot.slane %v1299, 2
        %v1301 = vmax.f32 %v1299, %v1300
        %v1302 = vrot.slane %v1301, 1
        %v1303 = vmax.f32 %v1301, %v1302
        %vm1304 = vcmp.ge.f32.partialorder %v1286, %v1303
        %v1305 = vsub.f32 %v1286, %v1294
        %v1306 = vmul.f32 %v1305, 1.442695
        %v1307 = vpow.pop %v1306
        %v1308 = vsel %vm1304, %v1307, 0.0
        %v1309 = vsel %vm1287, %v1308, 0.0
        %v1310 = vrot.slane %v1309, 4
        %v1311 = vadd.f32 %v1309, %v1310
        %v1312 = vrot.slane %v1311, 2
        %v1313 = vadd.f32 %v1311, %v1312
        %v1314 = vrot.slane %v1313, 1
        %v1315 = vadd.f32 %v1313, %v1314
        %v1316 = vrcp.pop %v1315
        %v1317 = vmul.f32 %v1308, %v1316
        %s1319 = vtos %v1317
        %v1320 = vstv %s1319
        %v1322 = vmul.f32 %v1320, %v1158
        %v1323 = vrot.slane %v1317, 1
        %s1324 = vtos %v1323
        %v1325 = vstv %s1324
        %v1327 = vmul.f32 %v1325, %v1158
        %v1329 = vrot.slane %v1327, 1
        %v1330 = vsel %vm983, %v1329, %v1329
        %v1332 = vadd.f32 %v1322, %v1330
        %v1333 = vrot.slane %v1317, 2
        %s1334 = vtos %v1333
        %v1335 = vstv %s1334
        %v1337 = vmul.f32 %v1335, %v1158
        %v1339 = vrot.slane %v1337, 2
        %v1340 = vsel %vm1245, %v1339, %v1339
        %v1342 = vadd.f32 %v1332, %v1340
        %v1343 = vrot.slane %v1317, 3
        %s1344 = vtos %v1343
        %v1345 = vstv %s1344
        %v1347 = vmul.f32 %v1345, %v1158
        %v1349 = vrot.slane %v1347, 3
        %v1350 = vsel %vm1252, %v1349, %v1349
        %v1352 = vadd.f32 %v1342, %v1350
        %v1353 = vrot.slane %v1317, 4
        %s1354 = vtos %v1353
        %v1355 = vstv %s1354
        %v1357 = vmul.f32 %v1355, %v1158
        %v1359 = vrot.slane %v1357, 4
        %v1360 = vsel %vm1259, %v1359, %v1359
        %v1362 = vadd.f32 %v1352, %v1360
        %v1363 = vrot.slane %v1317, 5
        %s1364 = vtos %v1363
        %v1365 = vstv %s1364
        %v1367 = vmul.f32 %v1365, %v1158
        %v1369 = vrot.slane %v1367, 5
        %v1370 = vsel %vm1266, %v1369, %v1369
        %v1372 = vadd.f32 %v1362, %v1370
        %v1373 = vrot.slane %v1317, 6
        %s1374 = vtos %v1373
        %v1375 = vstv %s1374
        %v1377 = vmul.f32 %v1375, %v1158
        %v1379 = vrot.slane %v1377, 6
        %v1380 = vsel %vm1273, %v1379, %v1379
        %v1382 = vadd.f32 %v1372, %v1380
        %v1383 = vrot.slane %v1317, 7
        %s1384 = vtos %v1383
        %v1385 = vstv %s1384
        %v1387 = vmul.f32 %v1385, %v1158
        %v1389 = vrot.slane %v1387, 7
        %v1390 = vsel %vm979, %v1389, %v1389
        %v1392 = vadd.f32 %v1382, %v1390
        %v1393 = vld [vmem:[%s53] sm:$0xff]
        %v1394 = vld [vmem:[%s53 + $0x8] sm:$0xff]
        %v1395 = vld [vmem:[%s53 + $0x10] sm:$0xff]
        %v1396 = vld [vmem:[%s53 + $0x18] sm:$0xff]
        %v1397 = vld [vmem:[%s45] sm:$0x1]
        %v1399 = vlaneseq
        %v1400 = vshrl.u32 %v1399, 7
        %v1401 = vsub.s32 0, %v1400
        %v1402 = vrot.slane %v1397, %v1401
        %1405 = vrot.lane.b32.xlu0 %v1392, 64
        %v1406 = vpop.permute.xlu0 %1405
        %v1407 = vsel %vm1087, %v1406, 0
        %1409 = vmatprep.subr.mxu0 0.0
        %1410 = vmatpush1.msra.mxu0 %v1393
        %1411 = vmatprep.subr.mxu0 0.0
        %1412 = vmatpush1.msra.mxu0 %v1394
        %1413 = vmatprep.subr.mxu0 0.0
        %1414 = vmatpush1.msra.mxu0 %v1395
        %1415 = vmatprep.subr.mxu0 0.0
        %1416 = vmatpush1.msra.mxu0 %v1396
        %1417 = vmatprep.subr.mxu0 0.0
        %1418 = vmatpush1.msra.mxu0 0.0
        %1419 = vmatprep.subr.mxu0 0.0
        %1420 = vmatpush1.msra.mxu0 0.0
        %1421 = vmatprep.subr.mxu0 0.0
        %1422 = vmatpush1.msra.mxu0 0.0
        %1423 = vmatprep.subr.mxu0 0.0
        %1424 = vmatpush1.msra.mxu0 0.0
        %1425 = vmatprep.subr.mxu0 0.0
        %1426 = vmatpush1.msra.mxu0 0.0
        %1427 = vmatprep.subr.mxu0 0.0
        %1428 = vmatpush1.msra.mxu0 0.0
        %1429 = vmatprep.subr.mxu0 0.0
        %1430 = vmatpush1.msra.mxu0 0.0
        %1431 = vmatprep.subr.mxu0 0.0
        %1432 = vmatpush1.msra.mxu0 0.0
        %1433 = vmatprep.subr.mxu0 0.0
        %1434 = vmatpush1.msra.mxu0 0.0
        %1435 = vmatprep.subr.mxu0 0.0
        %1436 = vmatpush1.msra.mxu0 0.0
        %1437 = vmatprep.subr.mxu0 0.0
        %1438 = vmatpush1.msra.mxu0 0.0
        %1439 = vmatprep.subr.mxu0 0.0
        %1440 = vmatpush1.msra.mxu0 0.0
        %1441 = vmatprep.subr.mxu0 0.0
        %1442 = vmatpush1.msra.mxu0 0.0
        %1443 = vmatprep.subr.mxu0 0.0
        %1444 = vmatpush1.msra.mxu0 0.0
        %1445 = vmatprep.subr.mxu0 0.0
        %1446 = vmatpush1.msra.mxu0 0.0
        %1447 = vmatprep.subr.mxu0 0.0
        %1448 = vmatpush1.msra.mxu0 0.0
        %1449 = vmatprep.subr.mxu0 0.0
        %1450 = vmatpush1.msra.mxu0 0.0
        %1451 = vmatprep.subr.mxu0 0.0
        %1452 = vmatpush1.msra.mxu0 0.0
        %1453 = vmatprep.subr.mxu0 0.0
        %1454 = vmatpush1.msra.mxu0 0.0
        %1455 = vmatprep.subr.mxu0 0.0
        %1456 = vmatpush1.msra.mxu0 0.0
        %1457 = vmatprep.subr.mxu0 0.0
        %1458 = vmatpush1.msra.mxu0 0.0
        %1459 = vmatprep.subr.mxu0 0.0
        %1460 = vmatpush1.msra.mxu0 0.0
        %1461 = vmatprep.subr.mxu0 0.0
        %1462 = vmatpush1.msra.mxu0 0.0
        %1463 = vmatprep.subr.mxu0 0.0
        %1464 = vmatpush1.msra.mxu0 0.0
        %1465 = vmatprep.subr.mxu0 0.0
        %1466 = vmatpush1.msra.mxu0 0.0
        %1467 = vmatprep.subr.mxu0 0.0
        %1468 = vmatpush1.msra.mxu0 0.0
        %1469 = vmatprep.subr.mxu0 0.0
        %1470 = vmatpush1.msra.mxu0 0.0
        %1471 = vmatprep.subr.mxu0 0.0
        %1472 = vmatpush1.msra.mxu0 0.0
        %1473 = vmatprep.mubr.f32.mxu0 0.0
        %1474 = vmatmul.mubr.f32.gmra.mrb[0].mxu0 %v1407
        %v1475 = vpop.f32.mrb[0].mxu0
        %v1476 = vadd.f32 %v1402, %v1475
        %v1477 = vpop.f32.mrb[0].mxu0
        %1478 = vdwg.mxu0
        %v1479 = vadd.f32 %v1073, %v1476
        %v1481 = vrot.slane %v1479, 7
        %v1483 = vrot.slane %v1479, 6
        %v1485 = vrot.slane %v1479, 5
        %v1487 = vrot.slane %v1479, 4
        %v1489 = vsel %vm979, %v1479, %v1481
        %v1490 = vsel %vm1273, %v1489, %v1483
        %v1491 = vsel %vm1273, %v1483, %v1485
        %v1492 = vsel %vm1266, %v1491, %v1487
        %v1495 = vrot.slane %v1490, 1
        %v1496 = vrot.slane %v1492, 1
        %v1497 = vsel %vm983, %v1495, %v1496
        %v1499 = vadd.f32 %v1490, %v1497
        %v1500 = vrot.slane %v1490, 2
        %v1501 = vrot.slane %v1492, 2
        %v1502 = vsel %vm1245, %v1500, %v1501
        %v1504 = vadd.f32 %v1499, %v1502
        %v1505 = vrot.slane %v1490, 3
        %v1506 = vrot.slane %v1492, 3
        %v1507 = vsel %vm1252, %v1505, %v1506
        %v1509 = vadd.f32 %v1504, %v1507
        %v1510 = vrot.slane %v1490, 4
        %v1511 = vrot.slane %v1492, 4
        %v1512 = vsel %vm1259, %v1510, %v1511
        %v1514 = vadd.f32 %v1509, %v1512
        %v1515 = vmul.f32 %v1514, 0.2
        %v1516 = vsub.f32 %v1479, %v1515
        %v1517 = vld [vmem:[%s49] sm:$0xff]
        %v1518 = vld [vmem:[%s49 + $0x8] sm:$0xff]
        %v1519 = vld [vmem:[%s49 + $0x10] sm:$0xff]
        %v1520 = vld [vmem:[%s49 + $0x18] sm:$0xff]
        %v1522 = vsel %vm1087, %v1516, 0
        %1524 = vmatprep.subr.mxu0 0.0
        %1525 = vmatpush1.msra.mxu0 %v1517
        %1526 = vmatprep.subr.mxu0 0.0
        %1527 = vmatpush1.msra.mxu0 %v1518
        %1528 = vmatprep.subr.mxu0 0.0
        %1529 = vmatpush1.msra.mxu0 %v1519
        %1530 = vmatprep.subr.mxu0 0.0
        %1531 = vmatpush1.msra.mxu0 %v1520
        %1532 = vmatprep.subr.mxu0 0.0
        %1533 = vmatpush1.msra.mxu0 0.0
        %1534 = vmatprep.subr.mxu0 0.0
        %1535 = vmatpush1.msra.mxu0 0.0
        %1536 = vmatprep.subr.mxu0 0.0
        %1537 = vmatpush1.msra.mxu0 0.0
        %1538 = vmatprep.subr.mxu0 0.0
        %1539 = vmatpush1.msra.mxu0 0.0
        %1540 = vmatprep.subr.mxu0 0.0
        %1541 = vmatpush1.msra.mxu0 0.0
        %1542 = vmatprep.subr.mxu0 0.0
        %1543 = vmatpush1.msra.mxu0 0.0
        %1544 = vmatprep.subr.mxu0 0.0
        %1545 = vmatpush1.msra.mxu0 0.0
        %1546 = vmatprep.subr.mxu0 0.0
        %1547 = vmatpush1.msra.mxu0 0.0
        %1548 = vmatprep.subr.mxu0 0.0
        %1549 = vmatpush1.msra.mxu0 0.0
        %1550 = vmatprep.subr.mxu0 0.0
        %1551 = vmatpush1.msra.mxu0 0.0
        %1552 = vmatprep.subr.mxu0 0.0
        %1553 = vmatpush1.msra.mxu0 0.0
        %1554 = vmatprep.subr.mxu0 0.0
        %1555 = vmatpush1.msra.mxu0 0.0
        %1556 = vmatprep.subr.mxu0 0.0
        %1557 = vmatpush1.msra.mxu0 0.0
        %1558 = vmatprep.subr.mxu0 0.0
        %1559 = vmatpush1.msra.mxu0 0.0
        %1560 = vmatprep.subr.mxu0 0.0
        %1561 = vmatpush1.msra.mxu0 0.0
        %1562 = vmatprep.subr.mxu0 0.0
        %1563 = vmatpush1.msra.mxu0 0.0
        %1564 = vmatprep.subr.mxu0 0.0
        %1565 = vmatpush1.msra.mxu0 0.0
        %1566 = vmatprep.subr.mxu0 0.0
        %1567 = vmatpush1.msra.mxu0 0.0
        %1568 = vmatprep.subr.mxu0 0.0
        %1569 = vmatpush1.msra.mxu0 0.0
        %1570 = vmatprep.subr.mxu0 0.0
        %1571 = vmatpush1.msra.mxu0 0.0
        %1572 = vmatprep.subr.mxu0 0.0
        %1573 = vmatpush1.msra.mxu0 0.0
        %1574 = vmatprep.subr.mxu0 0.0
        %1575 = vmatpush1.msra.mxu0 0.0
        %1576 = vmatprep.subr.mxu0 0.0
        %1577 = vmatpush1.msra.mxu0 0.0
        %1578 = vmatprep.subr.mxu0 0.0
        %1579 = vmatpush1.msra.mxu0 0.0
        %1580 = vmatprep.subr.mxu0 0.0
        %1581 = vmatpush1.msra.mxu0 0.0
        %1582 = vmatprep.subr.mxu0 0.0
        %1583 = vmatpush1.msra.mxu0 0.0
        %1584 = vmatprep.subr.mxu0 0.0
        %1585 = vmatpush1.msra.mxu0 0.0
        %1586 = vmatprep.subr.mxu0 0.0
        %1587 = vmatpush1.msra.mxu0 0.0
        %1588 = vmatprep.mubr.f32.mxu0 0.0
        %1589 = vmatmul.mubr.f32.gmra.mrb[0].mxu0 %v1522
        %v1590 = vpop.f32.mrb[0].mxu0
        %v1591 = vadd.f32 0.0, %v1590
        %v1592 = vpop.f32.mrb[0].mxu0
        %1593 = vdwg.mxu0
        %v1594 = vmax.f32 %v1591, 0.0
        %v1595 = vld [vmem:[%s51] sm:$0xff]
        %v1596 = vld [vmem:[%s51 + $0x8] sm:$0xff]
        %v1597 = vld [vmem:[%s51 + $0x10] sm:$0xff]
        %v1598 = vld [vmem:[%s51 + $0x18] sm:$0xff]
        %v1599 = vld [vmem:[%s51 + $0x20] sm:$0xff]
        %v1600 = vld [vmem:[%s51 + $0x28] sm:$0xff]
        %v1601 = vld [vmem:[%s51 + $0x30] sm:$0xff]
        %v1602 = vld [vmem:[%s51 + $0x38] sm:$0xff]
        %vm1603 = vcmask 523264
        %v1605 = vsel %vm1603, %v1594, 0
        %1607 = vmatprep.subr.mxu0 0.0
        %1608 = vmatpush1.msra.mxu0 %v1595
        %1609 = vmatprep.subr.mxu0 0.0
        %1610 = vmatpush1.msra.mxu0 %v1596
        %1611 = vmatprep.subr.mxu0 0.0
        %1612 = vmatpush1.msra.mxu0 %v1597
        %1613 = vmatprep.subr.mxu0 0.0
        %1614 = vmatpush1.msra.mxu0 %v1598
        %1615 = vmatprep.subr.mxu0 0.0
        %1616 = vmatpush1.msra.mxu0 %v1599
        %1617 = vmatprep.subr.mxu0 0.0
        %1618 = vmatpush1.msra.mxu0 %v1600
        %1619 = vmatprep.subr.mxu0 0.0
        %1620 = vmatpush1.msra.mxu0 %v1601
        %1621 = vmatprep.subr.mxu0 0.0
        %1622 = vmatpush1.msra.mxu0 %v1602
        %1623 = vmatprep.subr.mxu0 0.0
        %1624 = vmatpush1.msra.mxu0 0.0
        %1625 = vmatprep.subr.mxu0 0.0
        %1626 = vmatpush1.msra.mxu0 0.0
        %1627 = vmatprep.subr.mxu0 0.0
        %1628 = vmatpush1.msra.mxu0 0.0
        %1629 = vmatprep.subr.mxu0 0.0
        %1630 = vmatpush1.msra.mxu0 0.0
        %1631 = vmatprep.subr.mxu0 0.0
        %1632 = vmatpush1.msra.mxu0 0.0
        %1633 = vmatprep.subr.mxu0 0.0
        %1634 = vmatpush1.msra.mxu0 0.0
        %1635 = vmatprep.subr.mxu0 0.0
        %1636 = vmatpush1.msra.mxu0 0.0
        %1637 = vmatprep.subr.mxu0 0.0
        %1638 = vmatpush1.msra.mxu0 0.0
        %1639 = vmatprep.subr.mxu0 0.0
        %1640 = vmatpush1.msra.mxu0 0.0
        %1641 = vmatprep.subr.mxu0 0.0
        %1642 = vmatpush1.msra.mxu0 0.0
        %1643 = vmatprep.subr.mxu0 0.0
        %1644 = vmatpush1.msra.mxu0 0.0
        %1645 = vmatprep.subr.mxu0 0.0
        %1646 = vmatpush1.msra.mxu0 0.0
        %1647 = vmatprep.subr.mxu0 0.0
        %1648 = vmatpush1.msra.mxu0 0.0
        %1649 = vmatprep.subr.mxu0 0.0
        %1650 = vmatpush1.msra.mxu0 0.0
        %1651 = vmatprep.subr.mxu0 0.0
        %1652 = vmatpush1.msra.mxu0 0.0
        %1653 = vmatprep.subr.mxu0 0.0
        %1654 = vmatpush1.msra.mxu0 0.0
        %1655 = vmatprep.subr.mxu0 0.0
        %1656 = vmatpush1.msra.mxu0 0.0
        %1657 = vmatprep.subr.mxu0 0.0
        %1658 = vmatpush1.msra.mxu0 0.0
        %1659 = vmatprep.subr.mxu0 0.0
        %1660 = vmatpush1.msra.mxu0 0.0
        %1661 = vmatprep.subr.mxu0 0.0
        %1662 = vmatpush1.msra.mxu0 0.0
        %1663 = vmatprep.subr.mxu0 0.0
        %1664 = vmatpush1.msra.mxu0 0.0
        %1665 = vmatprep.subr.mxu0 0.0
        %1666 = vmatpush1.msra.mxu0 0.0
        %1667 = vmatprep.subr.mxu0 0.0
        %1668 = vmatpush1.msra.mxu0 0.0
        %1669 = vmatprep.subr.mxu0 0.0
        %1670 = vmatpush1.msra.mxu0 0.0
        %1671 = vmatprep.mubr.f32.mxu0 0.0
        %1672 = vmatmul.mubr.f32.gmra.mrb[0].mxu0 %v1605
        %v1673 = vpop.f32.mrb[0].mxu0
        %v1674 = vadd.f32 0.0, %v1673
        %v1675 = vpop.f32.mrb[0].mxu0
        %1676 = vdwg.mxu0
        %v1677 = vadd.f32 %v1516, %v1674
        %v1679 = vrot.slane %v1677, 7
        %v1681 = vrot.slane %v1677, 6
        %v1683 = vrot.slane %v1677, 5
        %v1685 = vrot.slane %v1677, 4
        %v1687 = vsel %vm979, %v1677, %v1679
        %v1688 = vsel %vm1273, %v1687, %v1681
        %v1689 = vsel %vm1273, %v1681, %v1683
        %v1690 = vsel %vm1266, %v1689, %v1685
        %v1693 = vrot.slane %v1688, 1
        %v1694 = vrot.slane %v1690, 1
        %v1695 = vsel %vm983, %v1693, %v1694
        %v1697 = vadd.f32 %v1688, %v1695
        %v1698 = vrot.slane %v1688, 2
        %v1699 = vrot.slane %v1690, 2
        %v1700 = vsel %vm1245, %v1698, %v1699
        %v1702 = vadd.f32 %v1697, %v1700
        %v1703 = vrot.slane %v1688, 3
        %v1704 = vrot.slane %v1690, 3
        %v1705 = vsel %vm1252, %v1703, %v1704
        %v1707 = vadd.f32 %v1702, %v1705
        %v1708 = vrot.slane %v1688, 4
        %v1709 = vrot.slane %v1690, 4
        %v1710 = vsel %vm1259, %v1708, %v1709
        %v1712 = vadd.f32 %v1707, %v1710
        %v1713 = vmul.f32 %v1712, 0.2
        %v1714 = vsub.f32 %v1677, %v1713
        %v1715 = vld [vmem:[%s59] sm:$0x1]
        %v1716 = vld [vmem:[%s57] sm:$0x1]
        %v1717 = vsel %vm1087, %v1714, 0.0
        %1718 = vadd.xlane.f32.xlu0 %v1717
        %v1719 = vpop.xlane.xlu0 %1718
        %v1720 = vrcp.pop 32.0
        %v1721 = vmul.f32 %v1719, %v1720
        %v1722 = vsub.f32 %v1714, %v1721
        %v1723 = vmul.f32 %v1722, %v1722
        %v1724 = vsel %vm1087, %v1723, 0.0
        %1725 = vadd.xlane.f32.xlu0 %v1724
        %v1726 = vpop.xlane.xlu0 %1725
        %v1727 = vmul.f32 %v1726, %v1720
        %v1728 = vadd.f32 %v1727, 1e-05
        %v1729 = vrsqrt.pop %v1728
        %v1730 = vmul.f32 %v1722, %v1729
        %v1732 = vlaneseq
        %v1733 = vshrl.u32 %v1732, 7
        %v1734 = vsub.s32 0, %v1733
        %v1735 = vrot.slane %v1715, %v1734
        %v1737 = vmul.f32 %v1730, %v1735
        %v1739 = vlaneseq
        %v1740 = vshrl.u32 %v1739, 7
        %v1741 = vsub.s32 0, %v1740
        %v1742 = vrot.slane %v1716, %v1741
        %v1744 = vadd.f32 %v1737, %v1742
        %v1745 = vsel %vm1087, %v1744, 0.0
        %v1746 = vrot.slane %v1745, 4
        %v1747 = vadd.f32 %v1745, %v1746
        %v1748 = vrot.slane %v1747, 2
        %v1749 = vadd.f32 %v1747, %v1748
        %v1750 = vrot.slane %v1749, 1
        %v1751 = vadd.f32 %v1749, %v1750
        %v1752 = vrcp.pop 8.0
        %v1753 = vmul.f32 %v1751, %v1752
        %v1754 = vsub.f32 %v1744, %v1753
        %v1755 = vrot.slane %v972, 6
        %v1757 = vrot.slane %v972, 5
        %v1759 = vrot.slane %v972, 4
        %v1761 = vsel %vm979, %v972, %v977
        %v1762 = vsel %vm1273, %v1761, %v1755
        %v1763 = vsel %vm1273, %v1755, %v1757
        %v1764 = vsel %vm1266, %v1763, %v1759
        %v1767 = vrot.slane %v1762, 1
        %v1768 = vrot.slane %v1764, 1
        %v1769 = vsel %vm983, %v1767, %v1768
        %v1771 = vadd.f32 %v1762, %v1769
        %v1772 = vrot.slane %v1762, 2
        %v1773 = vrot.slane %v1764, 2
        %v1774 = vsel %vm1245, %v1772, %v1773
        %v1776 = vadd.f32 %v1771, %v1774
        %v1777 = vrot.slane %v1762, 3
        %v1778 = vrot.slane %v1764, 3
        %v1779 = vsel %vm1252, %v1777, %v1778
        %v1781 = vadd.f32 %v1776, %v1779
        %v1782 = vrot.slane %v1762, 4
        %v1783 = vrot.slane %v1764, 4
        %v1784 = vsel %vm1259, %v1782, %v1783
        %v1786 = vadd.f32 %v1781, %v1784
        %v1787 = vmul.f32 %v1786, 0.2
        %v1788 = vsub.f32 %v972, %v1787
        %v1789 = vsel %vm992, %v972, 0.0
        %v1790 = vrot.slane %v1789, 4
        %v1791 = vadd.f32 %v1789, %v1790
        %v1792 = vrot.slane %v1791, 2
        %v1793 = vadd.f32 %v1791, %v1792
        %v1794 = vrot.slane %v1793, 1
        %v1795 = vadd.f32 %v1793, %v1794
        %v1796 = vmul.f32 %v1795, %v1752
        %v1798 = vrot.slane %v1787, 4
        %v1800 = vsel %vm1259, %v1798, %v1796
        %v1802 = vrot.slane %v1788, 4
        %v1804 = vsel %vm1259, %v1802, 0.0
        %v1805 = vld [vmem:[%s971] sm:$0x1f]
        %v1806 = vld [vmem:[%s7] sm:$0xff]
        %v1807 = vld [vmem:[%s7 + $0x8] sm:$0xff]
        %v1809 = vrot.slane %v1804, 4
        %v1811 = vrot.slane %v1804, 7
        %v1813 = vsel %vm979, %v1809, %v1811
        %v1814 = vrot.slane %v1804, 1
        %v1816 = vsel %vm1259, %v1814, %v1809
        %1817 = vrot.lane.b32.xlu0 %v1804, 4
        %v1818 = vpop.permute.xlu0 %1817
        %1821 = vrot.lane.b32.xlu0 %v1816, 8
        %v1822 = vpop.permute.xlu0 %1821
        %v1824 = vsel %vm992, %v1813, %v1818
        %v1825 = vsel %vm994, %v1824, %v1822
        %1827 = vrot.lane.b32.xlu0 %v1805, 12
        %v1828 = vpop.permute.xlu0 %1827
        %v1830 = vsel %vm1000, %v1825, %v1828
        %v1832 = vsel %vm1002, %v1830, 0
        %1834 = vmatprep.subr.mxu0 0.0
        %1835 = vmatpush1.msra.mxu0 %v1806
        %1836 = vmatprep.subr.mxu0 0.0
        %1837 = vmatpush1.msra.mxu0 %v1807
        %1838 = vmatprep.subr.mxu0 0.0
        %1839 = vmatpush1.msra.mxu0 0.0
        %1840 = vmatprep.subr.mxu0 0.0
        %1841 = vmatpush1.msra.mxu0 0.0
        %1842 = vmatprep.subr.mxu0 0.0
        %1843 = vmatpush1.msra.mxu0 0.0
        %1844 = vmatprep.subr.mxu0 0.0
        %1845 = vmatpush1.msra.mxu0 0.0
        %1846 = vmatprep.subr.mxu0 0.0
        %1847 = vmatpush1.msra.mxu0 0.0
        %1848 = vmatprep.subr.mxu0 0.0
        %1849 = vmatpush1.msra.mxu0 0.0
        %1850 = vmatprep.subr.mxu0 0.0
        %1851 = vmatpush1.msra.mxu0 0.0
        %1852 = vmatprep.subr.mxu0 0.0
        %1853 = vmatpush1.msra.mxu0 0.0
        %1854 = vmatprep.subr.mxu0 0.0
        %1855 = vmatpush1.msra.mxu0 0.0
        %1856 = vmatprep.subr.mxu0 0.0
        %1857 = vmatpush1.msra.mxu0 0.0
        %1858 = vmatprep.subr.mxu0 0.0
        %1859 = vmatpush1.msra.mxu0 0.0
        %1860 = vmatprep.subr.mxu0 0.0
        %1861 = vmatpush1.msra.mxu0 0.0
        %1862 = vmatprep.subr.mxu0 0.0
        %1863 = vmatpush1.msra.mxu0 0.0
        %1864 = vmatprep.subr.mxu0 0.0
        %1865 = vmatpush1.msra.mxu0 0.0
        %1866 = vmatprep.subr.mxu0 0.0
        %1867 = vmatpush1.msra.mxu0 0.0
        %1868 = vmatprep.subr.mxu0 0.0
        %1869 = vmatpush1.msra.mxu0 0.0
        %1870 = vmatprep.subr.mxu0 0.0
        %1871 = vmatpush1.msra.mxu0 0.0
        %1872 = vmatprep.subr.mxu0 0.0
        %1873 = vmatpush1.msra.mxu0 0.0
        %1874 = vmatprep.subr.mxu0 0.0
        %1875 = vmatpush1.msra.mxu0 0.0
        %1876 = vmatprep.subr.mxu0 0.0
        %1877 = vmatpush1.msra.mxu0 0.0
        %1878 = vmatprep.subr.mxu0 0.0
        %1879 = vmatpush1.msra.mxu0 0.0
        %1880 = vmatprep.subr.mxu0 0.0
        %1881 = vmatpush1.msra.mxu0 0.0
        %1882 = vmatprep.subr.mxu0 0.0
        %1883 = vmatpush1.msra.mxu0 0.0
        %1884 = vmatprep.subr.mxu0 0.0
        %1885 = vmatpush1.msra.mxu0 0.0
        %1886 = vmatprep.subr.mxu0 0.0
        %1887 = vmatpush1.msra.mxu0 0.0
        %1888 = vmatprep.subr.mxu0 0.0
        %1889 = vmatpush1.msra.mxu0 0.0
        %1890 = vmatprep.subr.mxu0 0.0
        %1891 = vmatpush1.msra.mxu0 0.0
        %1892 = vmatprep.subr.mxu0 0.0
        %1893 = vmatpush1.msra.mxu0 0.0
        %1894 = vmatprep.subr.mxu0 0.0
        %1895 = vmatpush1.msra.mxu0 0.0
        %1896 = vmatprep.subr.mxu0 0.0
        %1897 = vmatpush1.msra.mxu0 0.0
        %1898 = vmatprep.mubr.f32.mxu0 0.0
        %1899 = vmatmul.mubr.f32.gmra.mrb[0].mxu0 %v1832
        %v1900 = vpop.f32.mrb[0].mxu0
        %v1901 = vadd.f32 0.0, %v1900
        %v1902 = vpop.f32.mrb[0].mxu0
        %1903 = vdwg.mxu0
        %v1904 = vld [vmem:[%s31] sm:$0xff]
        %v1905 = vld [vmem:[%s31 + $0x8] sm:$0xff]
        %v1906 = vld [vmem:[%s31 + $0x10] sm:$0xff]
        %v1907 = vld [vmem:[%s31 + $0x18] sm:$0xff]
        %v1908 = vld [vmem:[%s27] sm:$0x1]
        %v1910 = vlaneseq
        %v1911 = vshrl.u32 %v1910, 7
        %v1912 = vsub.s32 0, %v1911
        %v1913 = vrot.slane %v1908, %v1912
        %v1916 = vsel %vm1087, %v1901, 0
        %1918 = vmatprep.subr.mxu0 0.0
        %1919 = vmatpush1.msra.mxu0 %v1904
        %1920 = vmatprep.subr.mxu0 0.0
        %1921 = vmatpush1.msra.mxu0 %v1905
        %1922 = vmatprep.subr.mxu0 0.0
        %1923 = vmatpush1.msra.mxu0 %v1906
        %1924 = vmatprep.subr.mxu0 0.0
        %1925 = vmatpush1.msra.mxu0 %v1907
        %1926 = vmatprep.subr.mxu0 0.0
        %1927 = vmatpush1.msra.mxu0 0.0
        %1928 = vmatprep.subr.mxu0 0.0
        %1929 = vmatpush1.msra.mxu0 0.0
        %1930 = vmatprep.subr.mxu0 0.0
        %1931 = vmatpush1.msra.mxu0 0.0
        %1932 = vmatprep.subr.mxu0 0.0
        %1933 = vmatpush1.msra.mxu0 0.0
        %1934 = vmatprep.subr.mxu0 0.0
        %1935 = vmatpush1.msra.mxu0 0.0
        %1936 = vmatprep.subr.mxu0 0.0
        %1937 = vmatpush1.msra.mxu0 0.0
        %1938 = vmatprep.subr.mxu0 0.0
        %1939 = vmatpush1.msra.mxu0 0.0
        %1940 = vmatprep.subr.mxu0 0.0
        %1941 = vmatpush1.msra.mxu0 0.0
        %1942 = vmatprep.subr.mxu0 0.0
        %1943 = vmatpush1.msra.mxu0 0.0
        %1944 = vmatprep.subr.mxu0 0.0
        %1945 = vmatpush1.msra.mxu0 0.0
        %1946 = vmatprep.subr.mxu0 0.0
        %1947 = vmatpush1.msra.mxu0 0.0
        %1948 = vmatprep.subr.mxu0 0.0
        %1949 = vmatpush1.msra.mxu0 0.0
        %1950 = vmatprep.subr.mxu0 0.0
        %1951 = vmatpush1.msra.mxu0 0.0
        %1952 = vmatprep.subr.mxu0 0.0
        %1953 = vmatpush1.msra.mxu0 0.0
        %1954 = vmatprep.subr.mxu0 0.0
        %1955 = vmatpush1.msra.mxu0 0.0
        %1956 = vmatprep.subr.mxu0 0.0
        %1957 = vmatpush1.msra.mxu0 0.0
        %1958 = vmatprep.subr.mxu0 0.0
        %1959 = vmatpush1.msra.mxu0 0.0
        %1960 = vmatprep.subr.mxu0 0.0
        %1961 = vmatpush1.msra.mxu0 0.0
        %1962 = vmatprep.subr.mxu0 0.0
        %1963 = vmatpush1.msra.mxu0 0.0
        %1964 = vmatprep.subr.mxu0 0.0
        %1965 = vmatpush1.msra.mxu0 0.0
        %1966 = vmatprep.subr.mxu0 0.0
        %1967 = vmatpush1.msra.mxu0 0.0
        %1968 = vmatprep.subr.mxu0 0.0
        %1969 = vmatpush1.msra.mxu0 0.0
        %1970 = vmatprep.subr.mxu0 0.0
        %1971 = vmatpush1.msra.mxu0 0.0
        %1972 = vmatprep.subr.mxu0 0.0
        %1973 = vmatpush1.msra.mxu0 0.0
        %1974 = vmatprep.subr.mxu0 0.0
        %1975 = vmatpush1.msra.mxu0 0.0
        %1976 = vmatprep.subr.mxu0 0.0
        %1977 = vmatpush1.msra.mxu0 0.0
        %1978 = vmatprep.subr.mxu0 0.0
        %1979 = vmatpush1.msra.mxu0 0.0
        %1980 = vmatprep.subr.mxu0 0.0
        %1981 = vmatpush1.msra.mxu0 0.0
        %1982 = vmatprep.mubr.f32.mxu0 0.0
        %1983 = vmatmul.mubr.f32.gmra.mrb[0].mxu0 %v1916
        %v1984 = vpop.f32.mrb[0].mxu0
        %v1985 = vadd.f32 %v1913, %v1984
        %v1986 = vpop.f32.mrb[0].mxu0
        %1987 = vdwg.mxu0
        %1989 = vrot.lane.b32.xlu0 %v1985, 96
        %v1990 = vpop.permute.xlu0 %1989
        %v1991 = vsel %vm1087, %v1985, 0
        %v1993 = vsel %vm1087, %v1990, 0
        %1995 = vmatprep.subr.mxu0 0.0
        %1996 = vmatpush1.xpose.msra.mxu0 %v1993
        %1997 = vmatprep.subr.mxu0 0.0
        %1998 = vmatpush1.xpose.msra.mxu0 0.0
        %1999 = vmatprep.subr.mxu0 0.0
        %2000 = vmatpush1.xpose.msra.mxu0 0.0
        %2001 = vmatprep.subr.mxu0 0.0
        %2002 = vmatpush1.xpose.msra.mxu0 0.0
        %2003 = vmatprep.subr.mxu0 0.0
        %2004 = vmatpush1.xpose.msra.mxu0 0.0
        %2005 = vmatprep.subr.mxu0 0.0
        %2006 = vmatpush1.xpose.msra.mxu0 0.0
        %2007 = vmatprep.subr.mxu0 0.0
        %2008 = vmatpush1.xpose.msra.mxu0 0.0
        %2009 = vmatprep.subr.mxu0 0.0
        %2010 = vmatpush1.xpose.msra.mxu0 0.0
        %2011 = vmatprep.subr.mxu0 0.0
        %2012 = vmatpush1.xpose.msra.mxu0 0.0
        %2013 = vmatprep.subr.mxu0 0.0
        %2014 = vmatpush1.xpose.msra.mxu0 0.0
        %2015 = vmatprep.subr.mxu0 0.0
        %2016 = vmatpush1.xpose.msra.mxu0 0.0
        %2017 = vmatprep.subr.mxu0 0.0
        %2018 = vmatpush1.xpose.msra.mxu0 0.0
        %2019 = vmatprep.subr.mxu0 0.0
        %2020 = vmatpush1.xpose.msra.mxu0 0.0
        %2021 = vmatprep.subr.mxu0 0.0
        %2022 = vmatpush1.xpose.msra.mxu0 0.0
        %2023 = vmatprep.subr.mxu0 0.0
        %2024 = vmatpush1.xpose.msra.mxu0 0.0
        %2025 = vmatprep.subr.mxu0 0.0
        %2026 = vmatpush1.xpose.msra.mxu0 0.0
        %2027 = vmatprep.subr.mxu0 0.0
        %2028 = vmatpush1.xpose.msra.mxu0 0.0
        %2029 = vmatprep.subr.mxu0 0.0
        %2030 = vmatpush1.xpose.msra.mxu0 0.0
        %2031 = vmatprep.subr.mxu0 0.0
        %2032 = vmatpush1.xpose.msra.mxu0 0.0
        %2033 = vmatprep.subr.mxu0 0.0
        %2034 = vmatpush1.xpose.msra.mxu0 0.0
        %2035 = vmatprep.subr.mxu0 0.0
        %2036 = vmatpush1.xpose.msra.mxu0 0.0
        %2037 = vmatprep.subr.mxu0 0.0
        %2038 = vmatpush1.xpose.msra.mxu0 0.0
        %2039 = vmatprep.subr.mxu0 0.0
        %2040 = vmatpush1.xpose.msra.mxu0 0.0
        %2041 = vmatprep.subr.mxu0 0.0
        %2042 = vmatpush1.xpose.msra.mxu0 0.0
        %2043 = vmatprep.subr.mxu0 0.0
        %2044 = vmatpush1.xpose.msra.mxu0 0.0
        %2045 = vmatprep.subr.mxu0 0.0
        %2046 = vmatpush1.xpose.msra.mxu0 0.0
        %2047 = vmatprep.subr.mxu0 0.0
        %2048 = vmatpush1.xpose.msra.mxu0 0.0
        %2049 = vmatprep.subr.mxu0 0.0
        %2050 = vmatpush1.xpose.msra.mxu0 0.0
        %2051 = vmatprep.subr.mxu0 0.0
        %2052 = vmatpush1.xpose.msra.mxu0 0.0
        %2053 = vmatprep.subr.mxu0 0.0
        %2054 = vmatpush1.xpose.msra.mxu0 0.0
        %2055 = vmatprep.subr.mxu0 0.0
        %2056 = vmatpush1.xpose.msra.mxu0 0.0
        %2057 = vmatprep.subr.mxu0 0.0
        %2058 = vmatpush1.xpose.msra.mxu0 0.0
        %2059 = vmatprep.mubr.f32.mxu0 0.0
        %2060 = vmatmul.mubr.f32.gmra.mrb[0].mxu0 %v1991
        %v2061 = vpop.f32.mrb[0].mxu0
        %v2062 = vadd.f32 0.0, %v2061
        %v2063 = vpop.f32.mrb[0].mxu0
        %2064 = vdwg.mxu0
        %v2066 = vrot.slane %v2062, 3
        %v2068 = vsel %vm1252, %v2062, %v2066
        %v2070 = vrot.slane %v2068, 1
        %2071 = vrot.lane.b32.xlu0 %v2070, 127
        %v2072 = vpop.permute.xlu0 %2071
        %v2074 = vadd.f32 %v2068, %v2072
        %v2075 = vrot.slane %v2068, 2
        %2076 = vrot.lane.b32.xlu0 %v2075, 126
        %v2077 = vpop.permute.xlu0 %2076
        %v2079 = vadd.f32 %v2074, %v2077
        %v2080 = vrot.slane %v2068, 3
        %2081 = vrot.lane.b32.xlu0 %v2080, 125
        %v2082 = vpop.permute.xlu0 %2081
        %v2084 = vadd.f32 %v2079, %v2082
        %v2085 = vrot.slane %v2068, 4
        %v2086 = vrot.slane %v2066, 4
        %v2087 = vsel %vm1259, %v2085, %v2086
        %2088 = vrot.lane.b32.xlu0 %v2087, 124
        %v2089 = vpop.permute.xlu0 %2088
        %v2091 = vadd.f32 %v2084, %v2089
        %v2092 = vmul.f32 %v2091, 0.03125
        %vm2093 = vcmask 4096
        %v2094 = vsel %vm2093, %v2092, -inf
        %v2095 = vrot.slane %v2094, 4
        %v2096 = vmax.f32 %v2094, %v2095
        %v2097 = vrot.slane %v2096, 2
        %v2098 = vmax.f32 %v2096, %v2097
        %v2099 = vrot.slane %v2098, 1
        %v2100 = vmax.f32 %v2098, %v2099
        %vm2101 = vcmp.ge.f32.partialorder %v2092, %v2100
        %v2102 = vsub.f32 %v2092, %v2100
        %v2103 = vmul.f32 %v2102, 1.442695
        %v2104 = vpow.pop %v2103
        %v2105 = vsel %vm2101, %v2104, 0.0
        %v2106 = vsel %vm2093, %v2105, 0.0
        %v2107 = vrot.slane %v2106, 4
        %v2108 = vadd.f32 %v2106, %v2107
        %v2109 = vrot.slane %v2108, 2
        %v2110 = vadd.f32 %v2108, %v2109
        %v2111 = vrot.slane %v2110, 1
        %v2112 = vadd.f32 %v2110, %v2111
        %v2113 = vrcp.pop %v2112
        %v2114 = vmul.f32 %v2105, %v2113
        %v2115 = vrot.slane %v1985, 3
        %v2117 = vsel %vm1252, %v1985, %v2115
        %s2119 = vtos %v2114
        %v2120 = vstv %s2119
        %v2122 = vmul.f32 %v2120, %v2117
        %v2123 = vrot.slane %v2114, 1
        %s2124 = vtos %v2123
        %v2125 = vstv %s2124
        %v2127 = vmul.f32 %v2125, %v2117
        %v2129 = vrot.slane %v2127, 1
        %v2131 = vadd.f32 %v2122, %v2129
        %v2132 = vrot.slane %v2114, 2
        %s2133 = vtos %v2132
        %v2134 = vstv %s2133
        %v2136 = vmul.f32 %v2134, %v2117
        %v2138 = vrot.slane %v2136, 2
        %v2140 = vadd.f32 %v2131, %v2138
        %v2141 = vrot.slane %v2114, 3
        %s2142 = vtos %v2141
        %v2143 = vstv %s2142
        %v2145 = vmul.f32 %v2143, %v2117
        %v2147 = vrot.slane %v2145, 3
        %v2149 = vadd.f32 %v2140, %v2147
        %v2150 = vrot.slane %v2114, 4
        %s2151 = vtos %v2150
        %v2152 = vstv %s2151
        %v2154 = vmul.f32 %v2152, %v2117
        %v2155 = vmul.f32 %v2152, %v2115
        %v2158 = vrot.slane %v2154, 4
        %v2159 = vrot.slane %v2155, 4
        %v2160 = vsel %vm1259, %v2158, %v2159
        %v2162 = vadd.f32 %v2149, %v2160
        %v2163 = vld [vmem:[%s29] sm:$0xff]
        %v2164 = vld [vmem:[%s29 + $0x8] sm:$0xff]
        %v2165 = vld [vmem:[%s29 + $0x10] sm:$0xff]
        %v2166 = vld [vmem:[%s29 + $0x18] sm:$0xff]
        %2168 = vrot.lane.b32.xlu0 %v2162, 64
        %v2169 = vpop.permute.xlu0 %2168
        %v2170 = vsel %vm1087, %v2169, 0
        %2172 = vmatprep.subr.mxu0 0.0
        %2173 = vmatpush1.msra.mxu0 %v2163
        %2174 = vmatprep.subr.mxu0 0.0
        %2175 = vmatpush1.msra.mxu0 %v2164
        %2176 = vmatprep.subr.mxu0 0.0
        %2177 = vmatpush1.msra.mxu0 %v2165
        %2178 = vmatprep.subr.mxu0 0.0
        %2179 = vmatpush1.msra.mxu0 %v2166
        %2180 = vmatprep.subr.mxu0 0.0
        %2181 = vmatpush1.msra.mxu0 0.0
        %2182 = vmatprep.subr.mxu0 0.0
        %2183 = vmatpush1.msra.mxu0 0.0
        %2184 = vmatprep.subr.mxu0 0.0
        %2185 = vmatpush1.msra.mxu0 0.0
        %2186 = vmatprep.subr.mxu0 0.0
        %2187 = vmatpush1.msra.mxu0 0.0
        %2188 = vmatprep.subr.mxu0 0.0
        %2189 = vmatpush1.msra.mxu0 0.0
        %2190 = vmatprep.subr.mxu0 0.0
        %2191 = vmatpush1.msra.mxu0 0.0
        %2192 = vmatprep.subr.mxu0 0.0
        %2193 = vmatpush1.msra.mxu0 0.0
        %2194 = vmatprep.subr.mxu0 0.0
        %2195 = vmatpush1.msra.mxu0 0.0
        %2196 = vmatprep.subr.mxu0 0.0
        %2197 = vmatpush1.msra.mxu0 0.0
        %2198 = vmatprep.subr.mxu0 0.0
        %2199 = vmatpush1.msra.mxu0 0.0
        %2200 = vmatprep.subr.mxu0 0.0
        %2201 = vmatpush1.msra.mxu0 0.0
        %2202 = vmatprep.subr.mxu0 0.0
        %2203 = vmatpush1.msra.mxu0 0.0
        %2204 = vmatprep.subr.mxu0 0.0
        %2205 = vmatpush1.msra.mxu0 0.0
        %2206 = vmatprep.subr.mxu0 0.0
        %2207 = vmatpush1.msra.mxu0 0.0
        %2208 = vmatprep.subr.mxu0 0.0
        %2209 = vmatpush1.msra.mxu0 0.0
        %2210 = vmatprep.subr.mxu0 0.0
        %2211 = vmatpush1.msra.mxu0 0.0
        %2212 = vmatprep.subr.mxu0 0.0
        %2213 = vmatpush1.msra.mxu0 0.0
        %2214 = vmatprep.subr.mxu0 0.0
        %2215 = vmatpush1.msra.mxu0 0.0
        %2216 = vmatprep.subr.mxu0 0.0
        %2217 = vmatpush1.msra.mxu0 0.0
        %2218 = vmatprep.subr.mxu0 0.0
        %2219 = vmatpush1.msra.mxu0 0.0
        %2220 = vmatprep.subr.mxu0 0.0
        %2221 = vmatpush1.msra.mxu0 0.0
        %2222 = vmatprep.subr.mxu0 0.0
        %2223 = vmatpush1.msra.mxu0 0.0
        %2224 = vmatprep.subr.mxu0 0.0
        %2225 = vmatpush1.msra.mxu0 0.0
        %2226 = vmatprep.subr.mxu0 0.0
        %2227 = vmatpush1.msra.mxu0 0.0
        %2228 = vmatprep.subr.mxu0 0.0
        %2229 = vmatpush1.msra.mxu0 0.0
        %2230 = vmatprep.subr.mxu0 0.0
        %2231 = vmatpush1.msra.mxu0 0.0
        %2232 = vmatprep.subr.mxu0 0.0
        %2233 = vmatpush1.msra.mxu0 0.0
        %2234 = vmatprep.subr.mxu0 0.0
        %2235 = vmatpush1.msra.mxu0 0.0
        %2236 = vmatprep.mubr.f32.mxu0 0.0
        %2237 = vmatmul.mubr.f32.gmra.mrb[0].mxu0 %v2170
        %v2238 = vpop.f32.mrb[0].mxu0
        %v2239 = vadd.f32 0.0, %v2238
        %v2240 = vpop.f32.mrb[0].mxu0
        %2241 = vdwg.mxu0
        %v2242 = vadd.f32 %v1901, %v2239
        %v2243 = vld [vmem:[%s25] sm:$0x1]
        %v2245 = vlaneseq
        %v2246 = vshrl.u32 %v2245, 7
        %v2247 = vsub.s32 0, %v2246
        %v2248 = vrot.slane %v2243, %v2247
        %v2250 = vadd.f32 %v2242, %v2248
        %v2252 = vrot.slane %v2250, 7
        %v2254 = vrot.slane %v2250, 6
        %v2256 = vrot.slane %v2250, 5
        %v2258 = vrot.slane %v2250, 4
        %v2259 = vsel %vm979, %v2250, %v2252
        %v2260 = vsel %vm1273, %v2259, %v2254
        %v2261 = vsel %vm983, %v2260, %v2256
        %v2263 = vrot.slane %v2261, 1
        %v2265 = vadd.f32 %v2261, %v2263
        %v2266 = vrot.slane %v2261, 2
        %v2268 = vadd.f32 %v2265, %v2266
        %v2269 = vrot.slane %v2261, 3
        %v2271 = vadd.f32 %v2268, %v2269
        %v2272 = vrot.slane %v2261, 4
        %v2273 = vrot.slane %v2258, 4
        %v2274 = vsel %vm1259, %v2272, %v2273
        %v2276 = vadd.f32 %v2271, %v2274
        %v2277 = vmul.f32 %v2276, 0.2
        %v2278 = vsub.f32 %v2250, %v2277
        %v2279 = vld [vmem:[%s19] sm:$0xff]
        %v2280 = vld [vmem:[%s19 + $0x8] sm:$0xff]
        %v2281 = vld [vmem:[%s19 + $0x10] sm:$0xff]
        %v2282 = vld [vmem:[%s19 + $0x18] sm:$0xff]
        %v2283 = vld [vmem:[%s13] sm:$0x1]
        %v2285 = vlaneseq
        %v2286 = vshrl.u32 %v2285, 7
        %v2287 = vsub.s32 0, %v2286
        %v2288 = vrot.slane %v2283, %v2287
        %v2291 = vsel %vm1087, %v2278, 0
        %2293 = vmatprep.subr.mxu0 0.0
        %2294 = vmatpush1.msra.mxu0 %v2279
        %2295 = vmatprep.subr.mxu0 0.0
        %2296 = vmatpush1.msra.mxu0 %v2280
        %2297 = vmatprep.subr.mxu0 0.0
        %2298 = vmatpush1.msra.mxu0 %v2281
        %2299 = vmatprep.subr.mxu0 0.0
        %2300 = vmatpush1.msra.mxu0 %v2282
        %2301 = vmatprep.subr.mxu0 0.0
        %2302 = vmatpush1.msra.mxu0 0.0
        %2303 = vmatprep.subr.mxu0 0.0
        %2304 = vmatpush1.msra.mxu0 0.0
        %2305 = vmatprep.subr.mxu0 0.0
        %2306 = vmatpush1.msra.mxu0 0.0
        %2307 = vmatprep.subr.mxu0 0.0
        %2308 = vmatpush1.msra.mxu0 0.0
        %2309 = vmatprep.subr.mxu0 0.0
        %2310 = vmatpush1.msra.mxu0 0.0
        %2311 = vmatprep.subr.mxu0 0.0
        %2312 = vmatpush1.msra.mxu0 0.0
        %2313 = vmatprep.subr.mxu0 0.0
        %2314 = vmatpush1.msra.mxu0 0.0
        %2315 = vmatprep.subr.mxu0 0.0
        %2316 = vmatpush1.msra.mxu0 0.0
        %2317 = vmatprep.subr.mxu0 0.0
        %2318 = vmatpush1.msra.mxu0 0.0
        %2319 = vmatprep.subr.mxu0 0.0
        %2320 = vmatpush1.msra.mxu0 0.0
        %2321 = vmatprep.subr.mxu0 0.0
        %2322 = vmatpush1.msra.mxu0 0.0
        %2323 = vmatprep.subr.mxu0 0.0
        %2324 = vmatpush1.msra.mxu0 0.0
        %2325 = vmatprep.subr.mxu0 0.0
        %2326 = vmatpush1.msra.mxu0 0.0
        %2327 = vmatprep.subr.mxu0 0.0
        %2328 = vmatpush1.msra.mxu0 0.0
        %2329 = vmatprep.subr.mxu0 0.0
        %2330 = vmatpush1.msra.mxu0 0.0
        %2331 = vmatprep.subr.mxu0 0.0
        %2332 = vmatpush1.msra.mxu0 0.0
        %2333 = vmatprep.subr.mxu0 0.0
        %2334 = vmatpush1.msra.mxu0 0.0
        %2335 = vmatprep.subr.mxu0 0.0
        %2336 = vmatpush1.msra.mxu0 0.0
        %2337 = vmatprep.subr.mxu0 0.0
        %2338 = vmatpush1.msra.mxu0 0.0
        %2339 = vmatprep.subr.mxu0 0.0
        %2340 = vmatpush1.msra.mxu0 0.0
        %2341 = vmatprep.subr.mxu0 0.0
        %2342 = vmatpush1.msra.mxu0 0.0
        %2343 = vmatprep.subr.mxu0 0.0
        %2344 = vmatpush1.msra.mxu0 0.0
        %2345 = vmatprep.subr.mxu0 0.0
        %2346 = vmatpush1.msra.mxu0 0.0
        %2347 = vmatprep.subr.mxu0 0.0
        %2348 = vmatpush1.msra.mxu0 0.0
        %2349 = vmatprep.subr.mxu0 0.0
        %2350 = vmatpush1.msra.mxu0 0.0
        %2351 = vmatprep.subr.mxu0 0.0
        %2352 = vmatpush1.msra.mxu0 0.0
        %2353 = vmatprep.subr.mxu0 0.0
        %2354 = vmatpush1.msra.mxu0 0.0
        %2355 = vmatprep.subr.mxu0 0.0
        %2356 = vmatpush1.msra.mxu0 0.0
        %2357 = vmatprep.mubr.f32.mxu0 0.0
        %2358 = vmatmul.mubr.f32.gmra.mrb[0].mxu0 %v2291
        %v2359 = vpop.f32.mrb[0].mxu0
        %v2360 = vadd.f32 %v2288, %v2359
        %v2361 = vpop.f32.mrb[0].mxu0
        %2362 = vdwg.mxu0
        %v2363 = vld [vmem:[%s15] sm:$0xff]
        %v2364 = vld [vmem:[%s15 + $0x8] sm:$0xff]
        %v2365 = vld [vmem:[%s15 + $0x10] sm:$0xff]
        %v2366 = vld [vmem:[%s15 + $0x18] sm:$0xff]
        %v2367 = vld [vmem:[#allocation2] sm:$0x1]
        %v2369 = vlaneseq
        %v2370 = vshrl.u32 %v2369, 7
        %v2371 = vsub.s32 0, %v2370
        %v2372 = vrot.slane %v2367, %v2371
        %v2375 = vsel %vm1087, %v1754, 0
        %2377 = vmatprep.subr.mxu0 0.0
        %2378 = vmatpush1.msra.mxu0 %v2363
        %2379 = vmatprep.subr.mxu0 0.0
        %2380 = vmatpush1.msra.mxu0 %v2364
        %2381 = vmatprep.subr.mxu0 0.0
        %2382 = vmatpush1.msra.mxu0 %v2365
        %2383 = vmatprep.subr.mxu0 0.0
        %2384 = vmatpush1.msra.mxu0 %v2366
        %2385 = vmatprep.subr.mxu0 0.0
        %2386 = vmatpush1.msra.mxu0 0.0
        %2387 = vmatprep.subr.mxu0 0.0
        %2388 = vmatpush1.msra.mxu0 0.0
        %2389 = vmatprep.subr.mxu0 0.0
        %2390 = vmatpush1.msra.mxu0 0.0
        %2391 = vmatprep.subr.mxu0 0.0
        %2392 = vmatpush1.msra.mxu0 0.0
        %2393 = vmatprep.subr.mxu0 0.0
        %2394 = vmatpush1.msra.mxu0 0.0
        %2395 = vmatprep.subr.mxu0 0.0
        %2396 = vmatpush1.msra.mxu0 0.0
        %2397 = vmatprep.subr.mxu0 0.0
        %2398 = vmatpush1.msra.mxu0 0.0
        %2399 = vmatprep.subr.mxu0 0.0
        %2400 = vmatpush1.msra.mxu0 0.0
        %2401 = vmatprep.subr.mxu0 0.0
        %2402 = vmatpush1.msra.mxu0 0.0
        %2403 = vmatprep.subr.mxu0 0.0
        %2404 = vmatpush1.msra.mxu0 0.0
        %2405 = vmatprep.subr.mxu0 0.0
        %2406 = vmatpush1.msra.mxu0 0.0
        %2407 = vmatprep.subr.mxu0 0.0
        %2408 = vmatpush1.msra.mxu0 0.0
        %2409 = vmatprep.subr.mxu0 0.0
        %2410 = vmatpush1.msra.mxu0 0.0
        %2411 = vmatprep.subr.mxu0 0.0
        %2412 = vmatpush1.msra.mxu0 0.0
        %2413 = vmatprep.subr.mxu0 0.0
        %2414 = vmatpush1.msra.mxu0 0.0
        %2415 = vmatprep.subr.mxu0 0.0
        %2416 = vmatpush1.msra.mxu0 0.0
        %2417 = vmatprep.subr.mxu0 0.0
        %2418 = vmatpush1.msra.mxu0 0.0
        %2419 = vmatprep.subr.mxu0 0.0
        %2420 = vmatpush1.msra.mxu0 0.0
        %2421 = vmatprep.subr.mxu0 0.0
        %2422 = vmatpush1.msra.mxu0 0.0
        %2423 = vmatprep.subr.mxu0 0.0
        %2424 = vmatpush1.msra.mxu0 0.0
        %2425 = vmatprep.subr.mxu0 0.0
        %2426 = vmatpush1.msra.mxu0 0.0
        %2427 = vmatprep.subr.mxu0 0.0
        %2428 = vmatpush1.msra.mxu0 0.0
        %2429 = vmatprep.subr.mxu0 0.0
        %2430 = vmatpush1.msra.mxu0 0.0
        %2431 = vmatprep.subr.mxu0 0.0
        %2432 = vmatpush1.msra.mxu0 0.0
        %2433 = vmatprep.subr.mxu0 0.0
        %2434 = vmatpush1.msra.mxu0 0.0
        %2435 = vmatprep.subr.mxu0 0.0
        %2436 = vmatpush1.msra.mxu0 0.0
        %2437 = vmatprep.subr.mxu0 0.0
        %2438 = vmatpush1.msra.mxu0 0.0
        %2439 = vmatprep.subr.mxu0 0.0
        %2440 = vmatpush1.msra.mxu0 0.0
        %2441 = vmatprep.mubr.f32.mxu0 0.0
        %2442 = vmatmul.mubr.f32.gmra.mrb[0].mxu0 %v2375
        %v2443 = vpop.f32.mrb[0].mxu0
        %v2444 = vadd.f32 %v2372, %v2443
        %v2445 = vpop.f32.mrb[0].mxu0
        %2446 = vdwg.mxu0
        %v2448 = vsel %vm1087, %v2360, 0
        %v2451 = vsel %vm1087, %v2444, 0
        %2453 = vmatprep.subr.mxu0 0.0
        %2454 = vmatpush1.xpose.msra.mxu0 %v2451
        %2455 = vmatprep.subr.mxu0 0.0
        %2456 = vmatpush1.xpose.msra.mxu0 0.0
        %2457 = vmatprep.subr.mxu0 0.0
        %2458 = vmatpush1.xpose.msra.mxu0 0.0
        %2459 = vmatprep.subr.mxu0 0.0
        %2460 = vmatpush1.xpose.msra.mxu0 0.0
        %2461 = vmatprep.subr.mxu0 0.0
        %2462 = vmatpush1.xpose.msra.mxu0 0.0
        %2463 = vmatprep.subr.mxu0 0.0
        %2464 = vmatpush1.xpose.msra.mxu0 0.0
        %2465 = vmatprep.subr.mxu0 0.0
        %2466 = vmatpush1.xpose.msra.mxu0 0.0
        %2467 = vmatprep.subr.mxu0 0.0
        %2468 = vmatpush1.xpose.msra.mxu0 0.0
        %2469 = vmatprep.subr.mxu0 0.0
        %2470 = vmatpush1.xpose.msra.mxu0 0.0
        %2471 = vmatprep.subr.mxu0 0.0
        %2472 = vmatpush1.xpose.msra.mxu0 0.0
        %2473 = vmatprep.subr.mxu0 0.0
        %2474 = vmatpush1.xpose.msra.mxu0 0.0
        %2475 = vmatprep.subr.mxu0 0.0
        %2476 = vmatpush1.xpose.msra.mxu0 0.0
        %2477 = vmatprep.subr.mxu0 0.0
        %2478 = vmatpush1.xpose.msra.mxu0 0.0
        %2479 = vmatprep.subr.mxu0 0.0
        %2480 = vmatpush1.xpose.msra.mxu0 0.0
        %2481 = vmatprep.subr.mxu0 0.0
        %2482 = vmatpush1.xpose.msra.mxu0 0.0
        %2483 = vmatprep.subr.mxu0 0.0
        %2484 = vmatpush1.xpose.msra.mxu0 0.0
        %2485 = vmatprep.subr.mxu0 0.0
        %2486 = vmatpush1.xpose.msra.mxu0 0.0
        %2487 = vmatprep.subr.mxu0 0.0
        %2488 = vmatpush1.xpose.msra.mxu0 0.0
        %2489 = vmatprep.subr.mxu0 0.0
        %2490 = vmatpush1.xpose.msra.mxu0 0.0
        %2491 = vmatprep.subr.mxu0 0.0
        %2492 = vmatpush1.xpose.msra.mxu0 0.0
        %2493 = vmatprep.subr.mxu0 0.0
        %2494 = vmatpush1.xpose.msra.mxu0 0.0
        %2495 = vmatprep.subr.mxu0 0.0
        %2496 = vmatpush1.xpose.msra.mxu0 0.0
        %2497 = vmatprep.subr.mxu0 0.0
        %2498 = vmatpush1.xpose.msra.mxu0 0.0
        %2499 = vmatprep.subr.mxu0 0.0
        %2500 = vmatpush1.xpose.msra.mxu0 0.0
        %2501 = vmatprep.subr.mxu0 0.0
        %2502 = vmatpush1.xpose.msra.mxu0 0.0
        %2503 = vmatprep.subr.mxu0 0.0
        %2504 = vmatpush1.xpose.msra.mxu0 0.0
        %2505 = vmatprep.subr.mxu0 0.0
        %2506 = vmatpush1.xpose.msra.mxu0 0.0
        %2507 = vmatprep.subr.mxu0 0.0
        %2508 = vmatpush1.xpose.msra.mxu0 0.0
        %2509 = vmatprep.subr.mxu0 0.0
        %2510 = vmatpush1.xpose.msra.mxu0 0.0
        %2511 = vmatprep.subr.mxu0 0.0
        %2512 = vmatpush1.xpose.msra.mxu0 0.0
        %2513 = vmatprep.subr.mxu0 0.0
        %2514 = vmatpush1.xpose.msra.mxu0 0.0
        %2515 = vmatprep.subr.mxu0 0.0
        %2516 = vmatpush1.xpose.msra.mxu0 0.0
        %2517 = vmatprep.mubr.f32.mxu0 0.0
        %2518 = vmatmul.mubr.f32.gmra.mrb[0].mxu0 %v2448
        %v2519 = vpop.f32.mrb[0].mxu0
        %v2520 = vadd.f32 0.0, %v2519
        %v2521 = vpop.f32.mrb[0].mxu0
        %2522 = vdwg.mxu0
        %v2524 = vrot.slane %v2520, 3
        %v2526 = vsel %vm1252, %v2520, %v2524
        %v2528 = vrot.slane %v2526, 1
        %2529 = vrot.lane.b32.xlu0 %v2528, 127
        %v2530 = vpop.permute.xlu0 %2529
        %v2532 = vadd.f32 %v2526, %v2530
        %v2533 = vrot.slane %v2526, 2
        %2534 = vrot.lane.b32.xlu0 %v2533, 126
        %v2535 = vpop.permute.xlu0 %2534
        %v2537 = vadd.f32 %v2532, %v2535
        %v2538 = vrot.slane %v2526, 3
        %2539 = vrot.lane.b32.xlu0 %v2538, 125
        %v2540 = vpop.permute.xlu0 %2539
        %v2542 = vadd.f32 %v2537, %v2540
        %v2543 = vrot.slane %v2526, 4
        %v2544 = vrot.slane %v2524, 4
        %v2545 = vsel %vm1259, %v2543, %v2544
        %2546 = vrot.lane.b32.xlu0 %v2545, 124
        %v2547 = vpop.permute.xlu0 %2546
        %v2549 = vadd.f32 %v2542, %v2547
        %v2550 = vmul.f32 %v2549, 0.03125
        %v2551 = vsel %vm2093, %v2550, -inf
        %v2552 = vrot.slane %v2551, 4
        %v2553 = vmax.f32 %v2551, %v2552
        %v2554 = vrot.slane %v2553, 2
        %v2555 = vmax.f32 %v2553, %v2554
        %v2556 = vrot.slane %v2555, 1
        %v2557 = vmax.f32 %v2555, %v2556
        %vm2558 = vcmp.ge.f32.partialorder %v2550, %v2557
        %v2559 = vsub.f32 %v2550, %v2557
        %v2560 = vmul.f32 %v2559, 1.442695
        %v2561 = vpow.pop %v2560
        %v2562 = vsel %vm2558, %v2561, 0.0
        %v2563 = vsel %vm2093, %v2562, 0.0
        %v2564 = vrot.slane %v2563, 4
        %v2565 = vadd.f32 %v2563, %v2564
        %v2566 = vrot.slane %v2565, 2
        %v2567 = vadd.f32 %v2565, %v2566
        %v2568 = vrot.slane %v2567, 1
        %v2569 = vadd.f32 %v2567, %v2568
        %v2570 = vrcp.pop %v2569
        %v2571 = vmul.f32 %v2562, %v2570
        %v2572 = vrot.slane %v2444, 3
        %v2574 = vsel %vm1252, %v2444, %v2572
        %s2576 = vtos %v2571
        %v2577 = vstv %s2576
        %v2579 = vmul.f32 %v2577, %v2574
        %v2580 = vrot.slane %v2571, 1
        %s2581 = vtos %v2580
        %v2582 = vstv %s2581
        %v2584 = vmul.f32 %v2582, %v2574
        %v2586 = vrot.slane %v2584, 1
        %v2588 = vadd.f32 %v2579, %v2586
        %v2589 = vrot.slane %v2571, 2
        %s2590 = vtos %v2589
        %v2591 = vstv %s2590
        %v2593 = vmul.f32 %v2591, %v2574
        %v2595 = vrot.slane %v2593, 2
        %v2597 = vadd.f32 %v2588, %v2595
        %v2598 = vrot.slane %v2571, 3
        %s2599 = vtos %v2598
        %v2600 = vstv %s2599
        %v2602 = vmul.f32 %v2600, %v2574
        %v2604 = vrot.slane %v2602, 3
        %v2606 = vadd.f32 %v2597, %v2604
        %v2607 = vrot.slane %v2571, 4
        %s2608 = vtos %v2607
        %v2609 = vstv %s2608
        %v2611 = vmul.f32 %v2609, %v2574
        %v2612 = vmul.f32 %v2609, %v2572
        %v2615 = vrot.slane %v2611, 4
        %v2616 = vrot.slane %v2612, 4
        %v2617 = vsel %vm1259, %v2615, %v2616
        %v2619 = vadd.f32 %v2606, %v2617
        %v2620 = vld [vmem:[%s17] sm:$0xff]
        %v2621 = vld [vmem:[%s17 + $0x8] sm:$0xff]
        %v2622 = vld [vmem:[%s17 + $0x10] sm:$0xff]
        %v2623 = vld [vmem:[%s17 + $0x18] sm:$0xff]
        %2625 = vrot.lane.b32.xlu0 %v2619, 96
        %v2626 = vpop.permute.xlu0 %2625
        %v2627 = vsel %vm1087, %v2626, 0
        %2629 = vmatprep.subr.mxu0 0.0
        %2630 = vmatpush1.msra.mxu0 %v2620
        %2631 = vmatprep.subr.mxu0 0.0
        %2632 = vmatpush1.msra.mxu0 %v2621
        %2633 = vmatprep.subr.mxu0 0.0
        %2634 = vmatpush1.msra.mxu0 %v2622
        %2635 = vmatprep.subr.mxu0 0.0
        %2636 = vmatpush1.msra.mxu0 %v2623
        %2637 = vmatprep.subr.mxu0 0.0
        %2638 = vmatpush1.msra.mxu0 0.0
        %2639 = vmatprep.subr.mxu0 0.0
        %2640 = vmatpush1.msra.mxu0 0.0
        %2641 = vmatprep.subr.mxu0 0.0
        %2642 = vmatpush1.msra.mxu0 0.0
        %2643 = vmatprep.subr.mxu0 0.0
        %2644 = vmatpush1.msra.mxu0 0.0
        %2645 = vmatprep.subr.mxu0 0.0
        %2646 = vmatpush1.msra.mxu0 0.0
        %2647 = vmatprep.subr.mxu0 0.0
        %2648 = vmatpush1.msra.mxu0 0.0
        %2649 = vmatprep.subr.mxu0 0.0
        %2650 = vmatpush1.msra.mxu0 0.0
        %2651 = vmatprep.subr.mxu0 0.0
        %2652 = vmatpush1.msra.mxu0 0.0
        %2653 = vmatprep.subr.mxu0 0.0
        %2654 = vmatpush1.msra.mxu0 0.0
        %2655 = vmatprep.subr.mxu0 0.0
        %2656 = vmatpush1.msra.mxu0 0.0
        %2657 = vmatprep.subr.mxu0 0.0
        %2658 = vmatpush1.msra.mxu0 0.0
        %2659 = vmatprep.subr.mxu0 0.0
        %2660 = vmatpush1.msra.mxu0 0.0
        %2661 = vmatprep.subr.mxu0 0.0
        %2662 = vmatpush1.msra.mxu0 0.0
        %2663 = vmatprep.subr.mxu0 0.0
        %2664 = vmatpush1.msra.mxu0 0.0
        %2665 = vmatprep.subr.mxu0 0.0
        %2666 = vmatpush1.msra.mxu0 0.0
        %2667 = vmatprep.subr.mxu0 0.0
        %2668 = vmatpush1.msra.mxu0 0.0
        %2669 = vmatprep.subr.mxu0 0.0
        %2670 = vmatpush1.msra.mxu0 0.0
        %2671 = vmatprep.subr.mxu0 0.0
        %2672 = vmatpush1.msra.mxu0 0.0
        %2673 = vmatprep.subr.mxu0 0.0
        %2674 = vmatpush1.msra.mxu0 0.0
        %2675 = vmatprep.subr.mxu0 0.0
        %2676 = vmatpush1.msra.mxu0 0.0
        %2677 = vmatprep.subr.mxu0 0.0
        %2678 = vmatpush1.msra.mxu0 0.0
        %2679 = vmatprep.subr.mxu0 0.0
        %2680 = vmatpush1.msra.mxu0 0.0
        %2681 = vmatprep.subr.mxu0 0.0
        %2682 = vmatpush1.msra.mxu0 0.0
        %2683 = vmatprep.subr.mxu0 0.0
        %2684 = vmatpush1.msra.mxu0 0.0
        %2685 = vmatprep.subr.mxu0 0.0
        %2686 = vmatpush1.msra.mxu0 0.0
        %2687 = vmatprep.subr.mxu0 0.0
        %2688 = vmatpush1.msra.mxu0 0.0
        %2689 = vmatprep.subr.mxu0 0.0
        %2690 = vmatpush1.msra.mxu0 0.0
        %2691 = vmatprep.subr.mxu0 0.0
        %2692 = vmatpush1.msra.mxu0 0.0
        %2693 = vmatprep.mubr.f32.mxu0 0.0
        %2694 = vmatmul.mubr.f32.gmra.mrb[0].mxu0 %v2627
        %v2695 = vpop.f32.mrb[0].mxu0
        %v2696 = vadd.f32 0.0, %v2695
        %v2697 = vpop.f32.mrb[0].mxu0
        %2698 = vdwg.mxu0
        %v2699 = vadd.f32 %v2278, %v2696
        %v2700 = vld [vmem:[%s11] sm:$0x1]
        %v2702 = vlaneseq
        %v2703 = vshrl.u32 %v2702, 7
        %v2704 = vsub.s32 0, %v2703
        %v2705 = vrot.slane %v2700, %v2704
        %v2707 = vadd.f32 %v2699, %v2705
        %v2709 = vrot.slane %v2707, 7
        %v2711 = vrot.slane %v2707, 6
        %v2713 = vrot.slane %v2707, 5
        %v2715 = vrot.slane %v2707, 4
        %v2716 = vsel %vm979, %v2707, %v2709
        %v2717 = vsel %vm1273, %v2716, %v2711
        %v2718 = vsel %vm983, %v2717, %v2713
        %v2720 = vrot.slane %v2718, 1
        %v2722 = vadd.f32 %v2718, %v2720
        %v2723 = vrot.slane %v2718, 2
        %v2725 = vadd.f32 %v2722, %v2723
        %v2726 = vrot.slane %v2718, 3
        %v2728 = vadd.f32 %v2725, %v2726
        %v2729 = vrot.slane %v2718, 4
        %v2730 = vrot.slane %v2715, 4
        %v2731 = vsel %vm1259, %v2729, %v2730
        %v2733 = vadd.f32 %v2728, %v2731
        %v2734 = vmul.f32 %v2733, 0.2
        %v2735 = vsub.f32 %v2707, %v2734
        %v2736 = vld [vmem:[%s21] sm:$0xff]
        %v2737 = vld [vmem:[%s21 + $0x8] sm:$0xff]
        %v2738 = vld [vmem:[%s21 + $0x10] sm:$0xff]
        %v2739 = vld [vmem:[%s21 + $0x18] sm:$0xff]
        %v2741 = vsel %vm1087, %v2735, 0
        %2743 = vmatprep.subr.mxu0 0.0
        %2744 = vmatpush1.msra.mxu0 %v2736
        %2745 = vmatprep.subr.mxu0 0.0
        %2746 = vmatpush1.msra.mxu0 %v2737
        %2747 = vmatprep.subr.mxu0 0.0
        %2748 = vmatpush1.msra.mxu0 %v2738
        %2749 = vmatprep.subr.mxu0 0.0
        %2750 = vmatpush1.msra.mxu0 %v2739
        %2751 = vmatprep.subr.mxu0 0.0
        %2752 = vmatpush1.msra.mxu0 0.0
        %2753 = vmatprep.subr.mxu0 0.0
        %2754 = vmatpush1.msra.mxu0 0.0
        %2755 = vmatprep.subr.mxu0 0.0
        %2756 = vmatpush1.msra.mxu0 0.0
        %2757 = vmatprep.subr.mxu0 0.0
        %2758 = vmatpush1.msra.mxu0 0.0
        %2759 = vmatprep.subr.mxu0 0.0
        %2760 = vmatpush1.msra.mxu0 0.0
        %2761 = vmatprep.subr.mxu0 0.0
        %2762 = vmatpush1.msra.mxu0 0.0
        %2763 = vmatprep.subr.mxu0 0.0
        %2764 = vmatpush1.msra.mxu0 0.0
        %2765 = vmatprep.subr.mxu0 0.0
        %2766 = vmatpush1.msra.mxu0 0.0
        %2767 = vmatprep.subr.mxu0 0.0
        %2768 = vmatpush1.msra.mxu0 0.0
        %2769 = vmatprep.subr.mxu0 0.0
        %2770 = vmatpush1.msra.mxu0 0.0
        %2771 = vmatprep.subr.mxu0 0.0
        %2772 = vmatpush1.msra.mxu0 0.0
        %2773 = vmatprep.subr.mxu0 0.0
        %2774 = vmatpush1.msra.mxu0 0.0
        %2775 = vmatprep.subr.mxu0 0.0
        %2776 = vmatpush1.msra.mxu0 0.0
        %2777 = vmatprep.subr.mxu0 0.0
        %2778 = vmatpush1.msra.mxu0 0.0
        %2779 = vmatprep.subr.mxu0 0.0
        %2780 = vmatpush1.msra.mxu0 0.0
        %2781 = vmatprep.subr.mxu0 0.0
        %2782 = vmatpush1.msra.mxu0 0.0
        %2783 = vmatprep.subr.mxu0 0.0
        %2784 = vmatpush1.msra.mxu0 0.0
        %2785 = vmatprep.subr.mxu0 0.0
        %2786 = vmatpush1.msra.mxu0 0.0
        %2787 = vmatprep.subr.mxu0 0.0
        %2788 = vmatpush1.msra.mxu0 0.0
        %2789 = vmatprep.subr.mxu0 0.0
        %2790 = vmatpush1.msra.mxu0 0.0
        %2791 = vmatprep.subr.mxu0 0.0
        %2792 = vmatpush1.msra.mxu0 0.0
        %2793 = vmatprep.subr.mxu0 0.0
        %2794 = vmatpush1.msra.mxu0 0.0
        %2795 = vmatprep.subr.mxu0 0.0
        %2796 = vmatpush1.msra.mxu0 0.0
        %2797 = vmatprep.subr.mxu0 0.0
        %2798 = vmatpush1.msra.mxu0 0.0
        %2799 = vmatprep.subr.mxu0 0.0
        %2800 = vmatpush1.msra.mxu0 0.0
        %2801 = vmatprep.subr.mxu0 0.0
        %2802 = vmatpush1.msra.mxu0 0.0
        %2803 = vmatprep.subr.mxu0 0.0
        %2804 = vmatpush1.msra.mxu0 0.0
        %2805 = vmatprep.subr.mxu0 0.0
        %2806 = vmatpush1.msra.mxu0 0.0
        %2807 = vmatprep.mubr.f32.mxu0 0.0
        %2808 = vmatmul.mubr.f32.gmra.mrb[0].mxu0 %v2741
        %v2809 = vpop.f32.mrb[0].mxu0
        %v2810 = vadd.f32 0.0, %v2809
        %v2811 = vpop.f32.mrb[0].mxu0
        %2812 = vdwg.mxu0
        %v2813 = vmax.f32 %v2810, 0.0
        %v2814 = vld [vmem:[%s23] sm:$0xff]
        %v2815 = vld [vmem:[%s23 + $0x8] sm:$0xff]
        %v2816 = vld [vmem:[%s23 + $0x10] sm:$0xff]
        %v2817 = vld [vmem:[%s23 + $0x18] sm:$0xff]
        %v2818 = vld [vmem:[%s23 + $0x20] sm:$0xff]
        %v2819 = vld [vmem:[%s23 + $0x28] sm:$0xff]
        %v2820 = vld [vmem:[%s23 + $0x30] sm:$0xff]
        %v2821 = vld [vmem:[%s23 + $0x38] sm:$0xff]
        %v2823 = vsel %vm1603, %v2813, 0
        %2825 = vmatprep.subr.mxu0 0.0
        %2826 = vmatpush1.msra.mxu0 %v2814
        %2827 = vmatprep.subr.mxu0 0.0
        %2828 = vmatpush1.msra.mxu0 %v2815
        %2829 = vmatprep.subr.mxu0 0.0
        %2830 = vmatpush1.msra.mxu0 %v2816
        %2831 = vmatprep.subr.mxu0 0.0
        %2832 = vmatpush1.msra.mxu0 %v2817
        %2833 = vmatprep.subr.mxu0 0.0
        %2834 = vmatpush1.msra.mxu0 %v2818
        %2835 = vmatprep.subr.mxu0 0.0
        %2836 = vmatpush1.msra.mxu0 %v2819
        %2837 = vmatprep.subr.mxu0 0.0
        %2838 = vmatpush1.msra.mxu0 %v2820
        %2839 = vmatprep.subr.mxu0 0.0
        %2840 = vmatpush1.msra.mxu0 %v2821
        %2841 = vmatprep.subr.mxu0 0.0
        %2842 = vmatpush1.msra.mxu0 0.0
        %2843 = vmatprep.subr.mxu0 0.0
        %2844 = vmatpush1.msra.mxu0 0.0
        %2845 = vmatprep.subr.mxu0 0.0
        %2846 = vmatpush1.msra.mxu0 0.0
        %2847 = vmatprep.subr.mxu0 0.0
        %2848 = vmatpush1.msra.mxu0 0.0
        %2849 = vmatprep.subr.mxu0 0.0
        %2850 = vmatpush1.msra.mxu0 0.0
        %2851 = vmatprep.subr.mxu0 0.0
        %2852 = vmatpush1.msra.mxu0 0.0
        %2853 = vmatprep.subr.mxu0 0.0
        %2854 = vmatpush1.msra.mxu0 0.0
        %2855 = vmatprep.subr.mxu0 0.0
        %2856 = vmatpush1.msra.mxu0 0.0
        %2857 = vmatprep.subr.mxu0 0.0
        %2858 = vmatpush1.msra.mxu0 0.0
        %2859 = vmatprep.subr.mxu0 0.0
        %2860 = vmatpush1.msra.mxu0 0.0
        %2861 = vmatprep.subr.mxu0 0.0
        %2862 = vmatpush1.msra.mxu0 0.0
        %2863 = vmatprep.subr.mxu0 0.0
        %2864 = vmatpush1.msra.mxu0 0.0
        %2865 = vmatprep.subr.mxu0 0.0
        %2866 = vmatpush1.msra.mxu0 0.0
        %2867 = vmatprep.subr.mxu0 0.0
        %2868 = vmatpush1.msra.mxu0 0.0
        %2869 = vmatprep.subr.mxu0 0.0
        %2870 = vmatpush1.msra.mxu0 0.0
        %2871 = vmatprep.subr.mxu0 0.0
        %2872 = vmatpush1.msra.mxu0 0.0
        %2873 = vmatprep.subr.mxu0 0.0
        %2874 = vmatpush1.msra.mxu0 0.0
        %2875 = vmatprep.subr.mxu0 0.0
        %2876 = vmatpush1.msra.mxu0 0.0
        %2877 = vmatprep.subr.mxu0 0.0
        %2878 = vmatpush1.msra.mxu0 0.0
        %2879 = vmatprep.subr.mxu0 0.0
        %2880 = vmatpush1.msra.mxu0 0.0
        %2881 = vmatprep.subr.mxu0 0.0
        %2882 = vmatpush1.msra.mxu0 0.0
        %2883 = vmatprep.subr.mxu0 0.0
        %2884 = vmatpush1.msra.mxu0 0.0
        %2885 = vmatprep.subr.mxu0 0.0
        %2886 = vmatpush1.msra.mxu0 0.0
        %2887 = vmatprep.subr.mxu0 0.0
        %2888 = vmatpush1.msra.mxu0 0.0
        %2889 = vmatprep.mubr.f32.mxu0 0.0
        %2890 = vmatmul.mubr.f32.gmra.mrb[0].mxu0 %v2823
        %v2891 = vpop.f32.mrb[0].mxu0
        %v2892 = vadd.f32 0.0, %v2891
        %v2893 = vpop.f32.mrb[0].mxu0
        %2894 = vdwg.mxu0
        %v2895 = vadd.f32 %v2735, %v2892
        %v2897 = vrot.slane %v2895, 7
        %v2899 = vrot.slane %v2895, 6
        %v2901 = vrot.slane %v2895, 5
        %v2903 = vrot.slane %v2895, 4
        %v2904 = vsel %vm979, %v2895, %v2897
        %v2905 = vsel %vm1273, %v2904, %v2899
        %v2906 = vsel %vm983, %v2905, %v2901
        %v2908 = vrot.slane %v2906, 1
        %v2910 = vadd.f32 %v2906, %v2908
        %v2911 = vrot.slane %v2906, 2
        %v2913 = vadd.f32 %v2910, %v2911
        %v2914 = vrot.slane %v2906, 3
        %v2916 = vadd.f32 %v2913, %v2914
        %v2917 = vrot.slane %v2906, 4
        %v2918 = vrot.slane %v2903, 4
        %v2919 = vsel %vm1259, %v2917, %v2918
        %v2921 = vadd.f32 %v2916, %v2919
        %v2922 = vmul.f32 %v2921, 0.2
        %v2923 = vsub.f32 %v2895, %v2922
        %v2924 = vadd.f32 %v2277, %v2734
        %v2925 = vadd.f32 %v2924, %v2922
        %v2926 = vld [vmem:[%s33] sm:$0xff]
        %v2927 = vld [vmem:[%s33 + $0x8] sm:$0xff]
        %v2928 = vld [vmem:[%s33 + $0x10] sm:$0xff]
        %v2929 = vld [vmem:[%s33 + $0x18] sm:$0xff]
        %v2930 = vld [vmem:[%s33 + $0x20] sm:$0xff]
        %v2931 = vld [vmem:[%s33 + $0x28] sm:$0xff]
        %v2932 = vld [vmem:[%s33 + $0x30] sm:$0xff]
        %v2933 = vld [vmem:[%s33 + $0x38] sm:$0xff]
        %v2934 = vld [vmem:[%s33 + $0x40] sm:$0xff]
        %v2935 = vld [vmem:[%s33 + $0x48] sm:$0xff]
        %v2936 = vld [vmem:[%s33 + $0x50] sm:$0xff]
        %v2937 = vld [vmem:[%s33 + $0x58] sm:$0xff]
        %v2939 = vrot.slane %v2925, 4
        %v2941 = vrot.slane %v2925, 7
        %v2943 = vsel %vm979, %v2939, %v2941
        %v2944 = vrot.slane %v2925, 1
        %v2946 = vsel %vm1259, %v2944, %v2939
        %2947 = vrot.lane.b32.xlu0 %v2925, 32
        %v2948 = vpop.permute.xlu0 %2947
        %2951 = vrot.lane.b32.xlu0 %v2946, 64
        %v2952 = vpop.permute.xlu0 %2951
        %v2954 = vsel %vm1087, %v2943, %v2948
        %v2955 = vsel %vm1603, %v2954, %v2952
        %vm2956 = vcmask 785408
        %v2958 = vsel %vm2956, %v2955, 0
        %2960 = vmatprep.subr.mxu0 0.0
        %2961 = vmatpush1.msra.mxu0 %v2926
        %2962 = vmatprep.subr.mxu0 0.0
        %2963 = vmatpush1.msra.mxu0 %v2927
        %2964 = vmatprep.subr.mxu0 0.0
        %2965 = vmatpush1.msra.mxu0 %v2928
        %2966 = vmatprep.subr.mxu0 0.0
        %2967 = vmatpush1.msra.mxu0 %v2929
        %2968 = vmatprep.subr.mxu0 0.0
        %2969 = vmatpush1.msra.mxu0 %v2930
        %2970 = vmatprep.subr.mxu0 0.0
        %2971 = vmatpush1.msra.mxu0 %v2931
        %2972 = vmatprep.subr.mxu0 0.0
        %2973 = vmatpush1.msra.mxu0 %v2932
        %2974 = vmatprep.subr.mxu0 0.0
        %2975 = vmatpush1.msra.mxu0 %v2933
        %2976 = vmatprep.subr.mxu0 0.0
        %2977 = vmatpush1.msra.mxu0 %v2934
        %2978 = vmatprep.subr.mxu0 0.0
        %2979 = vmatpush1.msra.mxu0 %v2935
        %2980 = vmatprep.subr.mxu0 0.0
        %2981 = vmatpush1.msra.mxu0 %v2936
        %2982 = vmatprep.subr.mxu0 0.0
        %2983 = vmatpush1.msra.mxu0 %v2937
        %2984 = vmatprep.subr.mxu0 0.0
        %2985 = vmatpush1.msra.mxu0 0.0
        %2986 = vmatprep.subr.mxu0 0.0
        %2987 = vmatpush1.msra.mxu0 0.0
        %2988 = vmatprep.subr.mxu0 0.0
        %2989 = vmatpush1.msra.mxu0 0.0
        %2990 = vmatprep.subr.mxu0 0.0
        %2991 = vmatpush1.msra.mxu0 0.0
        %2992 = vmatprep.subr.mxu0 0.0
        %2993 = vmatpush1.msra.mxu0 0.0
        %2994 = vmatprep.subr.mxu0 0.0
        %2995 = vmatpush1.msra.mxu0 0.0
        %2996 = vmatprep.subr.mxu0 0.0
        %2997 = vmatpush1.msra.mxu0 0.0
        %2998 = vmatprep.subr.mxu0 0.0
        %2999 = vmatpush1.msra.mxu0 0.0
        %3000 = vmatprep.subr.mxu0 0.0
        %3001 = vmatpush1.msra.mxu0 0.0
        %3002 = vmatprep.subr.mxu0 0.0
        %3003 = vmatpush1.msra.mxu0 0.0
        %3004 = vmatprep.subr.mxu0 0.0
        %3005 = vmatpush1.msra.mxu0 0.0
        %3006 = vmatprep.subr.mxu0 0.0
        %3007 = vmatpush1.msra.mxu0 0.0
        %3008 = vmatprep.subr.mxu0 0.0
        %3009 = vmatpush1.msra.mxu0 0.0
        %3010 = vmatprep.subr.mxu0 0.0
        %3011 = vmatpush1.msra.mxu0 0.0
        %3012 = vmatprep.subr.mxu0 0.0
        %3013 = vmatpush1.msra.mxu0 0.0
        %3014 = vmatprep.subr.mxu0 0.0
        %3015 = vmatpush1.msra.mxu0 0.0
        %3016 = vmatprep.subr.mxu0 0.0
        %3017 = vmatpush1.msra.mxu0 0.0
        %3018 = vmatprep.subr.mxu0 0.0
        %3019 = vmatpush1.msra.mxu0 0.0
        %3020 = vmatprep.subr.mxu0 0.0
        %3021 = vmatpush1.msra.mxu0 0.0
        %3022 = vmatprep.subr.mxu0 0.0
        %3023 = vmatpush1.msra.mxu0 0.0
        %3024 = vmatprep.mubr.f32.mxu0 0.0
        %3025 = vmatmul.mubr.f32.gmra.mrb[0].mxu0 %v2958
        %v3026 = vpop.f32.mrb[0].mxu0
        %v3027 = vadd.f32 0.0, %v3026
        %v3028 = vpop.f32.mrb[0].mxu0
        %3029 = vdwg.mxu0
        %v3030 = vadd.f32 %v1800, %v3027
        %v3031 = vld [vmem:[%s37] sm:$0x1]
        %v3032 = vld [vmem:[%s35] sm:$0x1]
        %vm3033 = vcmask 258048
        %v3034 = vsel %vm3033, %v2923, 0.0
        %3035 = vadd.xlane.f32.xlu0 %v3034
        %v3036 = vpop.xlane.xlu0 %3035
        %v3037 = vmul.f32 %v3036, %v1720
        %v3038 = vsub.f32 %v2923, %v3037
        %v3039 = vmul.f32 %v3038, %v3038
        %v3040 = vsel %vm3033, %v3039, 0.0
        %3041 = vadd.xlane.f32.xlu0 %v3040
        %v3042 = vpop.xlane.xlu0 %3041
        %v3043 = vmul.f32 %v3042, %v1720
        %v3044 = vadd.f32 %v3043, 1e-05
        %v3045 = vrsqrt.pop %v3044
        %v3046 = vmul.f32 %v3038, %v3045
        %v3048 = vlaneseq
        %v3049 = vshrl.u32 %v3048, 7
        %v3050 = vsub.s32 0, %v3049
        %v3051 = vrot.slane %v3031, %v3050
        %v3053 = vmul.f32 %v3046, %v3051
        %v3055 = vlaneseq
        %v3056 = vshrl.u32 %v3055, 7
        %v3057 = vsub.s32 0, %v3056
        %v3058 = vrot.slane %v3032, %v3057
        %v3060 = vadd.f32 %v3053, %v3058
        %v3061 = vsel %vm3033, %v3060, 0.0
        %v3062 = vrot.slane %v3061, 4
        %v3063 = vadd.f32 %v3061, %v3062
        %v3064 = vrot.slane %v3063, 2
        %v3065 = vadd.f32 %v3063, %v3064
        %v3066 = vrot.slane %v3065, 1
        %v3067 = vadd.f32 %v3065, %v3066
        %v3068 = vrcp.pop 5.0
        %v3069 = vmul.f32 %v3067, %v3068
        %v3070 = vsub.f32 %v3060, %v3069
        %v3071 = vld [vmem:[%s41] sm:$0xff]
        %v3072 = vld [vmem:[%s41 + $0x8] sm:$0xff]
        %v3073 = vld [vmem:[%s41 + $0x10] sm:$0xff]
        %v3074 = vld [vmem:[%s41 + $0x18] sm:$0xff]
        %v3075 = vld [vmem:[%s39] sm:$0x1]
        %v3077 = vrot.slane %v3070, 4
        %v3078 = vsel %vm1087, %v3077, 0
        %3080 = vmatprep.subr.mxu0 0.0
        %3081 = vmatpush1.msra.mxu0 %v3071
        %3082 = vmatprep.subr.mxu0 0.0
        %3083 = vmatpush1.msra.mxu0 %v3072
        %3084 = vmatprep.subr.mxu0 0.0
        %3085 = vmatpush1.msra.mxu0 %v3073
        %3086 = vmatprep.subr.mxu0 0.0
        %3087 = vmatpush1.msra.mxu0 %v3074
        %3088 = vmatprep.subr.mxu0 0.0
        %3089 = vmatpush1.msra.mxu0 0.0
        %3090 = vmatprep.subr.mxu0 0.0
        %3091 = vmatpush1.msra.mxu0 0.0
        %3092 = vmatprep.subr.mxu0 0.0
        %3093 = vmatpush1.msra.mxu0 0.0
        %3094 = vmatprep.subr.mxu0 0.0
        %3095 = vmatpush1.msra.mxu0 0.0
        %3096 = vmatprep.subr.mxu0 0.0
        %3097 = vmatpush1.msra.mxu0 0.0
        %3098 = vmatprep.subr.mxu0 0.0
        %3099 = vmatpush1.msra.mxu0 0.0
        %3100 = vmatprep.subr.mxu0 0.0
        %3101 = vmatpush1.msra.mxu0 0.0
        %3102 = vmatprep.subr.mxu0 0.0
        %3103 = vmatpush1.msra.mxu0 0.0
        %3104 = vmatprep.subr.mxu0 0.0
        %3105 = vmatpush1.msra.mxu0 0.0
        %3106 = vmatprep.subr.mxu0 0.0
        %3107 = vmatpush1.msra.mxu0 0.0
        %3108 = vmatprep.subr.mxu0 0.0
        %3109 = vmatpush1.msra.mxu0 0.0
        %3110 = vmatprep.subr.mxu0 0.0
        %3111 = vmatpush1.msra.mxu0 0.0
        %3112 = vmatprep.subr.mxu0 0.0
        %3113 = vmatpush1.msra.mxu0 0.0
        %3114 = vmatprep.subr.mxu0 0.0
        %3115 = vmatpush1.msra.mxu0 0.0
        %3116 = vmatprep.subr.mxu0 0.0
        %3117 = vmatpush1.msra.mxu0 0.0
        %3118 = vmatprep.subr.mxu0 0.0
        %3119 = vmatpush1.msra.mxu0 0.0
        %3120 = vmatprep.subr.mxu0 0.0
        %3121 = vmatpush1.msra.mxu0 0.0
        %3122 = vmatprep.subr.mxu0 0.0
        %3123 = vmatpush1.msra.mxu0 0.0
        %3124 = vmatprep.subr.mxu0 0.0
        %3125 = vmatpush1.msra.mxu0 0.0
        %3126 = vmatprep.subr.mxu0 0.0
        %3127 = vmatpush1.msra.mxu0 0.0
        %3128 = vmatprep.subr.mxu0 0.0
        %3129 = vmatpush1.msra.mxu0 0.0
        %3130 = vmatprep.subr.mxu0 0.0
        %3131 = vmatpush1.msra.mxu0 0.0
        %3132 = vmatprep.subr.mxu0 0.0
        %3133 = vmatpush1.msra.mxu0 0.0
        %3134 = vmatprep.subr.mxu0 0.0
        %3135 = vmatpush1.msra.mxu0 0.0
        %3136 = vmatprep.subr.mxu0 0.0
        %3137 = vmatpush1.msra.mxu0 0.0
        %3138 = vmatprep.subr.mxu0 0.0
        %3139 = vmatpush1.msra.mxu0 0.0
        %3140 = vmatprep.subr.mxu0 0.0
        %3141 = vmatpush1.msra.mxu0 0.0
        %3142 = vmatprep.subr.mxu0 0.0
        %3143 = vmatpush1.msra.mxu0 0.0
        %3144 = vmatprep.mubr.f32.mxu0 0.0
        %3145 = vmatmul.mubr.f32.gmra.mrb[0].mxu0 %v3078
        %v3146 = vpop.f32.mrb[0].mxu0
        %v3147 = vadd.f32 %v3075, %v3146
        %v3148 = vpop.f32.mrb[0].mxu0
        %3149 = vdwg.mxu0
        %v3151 = vrot.slane %v3147, 4
        %v3153 = vadd.f32 %v3030, %v3151
        %vm3154 = vcmask 28676
        %3155 = vst.msk [vmem:[%s959 - $0x4] sm:$0x10] %vm3154, %v3153
        %s3156 = sand.u32 %s729, 1
        %s3157 = scalar_lea.sflag [#allocation4], %s3156
        %s3158 = sand.u32 %s729, 1
        %s3159 = scalar_lea.vmem [#allocation5], %s3158
        // Predicated region
        $region145: #{_lambda_.1} parent=139 // pred_check
          %p3160 = pneg %p739
        $region146: #{_lambda_.1} parent=139 // pred_check_branch
          %3162 = sbr.rel (%p3160) target = $region148
        $region147: #{_lambda_.1} parent=139 // pred_region
          %s3164 = ssub.s32 16, 16
          %3165 = vsyncadd %s3157, %s3164
          %s3166 = smul.addr %s76, 16
          %s3167 = scalar_lea.hbm %s61, %s3166
          %s3169 = sshll.u32 %s3159, 4
          %s3170 = int_to_ptr.vmem [resolvable:$true] %s3169
          %3172 = dma.vmem_to_hbm [thread:$0]  %s3170, 16, %s3167, %s3157
        $region148: #{_lambda_.1} parent=139 // pred_fallthru
          _
      $region140: #{_lambda_.1} parent=5 // pred_fallthru
        _
      %p3173 = scmp.le.s32.totalorder 2, %s71
      // Predicated region
      $region149: #{_lambda_.1} parent=5 // pred_check
        %p3174 = pneg %p3173
      $region150: #{_lambda_.1} parent=5 // pred_check_branch
        %3176 = sbr.rel (%p3174) target = $region152
      $region151: #{_lambda_.1} parent=5 // pred_region
        %s3177 = ssub.s32 %s71, 2
        // Predicated region
        $region153: #{_lambda_.1} parent=151 // pred_check
          %p3178 = pneg %p745
        $region154: #{_lambda_.1} parent=151 // pred_check_branch
          %3180 = sbr.rel (%p3178) target = $region156
        $region155: #{_lambda_.1} parent=151 // pred_region
          %s3181 = sand.u32 %s730, 1
          %s3182 = scalar_lea.sflag [#allocation4], %s3181
          %s3183 = sand.u32 %s730, 1
          %s3184 = scalar_lea.vmem [#allocation5], %s3183
          %3185 = dma.done %s3182, 16
        $region156: #{_lambda_.1} parent=151 // pred_fallthru
          _
      $region152: #{_lambda_.1} parent=5 // pred_fallthru
        _
    $region6: #{_lambda_.1} parent=1 // loop_footer
      %s75 = sadd.s32 1, %s71
    $region7: #{_lambda_.1} parent=1 // loop_footer_branch
      %70 = sbr.rel target = $region3
    $region8: #{_lambda_.1} parent=1 // loop_exit
      _
    %3186 = vsyncpa [#allocation3], 1
    %s3187 = scalar_lea.sflag [#allocation3], 1
    %3188 = vsyncpa %s3187, 1
    %3189 = vsyncpa [#allocation4], 1
    %s3190 = scalar_lea.sflag [#allocation4], 1
    %3191 = vsyncpa %s3190, 1

</llo_original>
